<compile_context>
chip_gen: v5e
topology: v5e:2x2
jax: 0.10.0
libtpu: 0.0.40
codegen_flags: <defaults>
</compile_context>

<pallas_src>
import functools
import math

import jax
import jax.numpy as jnp
from jax.experimental import pallas as pl
from jax.experimental.pallas import tpu as pltpu

# ----- small synthetic configuration (consistent with the reference module) -----
IN_CHANS = 3            # len(cfg.windows) * 3 with a single window
IMG = 16                # H = W of the per-slice image
N_FRAMES = 6            # slices per study fed to the backbone (<= RNN_SEQ_LEN)
HIDDEN = 32             # backbone.fc.in_features == rnn_dim
RNN_SEQ_LEN = 8         # cfg.rnn_seq_len
N_TARGET_SEG = 3        # len(cfg.target_seg)
N_OUT = 1 + N_TARGET_SEG
CHW = IN_CHANS * IMG * IMG

BATCH = 16              # studies per call (throughput batching; reference is 1/call)
BATCH_TILE = 8          # studies per grid step


# ---------------- fused Pallas kernel ----------------
def net_kernel(x_ref,                                   # (NF, BT, CHW)  frame-major
               wgap_ref, bbb_ref,                       # (CHW, H), (1, H)
               wi0_ref, wh0_ref, b0_ref,                # (H, 8H), (2H, 8H), (1, 8H)
               wi1_ref, wh1_ref, b1_ref,                # (2H, 8H), (2H, 8H), (1, 8H)
               attw_ref, attb_ref,                      # (2H, 1), (T*BT, 1)
               headw_ref, headb_ref,                    # (4H, N_OUT), (1, N_OUT)
               out_ref,                                 # (BT, N_OUT)
               xp_ref):                                 # scratch (T*BT, 8H)
    f32 = jnp.float32
    T = RNN_SEQ_LEN
    H = HIDDEN
    H2, H3, H4, H8 = 2 * H, 3 * H, 4 * H, 8 * H
    NF, BT, _ = x_ref.shape

    # ---- surrogate backbone: GAP + Linear folded into ONE matmul ----
    # wgap[c*hw + k, :] == bb_w[c, :] / hw, so x_flat @ wgap == GAP(x) @ bb_w.
    # TODO(synk): the real timm CNN backbone is not reproduced; this surrogate only
    # matches the "backbone with fc=Identity -> (N, hidden) embedding" contract.
    x_flat = x_ref[...].reshape(NF * BT, x_ref.shape[2])          # rows = (frame, study)
    embs = jnp.dot(x_flat, wgap_ref[...], preferred_element_type=f32) + bbb_ref[...]

    # ---- ConstantPad1d: zero-pad the time axis to rnn_seq_len ----
    # Frame-major rows make the pad a single concat (no per-study scatter).
    if NF < T:
        epad = jnp.concatenate([embs, jnp.zeros(((T - NF) * BT, H), f32)], axis=0)
    else:
        epad = embs                                               # (T*BT, H)

    # mask = (embs.abs().sum(-1) > 0), one per (time, study) row
    mask = (jnp.sum(jnp.abs(epad), axis=-1, keepdims=True) > 0.0).astype(f32)  # (T*BT, 1)

    # ---- fused bidirectional LSTM layer ----
    # Gate column layout per direction: [i | f | o | g]; fwd gates live in lanes
    # [0:4H), rev gates in [4H:8H).  h is carried as [h_fwd | h_rev] so a single
    # (BT,2H) @ (2H,8H) block-diagonal matmul per step serves both directions.
    def bilstm_layer(wh_bd):
        hf = jnp.zeros((BT, H), f32); cf = jnp.zeros((BT, H), f32)
        hr = jnp.zeros((BT, H), f32); cr = jnp.zeros((BT, H), f32)
        rows_f = [None] * T
        rows_r = [None] * T
        for s in range(T):                              # fully unrolled (T == 8)
            rt = T - 1 - s
            gin = jnp.concatenate([xp_ref[s * BT:(s + 1) * BT, 0:H4],
                                   xp_ref[rt * BT:(rt + 1) * BT, H4:H8]], axis=1)
            h = jnp.concatenate([hf, hr], axis=1)                     # (BT, 2H)
            g = gin + jnp.dot(h, wh_bd, preferred_element_type=f32)   # (BT, 8H)
            # sigmoid only on i/f/o lanes, tanh only on g lanes (less EUP work)
            sf = jax.nn.sigmoid(g[:, 0:H3]);        gf = jnp.tanh(g[:, H3:H4])
            sr = jax.nn.sigmoid(g[:, H4:H4 + H3]);  gr = jnp.tanh(g[:, H4 + H3:H8])
            cf = sf[:, H:H2] * cf + sf[:, 0:H] * gf
            cr = sr[:, H:H2] * cr + sr[:, 0:H] * gr
            hf = sf[:, H2:H3] * jnp.tanh(cf)
            hr = sr[:, H2:H3] * jnp.tanh(cr)
            rows_f[s] = hf
            rows_r[rt] = hr
        # per-time [fwd | rev] rows, kept vreg-resident (no per-row scratch stores)
        return [jnp.concatenate([rows_f[t], rows_r[t]], axis=1) for t in range(T)]

    # layer 0: input projection for BOTH directions in one (T*BT,H)@(H,8H) matmul
    xp_ref[...] = jnp.dot(epad, wi0_ref[...], preferred_element_type=f32) + b0_ref[...]
    h0_rows = bilstm_layer(wh0_ref[...])
    h0 = jnp.concatenate(h0_rows, axis=0)                             # (T*BT, 2H)

    # layer 1 (rnn_dropout == identity at inference): single (T*BT,2H)@(2H,8H) projection
    xp_ref[...] = jnp.dot(h0, wi1_ref[...], preferred_element_type=f32) + b1_ref[...]
    h1_rows = bilstm_layer(wh1_ref[...])

    # ---- max pool over time ----
    max_pool = functools.reduce(jnp.maximum, h1_rows)                 # (BT, 2H)

    # ---- attention pool (exactly the reference Attention module) ----
    h1 = jnp.concatenate(h1_rows, axis=0)                             # (T*BT, 2H)
    e = jnp.dot(h1, attw_ref[...], preferred_element_type=f32)        # score via MXU
    a = jnp.exp(jnp.tanh(e + attb_ref[...])) * mask                   # (T*BT, 1)
    denom = jnp.zeros((BT, 1), f32)
    for t in range(T):
        denom = denom + a[t * BT:(t + 1) * BT, :]
    inv = 1.0 / denom   # NOTE: matches reference (0/0 -> NaN only if every frame is exactly zero)
    att_pool = jnp.zeros((BT, H2), f32)
    for t in range(T):
        w_t = a[t * BT:(t + 1) * BT, :] * inv + 1e-10                 # eps added AFTER the division
        att_pool = att_pool + w_t * h1_rows[t]

    # ---- head: Linear(4H -> N_OUT) on concat([max_pool, att_pool]); dropout == id ----
    # TODO(synk): output last dim is N_OUT=4 (< 128 lanes), so the final store is a
    # masked partial store; at 4 floats/study there is no lane-dense arrangement.
    feat = jnp.concatenate([max_pool, att_pool], axis=1)              # (BT, 4H)
    out_ref[...] = (jnp.dot(feat, headw_ref[...], preferred_element_type=f32)
                    + headb_ref[...])


# ---------------- parameter construction (deterministic, synthetic) ----------------
def _lstm_dir(key, in_dim):
    """Synthetic per-direction LSTM params in PyTorch layout (W_ih, W_hh, b_ih, b_hh)."""
    bound = 1.0 / math.sqrt(HIDDEN)
    k1, k2, k3, k4 = jax.random.split(key, 4)
    return (jax.random.uniform(k1, (4 * HIDDEN, in_dim), jnp.float32, -bound, bound),
            jax.random.uniform(k2, (4 * HIDDEN, HIDDEN), jnp.float32, -bound, bound),
            jax.random.uniform(k3, (4 * HIDDEN,), jnp.float32, -bound, bound),
            jax.random.uniform(k4, (4 * HIDDEN,), jnp.float32, -bound, bound))


def _reorder_gates(w):
    """PyTorch gate row order [i; f; g; o]  ->  kernel order [i; f; o; g]."""
    H = HIDDEN
    return jnp.concatenate([w[:2 * H], w[3 * H:4 * H], w[2 * H:3 * H]], axis=0)


def _bilstm_layer_params(key_f, key_r, in_dim):
    """Fused kernel-layout weights for one bidirectional LSTM layer."""
    H = HIDDEN
    wif, whf, bif, bhf = _lstm_dir(key_f, in_dim)
    wir, whr, bir, bhr = _lstm_dir(key_r, in_dim)
    # input weight: columns [fwd gates (i,f,o,g) | rev gates (i,f,o,g)]
    wi = jnp.concatenate([_reorder_gates(wif).T, _reorder_gates(wir).T], axis=1)   # (in, 8H)
    b = jnp.concatenate([_reorder_gates((bif + bhf)[:, None]).reshape(1, 4 * H),
                         _reorder_gates((bir + bhr)[:, None]).reshape(1, 4 * H)], axis=1)
    # recurrent weight: block-diagonal so [h_f | h_r] @ wh gives both directions' gates
    wh = jnp.zeros((2 * H, 8 * H), jnp.float32)
    wh = wh.at[:H, :4 * H].set(_reorder_gates(whf).T)
    wh = wh.at[H:, 4 * H:].set(_reorder_gates(whr).T)
    return wi, wh, b


def init_params(key):
    keys = jax.random.split(key, 10)
    hw = IMG * IMG
    p = {}
    # surrogate backbone: GAP + Linear(IN_CHANS -> HIDDEN), folded into one matmul weight
    bb_w = jax.random.normal(keys[0], (IN_CHANS, HIDDEN), jnp.float32) * 0.05
    p['w_gap'] = jnp.repeat(bb_w / hw, hw, axis=0)                    # (CHW, H)
    p['bb_b'] = jax.random.normal(keys[1], (1, HIDDEN), jnp.float32) * 0.05

    p['wi0'], p['wh0'], p['b0'] = _bilstm_layer_params(keys[2], keys[3], HIDDEN)
    p['wi1'], p['wh1'], p['b1'] = _bilstm_layer_params(keys[4], keys[5], 2 * HIDDEN)

    # Attention(feature_dim=2H, step_dim=RNN_SEQ_LEN)
    xav = math.sqrt(6.0 / (2 * HIDDEN + 1))
    p['att_w'] = jax.random.uniform(keys[6], (2 * HIDDEN, 1), jnp.float32, -xav, xav)
    p['att_b'] = jnp.zeros((RNN_SEQ_LEN,), jnp.float32)

    # head: Linear(4H -> N_OUT)
    hb = 1.0 / math.sqrt(4 * HIDDEN)
    p['head_w'] = jax.random.uniform(keys[7], (4 * HIDDEN, N_OUT), jnp.float32, -hb, hb)
    p['head_b'] = jax.random.uniform(keys[8], (1, N_OUT), jnp.float32, -hb, hb)
    return p


# ---------------- forward wrapper ----------------
@jax.jit
def net_forward(x, params):
    """x: (B, n_frames, C, H, W) — a batch of studies (the reference module is 1 study/call)."""
    B, NF = x.shape[0], x.shape[1]
    if NF > RNN_SEQ_LEN:
        # TODO(synk): F.interpolate branch (n_frames > rnn_seq_len) not implemented;
        # only the ConstantPad1d zero-pad branch is exercised here.
        raise NotImplementedError("interpolation branch not implemented")
    T, H = RNN_SEQ_LEN, HIDDEN
    BT = BATCH_TILE if (B % BATCH_TILE == 0) else B
    chw = x.shape[2] * x.shape[3] * x.shape[4]

    # frame-major layout (frame, study, C*H*W): the kernel's time zero-pad becomes one
    # concat, and each batch tile is a contiguous BlockSpec slice.
    x_fm = jnp.transpose(x.reshape(B, NF, chw), (1, 0, 2)).astype(jnp.float32)

    # per-(time, study) attention bias matching the time-major row order in the kernel
    attb = jnp.repeat(params['att_b'], BT).reshape(T * BT, 1)

    const = lambda i: (0, 0)    # weights: same block every step -> stay VMEM-resident
    logits = pl.pallas_call(
        net_kernel,
        out_shape=jax.ShapeDtypeStruct((B, N_OUT), jnp.float32),
        grid=(B // BT,),
        in_specs=[
            pl.BlockSpec((NF, BT, chw), lambda i: (0, i, 0)),   # batch tile of studies
            pl.BlockSpec((chw, H), const),                      # w_gap
            pl.BlockSpec((1, H), const),                        # bb_b
            pl.BlockSpec((H, 8 * H), const),                    # wi0
            pl.BlockSpec((2 * H, 8 * H), const),                # wh0 (block-diag)
            pl.BlockSpec((1, 8 * H), const),                    # b0
            pl.BlockSpec((2 * H, 8 * H), const),                # wi1
            pl.BlockSpec((2 * H, 8 * H), const),                # wh1 (block-diag)
            pl.BlockSpec((1, 8 * H), const),                    # b1
            pl.BlockSpec((2 * H, 1), const),                    # att_w
            pl.BlockSpec((T * BT, 1), const),                   # att_b (expanded)
            pl.BlockSpec((4 * H, N_OUT), const),                # head_w
            pl.BlockSpec((1, N_OUT), const),                    # head_b
        ],
        out_specs=pl.BlockSpec((BT, N_OUT), lambda i: (i, 0)),
        scratch_shapes=[pltpu.VMEM((T * BT, 8 * H), jnp.float32)],   # hoisted input projections
        compiler_params=pltpu.CompilerParams(
            dimension_semantics=("parallel",)),   # batch tiles shard across v7x's 2 TCs
    )(x_fm, params['w_gap'], params['bb_b'],
      params['wi0'], params['wh0'], params['b0'],
      params['wi1'], params['wh1'], params['b1'],
      params['att_w'], attb,
      params['head_w'], params['head_b'])

    return logits[:, 0]     # == PyTorch `logits[:, 0]`, one scalar per study


if __name__ == "__main__":
    key = jax.random.PRNGKey(0)
    k_x, k_p = jax.random.split(key)
    # batch of studies, each (num_slices, in_chans, H, W) NCHW as in PyTorch
    x = jax.random.normal(k_x, (BATCH, N_FRAMES, IN_CHANS, IMG, IMG), jnp.float32)
    params = init_params(k_p)

    out = jax.block_until_ready(net_forward(x, params))
    assert out.shape == (BATCH,)
    assert bool(jnp.isfinite(out).all())
    print("KERNEL_OK")
</pallas_src>

<mosaic_0001>
module attributes {stable_mosaic.version = 11 : i64} {
  func.func @net_kernel(%arg0: i32, %arg1: memref<6x8x768xf32, #tpu.memory_space<vmem>>, %arg2: memref<768x32xf32, #tpu.memory_space<vmem>>, %arg3: memref<1x32xf32, #tpu.memory_space<vmem>>, %arg4: memref<32x256xf32, #tpu.memory_space<vmem>>, %arg5: memref<64x256xf32, #tpu.memory_space<vmem>>, %arg6: memref<1x256xf32, #tpu.memory_space<vmem>>, %arg7: memref<64x256xf32, #tpu.memory_space<vmem>>, %arg8: memref<64x256xf32, #tpu.memory_space<vmem>>, %arg9: memref<1x256xf32, #tpu.memory_space<vmem>>, %arg10: memref<64x1xf32, #tpu.memory_space<vmem>>, %arg11: memref<64x1xf32, #tpu.memory_space<vmem>>, %arg12: memref<128x4xf32, #tpu.memory_space<vmem>>, %arg13: memref<1x4xf32, #tpu.memory_space<vmem>>, %arg14: memref<8x4xf32, #tpu.memory_space<vmem>>, %arg15: memref<64x256xf32, #tpu.memory_space<vmem>>) attributes {dimension_semantics = [#tpu.dimension_semantics<parallel>], iteration_bounds = array<i64: 2>, scalar_prefetch = 0 : i64, scratch_operands = 1 : i64, tpu.core_type = #tpu.core_type<tc>, window_params = [{transform_indices = @transform_0, window_bounds = array<i64: 6, 8, 768>}, {pipeline_mode = #tpu.pipeline_mode<synchronous>, transform_indices = @transform_1, window_bounds = array<i64: 768, 32>}, {pipeline_mode = #tpu.pipeline_mode<synchronous>, transform_indices = @transform_2, window_bounds = array<i64: 1, 32>}, {pipeline_mode = #tpu.pipeline_mode<synchronous>, transform_indices = @transform_3, window_bounds = array<i64: 32, 256>}, {pipeline_mode = #tpu.pipeline_mode<synchronous>, transform_indices = @transform_4, window_bounds = array<i64: 64, 256>}, {pipeline_mode = #tpu.pipeline_mode<synchronous>, transform_indices = @transform_5, window_bounds = array<i64: 1, 256>}, {pipeline_mode = #tpu.pipeline_mode<synchronous>, transform_indices = @transform_6, window_bounds = array<i64: 64, 256>}, {pipeline_mode = #tpu.pipeline_mode<synchronous>, transform_indices = @transform_7, window_bounds = array<i64: 64, 256>}, {pipeline_mode = #tpu.pipeline_mode<synchronous>, transform_indices = @transform_8, window_bounds = array<i64: 1, 256>}, {pipeline_mode = #tpu.pipeline_mode<synchronous>, transform_indices = @transform_9, window_bounds = array<i64: 64, 1>}, {pipeline_mode = #tpu.pipeline_mode<synchronous>, transform_indices = @transform_10, window_bounds = array<i64: 64, 1>}, {pipeline_mode = #tpu.pipeline_mode<synchronous>, transform_indices = @transform_11, window_bounds = array<i64: 128, 4>}, {pipeline_mode = #tpu.pipeline_mode<synchronous>, transform_indices = @transform_12, window_bounds = array<i64: 1, 4>}, {transform_indices = @transform_13, window_bounds = array<i64: 8, 4>}]} {
    %c0 = arith.constant 0 : index
    %c0_0 = arith.constant 0 : index
    %c0_1 = arith.constant 0 : index
    %0 = vector.load %arg1[%c0, %c0_0, %c0_1] : memref<6x8x768xf32, #tpu.memory_space<vmem>>, vector<6x8x768xf32>
    %1 = vector.shape_cast %0 : vector<6x8x768xf32> to vector<48x768xf32>
    %c0_2 = arith.constant 0 : index
    %c0_3 = arith.constant 0 : index
    %2 = vector.load %arg2[%c0_2, %c0_3] : memref<768x32xf32, #tpu.memory_space<vmem>>, vector<768x32xf32>
    %cst = arith.constant dense<0.000000e+00> : vector<48x32xf32>
    %3 = tpu.matmul %1, %2, %cst {dimension_numbers = #tpu.dot_dimension_numbers<[1], [0], [0], [1], [0, 0, 1, 1], [], []>} : vector<48x768xf32>, vector<768x32xf32>, vector<48x32xf32> -> vector<48x32xf32>
    %c0_4 = arith.constant 0 : index
    %c0_5 = arith.constant 0 : index
    %4 = vector.load %arg3[%c0_4, %c0_5] : memref<1x32xf32, #tpu.memory_space<vmem>>, vector<1x32xf32>
    %5 = vector.broadcast %4 : vector<1x32xf32> to vector<48x32xf32>
    %6 = arith.addf %3, %5 : vector<48x32xf32>
    %cst_6 = arith.constant 0.000000e+00 : f32
    %7 = vector.broadcast %cst_6 : f32 to vector<16x32xf32>
    %8 = tpu.concatenate %6, %7 in 0 : vector<48x32xf32>, vector<16x32xf32> -> vector<64x32xf32>
    %9 = math.absf %8 : vector<64x32xf32>
    %cst_7 = arith.constant dense<0.000000e+00> : vector<64xf32>
    %10 = vector.multi_reduction <add>, %9, %cst_7 [1] : vector<64x32xf32> to vector<64xf32>
    %11 = vector.shape_cast %10 : vector<64xf32> to vector<64x1xf32>
    %cst_8 = arith.constant 0.000000e+00 : f32
    %12 = vector.broadcast %cst_8 : f32 to vector<64x1xf32>
    %13 = arith.cmpf ogt, %11, %12 : vector<64x1xf32>
    %14 = arith.extui %13 : vector<64x1xi1> to vector<64x1xi32>
    %15 = arith.sitofp %14 : vector<64x1xi32> to vector<64x1xf32>
    %c0_9 = arith.constant 0 : index
    %c0_10 = arith.constant 0 : index
    %16 = vector.load %arg4[%c0_9, %c0_10] : memref<32x256xf32, #tpu.memory_space<vmem>>, vector<32x256xf32>
    %cst_11 = arith.constant dense<0.000000e+00> : vector<64x256xf32>
    %17 = tpu.matmul %8, %16, %cst_11 {dimension_numbers = #tpu.dot_dimension_numbers<[1], [0], [0], [1], [0, 0, 1, 1], [], []>} : vector<64x32xf32>, vector<32x256xf32>, vector<64x256xf32> -> vector<64x256xf32>
    %c0_12 = arith.constant 0 : index
    %c0_13 = arith.constant 0 : index
    %18 = vector.load %arg6[%c0_12, %c0_13] : memref<1x256xf32, #tpu.memory_space<vmem>>, vector<1x256xf32>
    %19 = vector.broadcast %18 : vector<1x256xf32> to vector<64x256xf32>
    %20 = arith.addf %17, %19 : vector<64x256xf32>
    %c0_14 = arith.constant 0 : index
    %c0_15 = arith.constant 0 : index
    %21 = vector.load %arg15[%c0_14, %c0_15] : memref<64x256xf32, #tpu.memory_space<vmem>>, vector<64x256xf32>
    tpu.vector_store %arg15[%c0_14, %c0_15], %20 {strides = array<i32>} : memref<64x256xf32, #tpu.memory_space<vmem>>, vector<64x256xf32>,
    %c0_16 = arith.constant 0 : index
    %c0_17 = arith.constant 0 : index
    %22 = vector.load %arg5[%c0_16, %c0_17] : memref<64x256xf32, #tpu.memory_space<vmem>>, vector<64x256xf32>
    %cst_18 = arith.constant 0.000000e+00 : f32
    %23 = vector.broadcast %cst_18 : f32 to vector<8x32xf32>
    %cst_19 = arith.constant 0.000000e+00 : f32
    %24 = vector.broadcast %cst_19 : f32 to vector<8x32xf32>
    %cst_20 = arith.constant 0.000000e+00 : f32
    %25 = vector.broadcast %cst_20 : f32 to vector<8x32xf32>
    %cst_21 = arith.constant 0.000000e+00 : f32
    %26 = vector.broadcast %cst_21 : f32 to vector<8x32xf32>
    %c0_22 = arith.constant 0 : index
    %c0_23 = arith.constant 0 : index
    %27 = vector.load %arg15[%c0_22, %c0_23] : memref<64x256xf32, #tpu.memory_space<vmem>>, vector<8x128xf32>
    %c56 = arith.constant 56 : index
    %c128 = arith.constant 128 : index
    %28 = vector.load %arg15[%c56, %c128] : memref<64x256xf32, #tpu.memory_space<vmem>>, vector<8x128xf32>
    %29 = tpu.concatenate %27, %28 in 1 : vector<8x128xf32>, vector<8x128xf32> -> vector<8x256xf32>
    %30 = tpu.concatenate %23, %25 in 1 : vector<8x32xf32>, vector<8x32xf32> -> vector<8x64xf32>
    %cst_24 = arith.constant dense<0.000000e+00> : vector<8x256xf32>
    %31 = tpu.matmul %30, %22, %cst_24 {dimension_numbers = #tpu.dot_dimension_numbers<[1], [0], [0], [1], [0, 0, 1, 1], [], []>} : vector<8x64xf32>, vector<64x256xf32>, vector<8x256xf32> -> vector<8x256xf32>
    %32 = arith.addf %29, %31 : vector<8x256xf32>
    %33 = vector.extract_strided_slice %32 {offsets = [0, 0], sizes = [8, 96], strides = [1, 1]} : vector<8x256xf32> to vector<8x96xf32>
    %34 = arith.negf %33 : vector<8x96xf32>
    %35 = math.exp %34 : vector<8x96xf32>
    %cst_25 = arith.constant 1.000000e+00 : f32
    %36 = vector.broadcast %cst_25 : f32 to vector<8x96xf32>
    %37 = arith.addf %36, %35 : vector<8x96xf32>
    %38 = arith.divf %36, %37 : vector<8x96xf32>
    %39 = vector.extract_strided_slice %32 {offsets = [0, 96], sizes = [8, 32], strides = [1, 1]} : vector<8x256xf32> to vector<8x32xf32>
    %40 = math.tanh %39 : vector<8x32xf32>
    %41 = vector.extract_strided_slice %32 {offsets = [0, 128], sizes = [8, 96], strides = [1, 1]} : vector<8x256xf32> to vector<8x96xf32>
    %42 = arith.negf %41 : vector<8x96xf32>
    %43 = math.exp %42 : vector<8x96xf32>
    %cst_26 = arith.constant 1.000000e+00 : f32
    %44 = vector.broadcast %cst_26 : f32 to vector<8x96xf32>
    %45 = arith.addf %44, %43 : vector<8x96xf32>
    %46 = arith.divf %44, %45 : vector<8x96xf32>
    %47 = vector.extract_strided_slice %32 {offsets = [0, 224], sizes = [8, 32], strides = [1, 1]} : vector<8x256xf32> to vector<8x32xf32>
    %48 = math.tanh %47 : vector<8x32xf32>
    %49 = vector.extract_strided_slice %38 {offsets = [0, 32], sizes = [8, 32], strides = [1, 1]} : vector<8x96xf32> to vector<8x32xf32>
    %50 = arith.mulf %49, %24 : vector<8x32xf32>
    %51 = vector.extract_strided_slice %38 {offsets = [0, 0], sizes = [8, 32], strides = [1, 1]} : vector<8x96xf32> to vector<8x32xf32>
    %52 = arith.mulf %51, %40 : vector<8x32xf32>
    %53 = arith.addf %50, %52 : vector<8x32xf32>
    %54 = vector.extract_strided_slice %46 {offsets = [0, 32], sizes = [8, 32], strides = [1, 1]} : vector<8x96xf32> to vector<8x32xf32>
    %55 = arith.mulf %54, %26 : vector<8x32xf32>
    %56 = vector.extract_strided_slice %46 {offsets = [0, 0], sizes = [8, 32], strides = [1, 1]} : vector<8x96xf32> to vector<8x32xf32>
    %57 = arith.mulf %56, %48 : vector<8x32xf32>
    %58 = arith.addf %55, %57 : vector<8x32xf32>
    %59 = vector.extract_strided_slice %38 {offsets = [0, 64], sizes = [8, 32], strides = [1, 1]} : vector<8x96xf32> to vector<8x32xf32>
    %60 = math.tanh %53 : vector<8x32xf32>
    %61 = arith.mulf %59, %60 : vector<8x32xf32>
    %62 = vector.extract_strided_slice %46 {offsets = [0, 64], sizes = [8, 32], strides = [1, 1]} : vector<8x96xf32> to vector<8x32xf32>
    %63 = math.tanh %58 : vector<8x32xf32>
    %64 = arith.mulf %62, %63 : vector<8x32xf32>
    %c8 = arith.constant 8 : index
    %c0_27 = arith.constant 0 : index
    %65 = vector.load %arg15[%c8, %c0_27] : memref<64x256xf32, #tpu.memory_space<vmem>>, vector<8x128xf32>
    %c48 = arith.constant 48 : index
    %c128_28 = arith.constant 128 : index
    %66 = vector.load %arg15[%c48, %c128_28] : memref<64x256xf32, #tpu.memory_space<vmem>>, vector<8x128xf32>
    %67 = tpu.concatenate %65, %66 in 1 : vector<8x128xf32>, vector<8x128xf32> -> vector<8x256xf32>
    %68 = tpu.concatenate %61, %64 in 1 : vector<8x32xf32>, vector<8x32xf32> -> vector<8x64xf32>
    %cst_29 = arith.constant dense<0.000000e+00> : vector<8x256xf32>
    %69 = tpu.matmul %68, %22, %cst_29 {dimension_numbers = #tpu.dot_dimension_numbers<[1], [0], [0], [1], [0, 0, 1, 1], [], []>} : vector<8x64xf32>, vector<64x256xf32>, vector<8x256xf32> -> vector<8x256xf32>
    %70 = arith.addf %67, %69 : vector<8x256xf32>
    %71 = vector.extract_strided_slice %70 {offsets = [0, 0], sizes = [8, 96], strides = [1, 1]} : vector<8x256xf32> to vector<8x96xf32>
    %72 = arith.negf %71 : vector<8x96xf32>
    %73 = math.exp %72 : vector<8x96xf32>
    %cst_30 = arith.constant 1.000000e+00 : f32
    %74 = vector.broadcast %cst_30 : f32 to vector<8x96xf32>
    %75 = arith.addf %74, %73 : vector<8x96xf32>
    %76 = arith.divf %74, %75 : vector<8x96xf32>
    %77 = vector.extract_strided_slice %70 {offsets = [0, 96], sizes = [8, 32], strides = [1, 1]} : vector<8x256xf32> to vector<8x32xf32>
    %78 = math.tanh %77 : vector<8x32xf32>
    %79 = vector.extract_strided_slice %70 {offsets = [0, 128], sizes = [8, 96], strides = [1, 1]} : vector<8x256xf32> to vector<8x96xf32>
    %80 = arith.negf %79 : vector<8x96xf32>
    %81 = math.exp %80 : vector<8x96xf32>
    %cst_31 = arith.constant 1.000000e+00 : f32
    %82 = vector.broadcast %cst_31 : f32 to vector<8x96xf32>
    %83 = arith.addf %82, %81 : vector<8x96xf32>
    %84 = arith.divf %82, %83 : vector<8x96xf32>
    %85 = vector.extract_strided_slice %70 {offsets = [0, 224], sizes = [8, 32], strides = [1, 1]} : vector<8x256xf32> to vector<8x32xf32>
    %86 = math.tanh %85 : vector<8x32xf32>
    %87 = vector.extract_strided_slice %76 {offsets = [0, 32], sizes = [8, 32], strides = [1, 1]} : vector<8x96xf32> to vector<8x32xf32>
    %88 = arith.mulf %87, %53 : vector<8x32xf32>
    %89 = vector.extract_strided_slice %76 {offsets = [0, 0], sizes = [8, 32], strides = [1, 1]} : vector<8x96xf32> to vector<8x32xf32>
    %90 = arith.mulf %89, %78 : vector<8x32xf32>
    %91 = arith.addf %88, %90 : vector<8x32xf32>
    %92 = vector.extract_strided_slice %84 {offsets = [0, 32], sizes = [8, 32], strides = [1, 1]} : vector<8x96xf32> to vector<8x32xf32>
    %93 = arith.mulf %92, %58 : vector<8x32xf32>
    %94 = vector.extract_strided_slice %84 {offsets = [0, 0], sizes = [8, 32], strides = [1, 1]} : vector<8x96xf32> to vector<8x32xf32>
    %95 = arith.mulf %94, %86 : vector<8x32xf32>
    %96 = arith.addf %93, %95 : vector<8x32xf32>
    %97 = vector.extract_strided_slice %76 {offsets = [0, 64], sizes = [8, 32], strides = [1, 1]} : vector<8x96xf32> to vector<8x32xf32>
    %98 = math.tanh %91 : vector<8x32xf32>
    %99 = arith.mulf %97, %98 : vector<8x32xf32>
    %100 = vector.extract_strided_slice %84 {offsets = [0, 64], sizes = [8, 32], strides = [1, 1]} : vector<8x96xf32> to vector<8x32xf32>
    %101 = math.tanh %96 : vector<8x32xf32>
    %102 = arith.mulf %100, %101 : vector<8x32xf32>
    %c16 = arith.constant 16 : index
    %c0_32 = arith.constant 0 : index
    %103 = vector.load %arg15[%c16, %c0_32] : memref<64x256xf32, #tpu.memory_space<vmem>>, vector<8x128xf32>
    %c40 = arith.constant 40 : index
    %c128_33 = arith.constant 128 : index
    %104 = vector.load %arg15[%c40, %c128_33] : memref<64x256xf32, #tpu.memory_space<vmem>>, vector<8x128xf32>
    %105 = tpu.concatenate %103, %104 in 1 : vector<8x128xf32>, vector<8x128xf32> -> vector<8x256xf32>
    %106 = tpu.concatenate %99, %102 in 1 : vector<8x32xf32>, vector<8x32xf32> -> vector<8x64xf32>
    %cst_34 = arith.constant dense<0.000000e+00> : vector<8x256xf32>
    %107 = tpu.matmul %106, %22, %cst_34 {dimension_numbers = #tpu.dot_dimension_numbers<[1], [0], [0], [1], [0, 0, 1, 1], [], []>} : vector<8x64xf32>, vector<64x256xf32>, vector<8x256xf32> -> vector<8x256xf32>
    %108 = arith.addf %105, %107 : vector<8x256xf32>
    %109 = vector.extract_strided_slice %108 {offsets = [0, 0], sizes = [8, 96], strides = [1, 1]} : vector<8x256xf32> to vector<8x96xf32>
    %110 = arith.negf %109 : vector<8x96xf32>
    %111 = math.exp %110 : vector<8x96xf32>
    %cst_35 = arith.constant 1.000000e+00 : f32
    %112 = vector.broadcast %cst_35 : f32 to vector<8x96xf32>
    %113 = arith.addf %112, %111 : vector<8x96xf32>
    %114 = arith.divf %112, %113 : vector<8x96xf32>
    %115 = vector.extract_strided_slice %108 {offsets = [0, 96], sizes = [8, 32], strides = [1, 1]} : vector<8x256xf32> to vector<8x32xf32>
    %116 = math.tanh %115 : vector<8x32xf32>
    %117 = vector.extract_strided_slice %108 {offsets = [0, 128], sizes = [8, 96], strides = [1, 1]} : vector<8x256xf32> to vector<8x96xf32>
    %118 = arith.negf %117 : vector<8x96xf32>
    %119 = math.exp %118 : vector<8x96xf32>
    %cst_36 = arith.constant 1.000000e+00 : f32
    %120 = vector.broadcast %cst_36 : f32 to vector<8x96xf32>
    %121 = arith.addf %120, %119 : vector<8x96xf32>
    %122 = arith.divf %120, %121 : vector<8x96xf32>
    %123 = vector.extract_strided_slice %108 {offsets = [0, 224], sizes = [8, 32], strides = [1, 1]} : vector<8x256xf32> to vector<8x32xf32>
    %124 = math.tanh %123 : vector<8x32xf32>
    %125 = vector.extract_strided_slice %114 {offsets = [0, 32], sizes = [8, 32], strides = [1, 1]} : vector<8x96xf32> to vector<8x32xf32>
    %126 = arith.mulf %125, %91 : vector<8x32xf32>
    %127 = vector.extract_strided_slice %114 {offsets = [0, 0], sizes = [8, 32], strides = [1, 1]} : vector<8x96xf32> to vector<8x32xf32>
    %128 = arith.mulf %127, %116 : vector<8x32xf32>
    %129 = arith.addf %126, %128 : vector<8x32xf32>
    %130 = vector.extract_strided_slice %122 {offsets = [0, 32], sizes = [8, 32], strides = [1, 1]} : vector<8x96xf32> to vector<8x32xf32>
    %131 = arith.mulf %130, %96 : vector<8x32xf32>
    %132 = vector.extract_strided_slice %122 {offsets = [0, 0], sizes = [8, 32], strides = [1, 1]} : vector<8x96xf32> to vector<8x32xf32>
    %133 = arith.mulf %132, %124 : vector<8x32xf32>
    %134 = arith.addf %131, %133 : vector<8x32xf32>
    %135 = vector.extract_strided_slice %114 {offsets = [0, 64], sizes = [8, 32], strides = [1, 1]} : vector<8x96xf32> to vector<8x32xf32>
    %136 = math.tanh %129 : vector<8x32xf32>
    %137 = arith.mulf %135, %136 : vector<8x32xf32>
    %138 = vector.extract_strided_slice %122 {offsets = [0, 64], sizes = [8, 32], strides = [1, 1]} : vector<8x96xf32> to vector<8x32xf32>
    %139 = math.tanh %134 : vector<8x32xf32>
    %140 = arith.mulf %138, %139 : vector<8x32xf32>
    %c24 = arith.constant 24 : index
    %c0_37 = arith.constant 0 : index
    %141 = vector.load %arg15[%c24, %c0_37] : memref<64x256xf32, #tpu.memory_space<vmem>>, vector<8x128xf32>
    %c32 = arith.constant 32 : index
    %c128_38 = arith.constant 128 : index
    %142 = vector.load %arg15[%c32, %c128_38] : memref<64x256xf32, #tpu.memory_space<vmem>>, vector<8x128xf32>
    %143 = tpu.concatenate %141, %142 in 1 : vector<8x128xf32>, vector<8x128xf32> -> vector<8x256xf32>
    %144 = tpu.concatenate %137, %140 in 1 : vector<8x32xf32>, vector<8x32xf32> -> vector<8x64xf32>
    %cst_39 = arith.constant dense<0.000000e+00> : vector<8x256xf32>
    %145 = tpu.matmul %144, %22, %cst_39 {dimension_numbers = #tpu.dot_dimension_numbers<[1], [0], [0], [1], [0, 0, 1, 1], [], []>} : vector<8x64xf32>, vector<64x256xf32>, vector<8x256xf32> -> vector<8x256xf32>
    %146 = arith.addf %143, %145 : vector<8x256xf32>
    %147 = vector.extract_strided_slice %146 {offsets = [0, 0], sizes = [8, 96], strides = [1, 1]} : vector<8x256xf32> to vector<8x96xf32>
    %148 = arith.negf %147 : vector<8x96xf32>
    %149 = math.exp %148 : vector<8x96xf32>
    %cst_40 = arith.constant 1.000000e+00 : f32
    %150 = vector.broadcast %cst_40 : f32 to vector<8x96xf32>
    %151 = arith.addf %150, %149 : vector<8x96xf32>
    %152 = arith.divf %150, %151 : vector<8x96xf32>
    %153 = vector.extract_strided_slice %146 {offsets = [0, 96], sizes = [8, 32], strides = [1, 1]} : vector<8x256xf32> to vector<8x32xf32>
    %154 = math.tanh %153 : vector<8x32xf32>
    %155 = vector.extract_strided_slice %146 {offsets = [0, 128], sizes = [8, 96], strides = [1, 1]} : vector<8x256xf32> to vector<8x96xf32>
    %156 = arith.negf %155 : vector<8x96xf32>
    %157 = math.exp %156 : vector<8x96xf32>
    %cst_41 = arith.constant 1.000000e+00 : f32
    %158 = vector.broadcast %cst_41 : f32 to vector<8x96xf32>
    %159 = arith.addf %158, %157 : vector<8x96xf32>
    %160 = arith.divf %158, %159 : vector<8x96xf32>
    %161 = vector.extract_strided_slice %146 {offsets = [0, 224], sizes = [8, 32], strides = [1, 1]} : vector<8x256xf32> to vector<8x32xf32>
    %162 = math.tanh %161 : vector<8x32xf32>
    %163 = vector.extract_strided_slice %152 {offsets = [0, 32], sizes = [8, 32], strides = [1, 1]} : vector<8x96xf32> to vector<8x32xf32>
    %164 = arith.mulf %163, %129 : vector<8x32xf32>
    %165 = vector.extract_strided_slice %152 {offsets = [0, 0], sizes = [8, 32], strides = [1, 1]} : vector<8x96xf32> to vector<8x32xf32>
    %166 = arith.mulf %165, %154 : vector<8x32xf32>
    %167 = arith.addf %164, %166 : vector<8x32xf32>
    %168 = vector.extract_strided_slice %160 {offsets = [0, 32], sizes = [8, 32], strides = [1, 1]} : vector<8x96xf32> to vector<8x32xf32>
    %169 = arith.mulf %168, %134 : vector<8x32xf32>
    %170 = vector.extract_strided_slice %160 {offsets = [0, 0], sizes = [8, 32], strides = [1, 1]} : vector<8x96xf32> to vector<8x32xf32>
    %171 = arith.mulf %170, %162 : vector<8x32xf32>
    %172 = arith.addf %169, %171 : vector<8x32xf32>
    %173 = vector.extract_strided_slice %152 {offsets = [0, 64], sizes = [8, 32], strides = [1, 1]} : vector<8x96xf32> to vector<8x32xf32>
    %174 = math.tanh %167 : vector<8x32xf32>
    %175 = arith.mulf %173, %174 : vector<8x32xf32>
    %176 = vector.extract_strided_slice %160 {offsets = [0, 64], sizes = [8, 32], strides = [1, 1]} : vector<8x96xf32> to vector<8x32xf32>
    %177 = math.tanh %172 : vector<8x32xf32>
    %178 = arith.mulf %176, %177 : vector<8x32xf32>
    %c32_42 = arith.constant 32 : index
    %c0_43 = arith.constant 0 : index
    %179 = vector.load %arg15[%c32_42, %c0_43] : memref<64x256xf32, #tpu.memory_space<vmem>>, vector<8x128xf32>
    %c24_44 = arith.constant 24 : index
    %c128_45 = arith.constant 128 : index
    %180 = vector.load %arg15[%c24_44, %c128_45] : memref<64x256xf32, #tpu.memory_space<vmem>>, vector<8x128xf32>
    %181 = tpu.concatenate %179, %180 in 1 : vector<8x128xf32>, vector<8x128xf32> -> vector<8x256xf32>
    %182 = tpu.concatenate %175, %178 in 1 : vector<8x32xf32>, vector<8x32xf32> -> vector<8x64xf32>
    %cst_46 = arith.constant dense<0.000000e+00> : vector<8x256xf32>
    %183 = tpu.matmul %182, %22, %cst_46 {dimension_numbers = #tpu.dot_dimension_numbers<[1], [0], [0], [1], [0, 0, 1, 1], [], []>} : vector<8x64xf32>, vector<64x256xf32>, vector<8x256xf32> -> vector<8x256xf32>
    %184 = arith.addf %181, %183 : vector<8x256xf32>
    %185 = vector.extract_strided_slice %184 {offsets = [0, 0], sizes = [8, 96], strides = [1, 1]} : vector<8x256xf32> to vector<8x96xf32>
    %186 = arith.negf %185 : vector<8x96xf32>
    %187 = math.exp %186 : vector<8x96xf32>
    %cst_47 = arith.constant 1.000000e+00 : f32
    %188 = vector.broadcast %cst_47 : f32 to vector<8x96xf32>
    %189 = arith.addf %188, %187 : vector<8x96xf32>
    %190 = arith.divf %188, %189 : vector<8x96xf32>
    %191 = vector.extract_strided_slice %184 {offsets = [0, 96], sizes = [8, 32], strides = [1, 1]} : vector<8x256xf32> to vector<8x32xf32>
    %192 = math.tanh %191 : vector<8x32xf32>
    %193 = vector.extract_strided_slice %184 {offsets = [0, 128], sizes = [8, 96], strides = [1, 1]} : vector<8x256xf32> to vector<8x96xf32>
    %194 = arith.negf %193 : vector<8x96xf32>
    %195 = math.exp %194 : vector<8x96xf32>
    %cst_48 = arith.constant 1.000000e+00 : f32
    %196 = vector.broadcast %cst_48 : f32 to vector<8x96xf32>
    %197 = arith.addf %196, %195 : vector<8x96xf32>
    %198 = arith.divf %196, %197 : vector<8x96xf32>
    %199 = vector.extract_strided_slice %184 {offsets = [0, 224], sizes = [8, 32], strides = [1, 1]} : vector<8x256xf32> to vector<8x32xf32>
    %200 = math.tanh %199 : vector<8x32xf32>
    %201 = vector.extract_strided_slice %190 {offsets = [0, 32], sizes = [8, 32], strides = [1, 1]} : vector<8x96xf32> to vector<8x32xf32>
    %202 = arith.mulf %201, %167 : vector<8x32xf32>
    %203 = vector.extract_strided_slice %190 {offsets = [0, 0], sizes = [8, 32], strides = [1, 1]} : vector<8x96xf32> to vector<8x32xf32>
    %204 = arith.mulf %203, %192 : vector<8x32xf32>
    %205 = arith.addf %202, %204 : vector<8x32xf32>
    %206 = vector.extract_strided_slice %198 {offsets = [0, 32], sizes = [8, 32], strides = [1, 1]} : vector<8x96xf32> to vector<8x32xf32>
    %207 = arith.mulf %206, %172 : vector<8x32xf32>
    %208 = vector.extract_strided_slice %198 {offsets = [0, 0], sizes = [8, 32], strides = [1, 1]} : vector<8x96xf32> to vector<8x32xf32>
    %209 = arith.mulf %208, %200 : vector<8x32xf32>
    %210 = arith.addf %207, %209 : vector<8x32xf32>
    %211 = vector.extract_strided_slice %190 {offsets = [0, 64], sizes = [8, 32], strides = [1, 1]} : vector<8x96xf32> to vector<8x32xf32>
    %212 = math.tanh %205 : vector<8x32xf32>
    %213 = arith.mulf %211, %212 : vector<8x32xf32>
    %214 = vector.extract_strided_slice %198 {offsets = [0, 64], sizes = [8, 32], strides = [1, 1]} : vector<8x96xf32> to vector<8x32xf32>
    %215 = math.tanh %210 : vector<8x32xf32>
    %216 = arith.mulf %214, %215 : vector<8x32xf32>
    %c40_49 = arith.constant 40 : index
    %c0_50 = arith.constant 0 : index
    %217 = vector.load %arg15[%c40_49, %c0_50] : memref<64x256xf32, #tpu.memory_space<vmem>>, vector<8x128xf32>
    %c16_51 = arith.constant 16 : index
    %c128_52 = arith.constant 128 : index
    %218 = vector.load %arg15[%c16_51, %c128_52] : memref<64x256xf32, #tpu.memory_space<vmem>>, vector<8x128xf32>
    %219 = tpu.concatenate %217, %218 in 1 : vector<8x128xf32>, vector<8x128xf32> -> vector<8x256xf32>
    %220 = tpu.concatenate %213, %216 in 1 : vector<8x32xf32>, vector<8x32xf32> -> vector<8x64xf32>
    %cst_53 = arith.constant dense<0.000000e+00> : vector<8x256xf32>
    %221 = tpu.matmul %220, %22, %cst_53 {dimension_numbers = #tpu.dot_dimension_numbers<[1], [0], [0], [1], [0, 0, 1, 1], [], []>} : vector<8x64xf32>, vector<64x256xf32>, vector<8x256xf32> -> vector<8x256xf32>
    %222 = arith.addf %219, %221 : vector<8x256xf32>
    %223 = vector.extract_strided_slice %222 {offsets = [0, 0], sizes = [8, 96], strides = [1, 1]} : vector<8x256xf32> to vector<8x96xf32>
    %224 = arith.negf %223 : vector<8x96xf32>
    %225 = math.exp %224 : vector<8x96xf32>
    %cst_54 = arith.constant 1.000000e+00 : f32
    %226 = vector.broadcast %cst_54 : f32 to vector<8x96xf32>
    %227 = arith.addf %226, %225 : vector<8x96xf32>
    %228 = arith.divf %226, %227 : vector<8x96xf32>
    %229 = vector.extract_strided_slice %222 {offsets = [0, 96], sizes = [8, 32], strides = [1, 1]} : vector<8x256xf32> to vector<8x32xf32>
    %230 = math.tanh %229 : vector<8x32xf32>
    %231 = vector.extract_strided_slice %222 {offsets = [0, 128], sizes = [8, 96], strides = [1, 1]} : vector<8x256xf32> to vector<8x96xf32>
    %232 = arith.negf %231 : vector<8x96xf32>
    %233 = math.exp %232 : vector<8x96xf32>
    %cst_55 = arith.constant 1.000000e+00 : f32
    %234 = vector.broadcast %cst_55 : f32 to vector<8x96xf32>
    %235 = arith.addf %234, %233 : vector<8x96xf32>
    %236 = arith.divf %234, %235 : vector<8x96xf32>
    %237 = vector.extract_strided_slice %222 {offsets = [0, 224], sizes = [8, 32], strides = [1, 1]} : vector<8x256xf32> to vector<8x32xf32>
    %238 = math.tanh %237 : vector<8x32xf32>
    %239 = vector.extract_strided_slice %228 {offsets = [0, 32], sizes = [8, 32], strides = [1, 1]} : vector<8x96xf32> to vector<8x32xf32>
    %240 = arith.mulf %239, %205 : vector<8x32xf32>
    %241 = vector.extract_strided_slice %228 {offsets = [0, 0], sizes = [8, 32], strides = [1, 1]} : vector<8x96xf32> to vector<8x32xf32>
    %242 = arith.mulf %241, %230 : vector<8x32xf32>
    %243 = arith.addf %240, %242 : vector<8x32xf32>
    %244 = vector.extract_strided_slice %236 {offsets = [0, 32], sizes = [8, 32], strides = [1, 1]} : vector<8x96xf32> to vector<8x32xf32>
    %245 = arith.mulf %244, %210 : vector<8x32xf32>
    %246 = vector.extract_strided_slice %236 {offsets = [0, 0], sizes = [8, 32], strides = [1, 1]} : vector<8x96xf32> to vector<8x32xf32>
    %247 = arith.mulf %246, %238 : vector<8x32xf32>
    %248 = arith.addf %245, %247 : vector<8x32xf32>
    %249 = vector.extract_strided_slice %228 {offsets = [0, 64], sizes = [8, 32], strides = [1, 1]} : vector<8x96xf32> to vector<8x32xf32>
    %250 = math.tanh %243 : vector<8x32xf32>
    %251 = arith.mulf %249, %250 : vector<8x32xf32>
    %252 = vector.extract_strided_slice %236 {offsets = [0, 64], sizes = [8, 32], strides = [1, 1]} : vector<8x96xf32> to vector<8x32xf32>
    %253 = math.tanh %248 : vector<8x32xf32>
    %254 = arith.mulf %252, %253 : vector<8x32xf32>
    %c48_56 = arith.constant 48 : index
    %c0_57 = arith.constant 0 : index
    %255 = vector.load %arg15[%c48_56, %c0_57] : memref<64x256xf32, #tpu.memory_space<vmem>>, vector<8x128xf32>
    %c8_58 = arith.constant 8 : index
    %c128_59 = arith.constant 128 : index
    %256 = vector.load %arg15[%c8_58, %c128_59] : memref<64x256xf32, #tpu.memory_space<vmem>>, vector<8x128xf32>
    %257 = tpu.concatenate %255, %256 in 1 : vector<8x128xf32>, vector<8x128xf32> -> vector<8x256xf32>
    %258 = tpu.concatenate %251, %254 in 1 : vector<8x32xf32>, vector<8x32xf32> -> vector<8x64xf32>
    %cst_60 = arith.constant dense<0.000000e+00> : vector<8x256xf32>
    %259 = tpu.matmul %258, %22, %cst_60 {dimension_numbers = #tpu.dot_dimension_numbers<[1], [0], [0], [1], [0, 0, 1, 1], [], []>} : vector<8x64xf32>, vector<64x256xf32>, vector<8x256xf32> -> vector<8x256xf32>
    %260 = arith.addf %257, %259 : vector<8x256xf32>
    %261 = vector.extract_strided_slice %260 {offsets = [0, 0], sizes = [8, 96], strides = [1, 1]} : vector<8x256xf32> to vector<8x96xf32>
    %262 = arith.negf %261 : vector<8x96xf32>
    %263 = math.exp %262 : vector<8x96xf32>
    %cst_61 = arith.constant 1.000000e+00 : f32
    %264 = vector.broadcast %cst_61 : f32 to vector<8x96xf32>
    %265 = arith.addf %264, %263 : vector<8x96xf32>
    %266 = arith.divf %264, %265 : vector<8x96xf32>
    %267 = vector.extract_strided_slice %260 {offsets = [0, 96], sizes = [8, 32], strides = [1, 1]} : vector<8x256xf32> to vector<8x32xf32>
    %268 = math.tanh %267 : vector<8x32xf32>
    %269 = vector.extract_strided_slice %260 {offsets = [0, 128], sizes = [8, 96], strides = [1, 1]} : vector<8x256xf32> to vector<8x96xf32>
    %270 = arith.negf %269 : vector<8x96xf32>
    %271 = math.exp %270 : vector<8x96xf32>
    %cst_62 = arith.constant 1.000000e+00 : f32
    %272 = vector.broadcast %cst_62 : f32 to vector<8x96xf32>
    %273 = arith.addf %272, %271 : vector<8x96xf32>
    %274 = arith.divf %272, %273 : vector<8x96xf32>
    %275 = vector.extract_strided_slice %260 {offsets = [0, 224], sizes = [8, 32], strides = [1, 1]} : vector<8x256xf32> to vector<8x32xf32>
    %276 = math.tanh %275 : vector<8x32xf32>
    %277 = vector.extract_strided_slice %266 {offsets = [0, 32], sizes = [8, 32], strides = [1, 1]} : vector<8x96xf32> to vector<8x32xf32>
    %278 = arith.mulf %277, %243 : vector<8x32xf32>
    %279 = vector.extract_strided_slice %266 {offsets = [0, 0], sizes = [8, 32], strides = [1, 1]} : vector<8x96xf32> to vector<8x32xf32>
    %280 = arith.mulf %279, %268 : vector<8x32xf32>
    %281 = arith.addf %278, %280 : vector<8x32xf32>
    %282 = vector.extract_strided_slice %274 {offsets = [0, 32], sizes = [8, 32], strides = [1, 1]} : vector<8x96xf32> to vector<8x32xf32>
    %283 = arith.mulf %282, %248 : vector<8x32xf32>
    %284 = vector.extract_strided_slice %274 {offsets = [0, 0], sizes = [8, 32], strides = [1, 1]} : vector<8x96xf32> to vector<8x32xf32>
    %285 = arith.mulf %284, %276 : vector<8x32xf32>
    %286 = arith.addf %283, %285 : vector<8x32xf32>
    %287 = vector.extract_strided_slice %266 {offsets = [0, 64], sizes = [8, 32], strides = [1, 1]} : vector<8x96xf32> to vector<8x32xf32>
    %288 = math.tanh %281 : vector<8x32xf32>
    %289 = arith.mulf %287, %288 : vector<8x32xf32>
    %290 = vector.extract_strided_slice %274 {offsets = [0, 64], sizes = [8, 32], strides = [1, 1]} : vector<8x96xf32> to vector<8x32xf32>
    %291 = math.tanh %286 : vector<8x32xf32>
    %292 = arith.mulf %290, %291 : vector<8x32xf32>
    %c56_63 = arith.constant 56 : index
    %c0_64 = arith.constant 0 : index
    %293 = vector.load %arg15[%c56_63, %c0_64] : memref<64x256xf32, #tpu.memory_space<vmem>>, vector<8x128xf32>
    %c0_65 = arith.constant 0 : index
    %c128_66 = arith.constant 128 : index
    %294 = vector.load %arg15[%c0_65, %c128_66] : memref<64x256xf32, #tpu.memory_space<vmem>>, vector<8x128xf32>
    %295 = tpu.concatenate %293, %294 in 1 : vector<8x128xf32>, vector<8x128xf32> -> vector<8x256xf32>
    %296 = tpu.concatenate %289, %292 in 1 : vector<8x32xf32>, vector<8x32xf32> -> vector<8x64xf32>
    %cst_67 = arith.constant dense<0.000000e+00> : vector<8x256xf32>
    %297 = tpu.matmul %296, %22, %cst_67 {dimension_numbers = #tpu.dot_dimension_numbers<[1], [0], [0], [1], [0, 0, 1, 1], [], []>} : vector<8x64xf32>, vector<64x256xf32>, vector<8x256xf32> -> vector<8x256xf32>
    %298 = arith.addf %295, %297 : vector<8x256xf32>
    %299 = vector.extract_strided_slice %298 {offsets = [0, 0], sizes = [8, 96], strides = [1, 1]} : vector<8x256xf32> to vector<8x96xf32>
    %300 = arith.negf %299 : vector<8x96xf32>
    %301 = math.exp %300 : vector<8x96xf32>
    %cst_68 = arith.constant 1.000000e+00 : f32
    %302 = vector.broadcast %cst_68 : f32 to vector<8x96xf32>
    %303 = arith.addf %302, %301 : vector<8x96xf32>
    %304 = arith.divf %302, %303 : vector<8x96xf32>
    %305 = vector.extract_strided_slice %298 {offsets = [0, 96], sizes = [8, 32], strides = [1, 1]} : vector<8x256xf32> to vector<8x32xf32>
    %306 = math.tanh %305 : vector<8x32xf32>
    %307 = vector.extract_strided_slice %298 {offsets = [0, 128], sizes = [8, 96], strides = [1, 1]} : vector<8x256xf32> to vector<8x96xf32>
    %308 = arith.negf %307 : vector<8x96xf32>
    %309 = math.exp %308 : vector<8x96xf32>
    %cst_69 = arith.constant 1.000000e+00 : f32
    %310 = vector.broadcast %cst_69 : f32 to vector<8x96xf32>
    %311 = arith.addf %310, %309 : vector<8x96xf32>
    %312 = arith.divf %310, %311 : vector<8x96xf32>
    %313 = vector.extract_strided_slice %298 {offsets = [0, 224], sizes = [8, 32], strides = [1, 1]} : vector<8x256xf32> to vector<8x32xf32>
    %314 = math.tanh %313 : vector<8x32xf32>
    %315 = vector.extract_strided_slice %304 {offsets = [0, 32], sizes = [8, 32], strides = [1, 1]} : vector<8x96xf32> to vector<8x32xf32>
    %316 = arith.mulf %315, %281 : vector<8x32xf32>
    %317 = vector.extract_strided_slice %304 {offsets = [0, 0], sizes = [8, 32], strides = [1, 1]} : vector<8x96xf32> to vector<8x32xf32>
    %318 = arith.mulf %317, %306 : vector<8x32xf32>
    %319 = arith.addf %316, %318 : vector<8x32xf32>
    %320 = vector.extract_strided_slice %312 {offsets = [0, 32], sizes = [8, 32], strides = [1, 1]} : vector<8x96xf32> to vector<8x32xf32>
    %321 = arith.mulf %320, %286 : vector<8x32xf32>
    %322 = vector.extract_strided_slice %312 {offsets = [0, 0], sizes = [8, 32], strides = [1, 1]} : vector<8x96xf32> to vector<8x32xf32>
    %323 = arith.mulf %322, %314 : vector<8x32xf32>
    %324 = arith.addf %321, %323 : vector<8x32xf32>
    %325 = vector.extract_strided_slice %304 {offsets = [0, 64], sizes = [8, 32], strides = [1, 1]} : vector<8x96xf32> to vector<8x32xf32>
    %326 = math.tanh %319 : vector<8x32xf32>
    %327 = arith.mulf %325, %326 : vector<8x32xf32>
    %328 = vector.extract_strided_slice %312 {offsets = [0, 64], sizes = [8, 32], strides = [1, 1]} : vector<8x96xf32> to vector<8x32xf32>
    %329 = math.tanh %324 : vector<8x32xf32>
    %330 = arith.mulf %328, %329 : vector<8x32xf32>
    %331 = tpu.concatenate %61, %330 in 1 : vector<8x32xf32>, vector<8x32xf32> -> vector<8x64xf32>
    %332 = tpu.concatenate %99, %292 in 1 : vector<8x32xf32>, vector<8x32xf32> -> vector<8x64xf32>
    %333 = tpu.concatenate %137, %254 in 1 : vector<8x32xf32>, vector<8x32xf32> -> vector<8x64xf32>
    %334 = tpu.concatenate %175, %216 in 1 : vector<8x32xf32>, vector<8x32xf32> -> vector<8x64xf32>
    %335 = tpu.concatenate %213, %178 in 1 : vector<8x32xf32>, vector<8x32xf32> -> vector<8x64xf32>
    %336 = tpu.concatenate %251, %140 in 1 : vector<8x32xf32>, vector<8x32xf32> -> vector<8x64xf32>
    %337 = tpu.concatenate %289, %102 in 1 : vector<8x32xf32>, vector<8x32xf32> -> vector<8x64xf32>
    %338 = tpu.concatenate %327, %64 in 1 : vector<8x32xf32>, vector<8x32xf32> -> vector<8x64xf32>
    %339 = tpu.concatenate %331, %332, %333, %334, %335, %336, %337, %338 in 0 : vector<8x64xf32>, vector<8x64xf32>, vector<8x64xf32>, vector<8x64xf32>, vector<8x64xf32>, vector<8x64xf32>, vector<8x64xf32>, vector<8x64xf32> -> vector<64x64xf32>
    %c0_70 = arith.constant 0 : index
    %c0_71 = arith.constant 0 : index
    %340 = vector.load %arg7[%c0_70, %c0_71] : memref<64x256xf32, #tpu.memory_space<vmem>>, vector<64x256xf32>
    %cst_72 = arith.constant dense<0.000000e+00> : vector<64x256xf32>
    %341 = tpu.matmul %339, %340, %cst_72 {dimension_numbers = #tpu.dot_dimension_numbers<[1], [0], [0], [1], [0, 0, 1, 1], [], []>} : vector<64x64xf32>, vector<64x256xf32>, vector<64x256xf32> -> vector<64x256xf32>
    %c0_73 = arith.constant 0 : index
    %c0_74 = arith.constant 0 : index
    %342 = vector.load %arg9[%c0_73, %c0_74] : memref<1x256xf32, #tpu.memory_space<vmem>>, vector<1x256xf32>
    %343 = vector.broadcast %342 : vector<1x256xf32> to vector<64x256xf32>
    %344 = arith.addf %341, %343 : vector<64x256xf32>
    %c0_75 = arith.constant 0 : index
    %c0_76 = arith.constant 0 : index
    %345 = vector.load %arg15[%c0_75, %c0_76] : memref<64x256xf32, #tpu.memory_space<vmem>>, vector<64x256xf32>
    tpu.vector_store %arg15[%c0_75, %c0_76], %344 {strides = array<i32>} : memref<64x256xf32, #tpu.memory_space<vmem>>, vector<64x256xf32>,
    %c0_77 = arith.constant 0 : index
    %c0_78 = arith.constant 0 : index
    %346 = vector.load %arg8[%c0_77, %c0_78] : memref<64x256xf32, #tpu.memory_space<vmem>>, vector<64x256xf32>
    %cst_79 = arith.constant 0.000000e+00 : f32
    %347 = vector.broadcast %cst_79 : f32 to vector<8x32xf32>
    %cst_80 = arith.constant 0.000000e+00 : f32
    %348 = vector.broadcast %cst_80 : f32 to vector<8x32xf32>
    %cst_81 = arith.constant 0.000000e+00 : f32
    %349 = vector.broadcast %cst_81 : f32 to vector<8x32xf32>
    %cst_82 = arith.constant 0.000000e+00 : f32
    %350 = vector.broadcast %cst_82 : f32 to vector<8x32xf32>
    %c0_83 = arith.constant 0 : index
    %c0_84 = arith.constant 0 : index
    %351 = vector.load %arg15[%c0_83, %c0_84] : memref<64x256xf32, #tpu.memory_space<vmem>>, vector<8x128xf32>
    %c56_85 = arith.constant 56 : index
    %c128_86 = arith.constant 128 : index
    %352 = vector.load %arg15[%c56_85, %c128_86] : memref<64x256xf32, #tpu.memory_space<vmem>>, vector<8x128xf32>
    %353 = tpu.concatenate %351, %352 in 1 : vector<8x128xf32>, vector<8x128xf32> -> vector<8x256xf32>
    %354 = tpu.concatenate %347, %349 in 1 : vector<8x32xf32>, vector<8x32xf32> -> vector<8x64xf32>
    %cst_87 = arith.constant dense<0.000000e+00> : vector<8x256xf32>
    %355 = tpu.matmul %354, %346, %cst_87 {dimension_numbers = #tpu.dot_dimension_numbers<[1], [0], [0], [1], [0, 0, 1, 1], [], []>} : vector<8x64xf32>, vector<64x256xf32>, vector<8x256xf32> -> vector<8x256xf32>
    %356 = arith.addf %353, %355 : vector<8x256xf32>
    %357 = vector.extract_strided_slice %356 {offsets = [0, 0], sizes = [8, 96], strides = [1, 1]} : vector<8x256xf32> to vector<8x96xf32>
    %358 = arith.negf %357 : vector<8x96xf32>
    %359 = math.exp %358 : vector<8x96xf32>
    %cst_88 = arith.constant 1.000000e+00 : f32
    %360 = vector.broadcast %cst_88 : f32 to vector<8x96xf32>
    %361 = arith.addf %360, %359 : vector<8x96xf32>
    %362 = arith.divf %360, %361 : vector<8x96xf32>
    %363 = vector.extract_strided_slice %356 {offsets = [0, 96], sizes = [8, 32], strides = [1, 1]} : vector<8x256xf32> to vector<8x32xf32>
    %364 = math.tanh %363 : vector<8x32xf32>
    %365 = vector.extract_strided_slice %356 {offsets = [0, 128], sizes = [8, 96], strides = [1, 1]} : vector<8x256xf32> to vector<8x96xf32>
    %366 = arith.negf %365 : vector<8x96xf32>
    %367 = math.exp %366 : vector<8x96xf32>
    %cst_89 = arith.constant 1.000000e+00 : f32
    %368 = vector.broadcast %cst_89 : f32 to vector<8x96xf32>
    %369 = arith.addf %368, %367 : vector<8x96xf32>
    %370 = arith.divf %368, %369 : vector<8x96xf32>
    %371 = vector.extract_strided_slice %356 {offsets = [0, 224], sizes = [8, 32], strides = [1, 1]} : vector<8x256xf32> to vector<8x32xf32>
    %372 = math.tanh %371 : vector<8x32xf32>
    %373 = vector.extract_strided_slice %362 {offsets = [0, 32], sizes = [8, 32], strides = [1, 1]} : vector<8x96xf32> to vector<8x32xf32>
    %374 = arith.mulf %373, %348 : vector<8x32xf32>
    %375 = vector.extract_strided_slice %362 {offsets = [0, 0], sizes = [8, 32], strides = [1, 1]} : vector<8x96xf32> to vector<8x32xf32>
    %376 = arith.mulf %375, %364 : vector<8x32xf32>
    %377 = arith.addf %374, %376 : vector<8x32xf32>
    %378 = vector.extract_strided_slice %370 {offsets = [0, 32], sizes = [8, 32], strides = [1, 1]} : vector<8x96xf32> to vector<8x32xf32>
    %379 = arith.mulf %378, %350 : vector<8x32xf32>
    %380 = vector.extract_strided_slice %370 {offsets = [0, 0], sizes = [8, 32], strides = [1, 1]} : vector<8x96xf32> to vector<8x32xf32>
    %381 = arith.mulf %380, %372 : vector<8x32xf32>
    %382 = arith.addf %379, %381 : vector<8x32xf32>
    %383 = vector.extract_strided_slice %362 {offsets = [0, 64], sizes = [8, 32], strides = [1, 1]} : vector<8x96xf32> to vector<8x32xf32>
    %384 = math.tanh %377 : vector<8x32xf32>
    %385 = arith.mulf %383, %384 : vector<8x32xf32>
    %386 = vector.extract_strided_slice %370 {offsets = [0, 64], sizes = [8, 32], strides = [1, 1]} : vector<8x96xf32> to vector<8x32xf32>
    %387 = math.tanh %382 : vector<8x32xf32>
    %388 = arith.mulf %386, %387 : vector<8x32xf32>
    %c8_90 = arith.constant 8 : index
    %c0_91 = arith.constant 0 : index
    %389 = vector.load %arg15[%c8_90, %c0_91] : memref<64x256xf32, #tpu.memory_space<vmem>>, vector<8x128xf32>
    %c48_92 = arith.constant 48 : index
    %c128_93 = arith.constant 128 : index
    %390 = vector.load %arg15[%c48_92, %c128_93] : memref<64x256xf32, #tpu.memory_space<vmem>>, vector<8x128xf32>
    %391 = tpu.concatenate %389, %390 in 1 : vector<8x128xf32>, vector<8x128xf32> -> vector<8x256xf32>
    %392 = tpu.concatenate %385, %388 in 1 : vector<8x32xf32>, vector<8x32xf32> -> vector<8x64xf32>
    %cst_94 = arith.constant dense<0.000000e+00> : vector<8x256xf32>
    %393 = tpu.matmul %392, %346, %cst_94 {dimension_numbers = #tpu.dot_dimension_numbers<[1], [0], [0], [1], [0, 0, 1, 1], [], []>} : vector<8x64xf32>, vector<64x256xf32>, vector<8x256xf32> -> vector<8x256xf32>
    %394 = arith.addf %391, %393 : vector<8x256xf32>
    %395 = vector.extract_strided_slice %394 {offsets = [0, 0], sizes = [8, 96], strides = [1, 1]} : vector<8x256xf32> to vector<8x96xf32>
    %396 = arith.negf %395 : vector<8x96xf32>
    %397 = math.exp %396 : vector<8x96xf32>
    %cst_95 = arith.constant 1.000000e+00 : f32
    %398 = vector.broadcast %cst_95 : f32 to vector<8x96xf32>
    %399 = arith.addf %398, %397 : vector<8x96xf32>
    %400 = arith.divf %398, %399 : vector<8x96xf32>
    %401 = vector.extract_strided_slice %394 {offsets = [0, 96], sizes = [8, 32], strides = [1, 1]} : vector<8x256xf32> to vector<8x32xf32>
    %402 = math.tanh %401 : vector<8x32xf32>
    %403 = vector.extract_strided_slice %394 {offsets = [0, 128], sizes = [8, 96], strides = [1, 1]} : vector<8x256xf32> to vector<8x96xf32>
    %404 = arith.negf %403 : vector<8x96xf32>
    %405 = math.exp %404 : vector<8x96xf32>
    %cst_96 = arith.constant 1.000000e+00 : f32
    %406 = vector.broadcast %cst_96 : f32 to vector<8x96xf32>
    %407 = arith.addf %406, %405 : vector<8x96xf32>
    %408 = arith.divf %406, %407 : vector<8x96xf32>
    %409 = vector.extract_strided_slice %394 {offsets = [0, 224], sizes = [8, 32], strides = [1, 1]} : vector<8x256xf32> to vector<8x32xf32>
    %410 = math.tanh %409 : vector<8x32xf32>
    %411 = vector.extract_strided_slice %400 {offsets = [0, 32], sizes = [8, 32], strides = [1, 1]} : vector<8x96xf32> to vector<8x32xf32>
    %412 = arith.mulf %411, %377 : vector<8x32xf32>
    %413 = vector.extract_strided_slice %400 {offsets = [0, 0], sizes = [8, 32], strides = [1, 1]} : vector<8x96xf32> to vector<8x32xf32>
    %414 = arith.mulf %413, %402 : vector<8x32xf32>
    %415 = arith.addf %412, %414 : vector<8x32xf32>
    %416 = vector.extract_strided_slice %408 {offsets = [0, 32], sizes = [8, 32], strides = [1, 1]} : vector<8x96xf32> to vector<8x32xf32>
    %417 = arith.mulf %416, %382 : vector<8x32xf32>
    %418 = vector.extract_strided_slice %408 {offsets = [0, 0], sizes = [8, 32], strides = [1, 1]} : vector<8x96xf32> to vector<8x32xf32>
    %419 = arith.mulf %418, %410 : vector<8x32xf32>
    %420 = arith.addf %417, %419 : vector<8x32xf32>
    %421 = vector.extract_strided_slice %400 {offsets = [0, 64], sizes = [8, 32], strides = [1, 1]} : vector<8x96xf32> to vector<8x32xf32>
    %422 = math.tanh %415 : vector<8x32xf32>
    %423 = arith.mulf %421, %422 : vector<8x32xf32>
    %424 = vector.extract_strided_slice %408 {offsets = [0, 64], sizes = [8, 32], strides = [1, 1]} : vector<8x96xf32> to vector<8x32xf32>
    %425 = math.tanh %420 : vector<8x32xf32>
    %426 = arith.mulf %424, %425 : vector<8x32xf32>
    %c16_97 = arith.constant 16 : index
    %c0_98 = arith.constant 0 : index
    %427 = vector.load %arg15[%c16_97, %c0_98] : memref<64x256xf32, #tpu.memory_space<vmem>>, vector<8x128xf32>
    %c40_99 = arith.constant 40 : index
    %c128_100 = arith.constant 128 : index
    %428 = vector.load %arg15[%c40_99, %c128_100] : memref<64x256xf32, #tpu.memory_space<vmem>>, vector<8x128xf32>
    %429 = tpu.concatenate %427, %428 in 1 : vector<8x128xf32>, vector<8x128xf32> -> vector<8x256xf32>
    %430 = tpu.concatenate %423, %426 in 1 : vector<8x32xf32>, vector<8x32xf32> -> vector<8x64xf32>
    %cst_101 = arith.constant dense<0.000000e+00> : vector<8x256xf32>
    %431 = tpu.matmul %430, %346, %cst_101 {dimension_numbers = #tpu.dot_dimension_numbers<[1], [0], [0], [1], [0, 0, 1, 1], [], []>} : vector<8x64xf32>, vector<64x256xf32>, vector<8x256xf32> -> vector<8x256xf32>
    %432 = arith.addf %429, %431 : vector<8x256xf32>
    %433 = vector.extract_strided_slice %432 {offsets = [0, 0], sizes = [8, 96], strides = [1, 1]} : vector<8x256xf32> to vector<8x96xf32>
    %434 = arith.negf %433 : vector<8x96xf32>
    %435 = math.exp %434 : vector<8x96xf32>
    %cst_102 = arith.constant 1.000000e+00 : f32
    %436 = vector.broadcast %cst_102 : f32 to vector<8x96xf32>
    %437 = arith.addf %436, %435 : vector<8x96xf32>
    %438 = arith.divf %436, %437 : vector<8x96xf32>
    %439 = vector.extract_strided_slice %432 {offsets = [0, 96], sizes = [8, 32], strides = [1, 1]} : vector<8x256xf32> to vector<8x32xf32>
    %440 = math.tanh %439 : vector<8x32xf32>
    %441 = vector.extract_strided_slice %432 {offsets = [0, 128], sizes = [8, 96], strides = [1, 1]} : vector<8x256xf32> to vector<8x96xf32>
    %442 = arith.negf %441 : vector<8x96xf32>
    %443 = math.exp %442 : vector<8x96xf32>
    %cst_103 = arith.constant 1.000000e+00 : f32
    %444 = vector.broadcast %cst_103 : f32 to vector<8x96xf32>
    %445 = arith.addf %444, %443 : vector<8x96xf32>
    %446 = arith.divf %444, %445 : vector<8x96xf32>
    %447 = vector.extract_strided_slice %432 {offsets = [0, 224], sizes = [8, 32], strides = [1, 1]} : vector<8x256xf32> to vector<8x32xf32>
    %448 = math.tanh %447 : vector<8x32xf32>
    %449 = vector.extract_strided_slice %438 {offsets = [0, 32], sizes = [8, 32], strides = [1, 1]} : vector<8x96xf32> to vector<8x32xf32>
    %450 = arith.mulf %449, %415 : vector<8x32xf32>
    %451 = vector.extract_strided_slice %438 {offsets = [0, 0], sizes = [8, 32], strides = [1, 1]} : vector<8x96xf32> to vector<8x32xf32>
    %452 = arith.mulf %451, %440 : vector<8x32xf32>
    %453 = arith.addf %450, %452 : vector<8x32xf32>
    %454 = vector.extract_strided_slice %446 {offsets = [0, 32], sizes = [8, 32], strides = [1, 1]} : vector<8x96xf32> to vector<8x32xf32>
    %455 = arith.mulf %454, %420 : vector<8x32xf32>
    %456 = vector.extract_strided_slice %446 {offsets = [0, 0], sizes = [8, 32], strides = [1, 1]} : vector<8x96xf32> to vector<8x32xf32>
    %457 = arith.mulf %456, %448 : vector<8x32xf32>
    %458 = arith.addf %455, %457 : vector<8x32xf32>
    %459 = vector.extract_strided_slice %438 {offsets = [0, 64], sizes = [8, 32], strides = [1, 1]} : vector<8x96xf32> to vector<8x32xf32>
    %460 = math.tanh %453 : vector<8x32xf32>
    %461 = arith.mulf %459, %460 : vector<8x32xf32>
    %462 = vector.extract_strided_slice %446 {offsets = [0, 64], sizes = [8, 32], strides = [1, 1]} : vector<8x96xf32> to vector<8x32xf32>
    %463 = math.tanh %458 : vector<8x32xf32>
    %464 = arith.mulf %462, %463 : vector<8x32xf32>
    %c24_104 = arith.constant 24 : index
    %c0_105 = arith.constant 0 : index
    %465 = vector.load %arg15[%c24_104, %c0_105] : memref<64x256xf32, #tpu.memory_space<vmem>>, vector<8x128xf32>
    %c32_106 = arith.constant 32 : index
    %c128_107 = arith.constant 128 : index
    %466 = vector.load %arg15[%c32_106, %c128_107] : memref<64x256xf32, #tpu.memory_space<vmem>>, vector<8x128xf32>
    %467 = tpu.concatenate %465, %466 in 1 : vector<8x128xf32>, vector<8x128xf32> -> vector<8x256xf32>
    %468 = tpu.concatenate %461, %464 in 1 : vector<8x32xf32>, vector<8x32xf32> -> vector<8x64xf32>
    %cst_108 = arith.constant dense<0.000000e+00> : vector<8x256xf32>
    %469 = tpu.matmul %468, %346, %cst_108 {dimension_numbers = #tpu.dot_dimension_numbers<[1], [0], [0], [1], [0, 0, 1, 1], [], []>} : vector<8x64xf32>, vector<64x256xf32>, vector<8x256xf32> -> vector<8x256xf32>
    %470 = arith.addf %467, %469 : vector<8x256xf32>
    %471 = vector.extract_strided_slice %470 {offsets = [0, 0], sizes = [8, 96], strides = [1, 1]} : vector<8x256xf32> to vector<8x96xf32>
    %472 = arith.negf %471 : vector<8x96xf32>
    %473 = math.exp %472 : vector<8x96xf32>
    %cst_109 = arith.constant 1.000000e+00 : f32
    %474 = vector.broadcast %cst_109 : f32 to vector<8x96xf32>
    %475 = arith.addf %474, %473 : vector<8x96xf32>
    %476 = arith.divf %474, %475 : vector<8x96xf32>
    %477 = vector.extract_strided_slice %470 {offsets = [0, 96], sizes = [8, 32], strides = [1, 1]} : vector<8x256xf32> to vector<8x32xf32>
    %478 = math.tanh %477 : vector<8x32xf32>
    %479 = vector.extract_strided_slice %470 {offsets = [0, 128], sizes = [8, 96], strides = [1, 1]} : vector<8x256xf32> to vector<8x96xf32>
    %480 = arith.negf %479 : vector<8x96xf32>
    %481 = math.exp %480 : vector<8x96xf32>
    %cst_110 = arith.constant 1.000000e+00 : f32
    %482 = vector.broadcast %cst_110 : f32 to vector<8x96xf32>
    %483 = arith.addf %482, %481 : vector<8x96xf32>
    %484 = arith.divf %482, %483 : vector<8x96xf32>
    %485 = vector.extract_strided_slice %470 {offsets = [0, 224], sizes = [8, 32], strides = [1, 1]} : vector<8x256xf32> to vector<8x32xf32>
    %486 = math.tanh %485 : vector<8x32xf32>
    %487 = vector.extract_strided_slice %476 {offsets = [0, 32], sizes = [8, 32], strides = [1, 1]} : vector<8x96xf32> to vector<8x32xf32>
    %488 = arith.mulf %487, %453 : vector<8x32xf32>
    %489 = vector.extract_strided_slice %476 {offsets = [0, 0], sizes = [8, 32], strides = [1, 1]} : vector<8x96xf32> to vector<8x32xf32>
    %490 = arith.mulf %489, %478 : vector<8x32xf32>
    %491 = arith.addf %488, %490 : vector<8x32xf32>
    %492 = vector.extract_strided_slice %484 {offsets = [0, 32], sizes = [8, 32], strides = [1, 1]} : vector<8x96xf32> to vector<8x32xf32>
    %493 = arith.mulf %492, %458 : vector<8x32xf32>
    %494 = vector.extract_strided_slice %484 {offsets = [0, 0], sizes = [8, 32], strides = [1, 1]} : vector<8x96xf32> to vector<8x32xf32>
    %495 = arith.mulf %494, %486 : vector<8x32xf32>
    %496 = arith.addf %493, %495 : vector<8x32xf32>
    %497 = vector.extract_strided_slice %476 {offsets = [0, 64], sizes = [8, 32], strides = [1, 1]} : vector<8x96xf32> to vector<8x32xf32>
    %498 = math.tanh %491 : vector<8x32xf32>
    %499 = arith.mulf %497, %498 : vector<8x32xf32>
    %500 = vector.extract_strided_slice %484 {offsets = [0, 64], sizes = [8, 32], strides = [1, 1]} : vector<8x96xf32> to vector<8x32xf32>
    %501 = math.tanh %496 : vector<8x32xf32>
    %502 = arith.mulf %500, %501 : vector<8x32xf32>
    %c32_111 = arith.constant 32 : index
    %c0_112 = arith.constant 0 : index
    %503 = vector.load %arg15[%c32_111, %c0_112] : memref<64x256xf32, #tpu.memory_space<vmem>>, vector<8x128xf32>
    %c24_113 = arith.constant 24 : index
    %c128_114 = arith.constant 128 : index
    %504 = vector.load %arg15[%c24_113, %c128_114] : memref<64x256xf32, #tpu.memory_space<vmem>>, vector<8x128xf32>
    %505 = tpu.concatenate %503, %504 in 1 : vector<8x128xf32>, vector<8x128xf32> -> vector<8x256xf32>
    %506 = tpu.concatenate %499, %502 in 1 : vector<8x32xf32>, vector<8x32xf32> -> vector<8x64xf32>
    %cst_115 = arith.constant dense<0.000000e+00> : vector<8x256xf32>
    %507 = tpu.matmul %506, %346, %cst_115 {dimension_numbers = #tpu.dot_dimension_numbers<[1], [0], [0], [1], [0, 0, 1, 1], [], []>} : vector<8x64xf32>, vector<64x256xf32>, vector<8x256xf32> -> vector<8x256xf32>
    %508 = arith.addf %505, %507 : vector<8x256xf32>
    %509 = vector.extract_strided_slice %508 {offsets = [0, 0], sizes = [8, 96], strides = [1, 1]} : vector<8x256xf32> to vector<8x96xf32>
    %510 = arith.negf %509 : vector<8x96xf32>
    %511 = math.exp %510 : vector<8x96xf32>
    %cst_116 = arith.constant 1.000000e+00 : f32
    %512 = vector.broadcast %cst_116 : f32 to vector<8x96xf32>
    %513 = arith.addf %512, %511 : vector<8x96xf32>
    %514 = arith.divf %512, %513 : vector<8x96xf32>
    %515 = vector.extract_strided_slice %508 {offsets = [0, 96], sizes = [8, 32], strides = [1, 1]} : vector<8x256xf32> to vector<8x32xf32>
    %516 = math.tanh %515 : vector<8x32xf32>
    %517 = vector.extract_strided_slice %508 {offsets = [0, 128], sizes = [8, 96], strides = [1, 1]} : vector<8x256xf32> to vector<8x96xf32>
    %518 = arith.negf %517 : vector<8x96xf32>
    %519 = math.exp %518 : vector<8x96xf32>
    %cst_117 = arith.constant 1.000000e+00 : f32
    %520 = vector.broadcast %cst_117 : f32 to vector<8x96xf32>
    %521 = arith.addf %520, %519 : vector<8x96xf32>
    %522 = arith.divf %520, %521 : vector<8x96xf32>
    %523 = vector.extract_strided_slice %508 {offsets = [0, 224], sizes = [8, 32], strides = [1, 1]} : vector<8x256xf32> to vector<8x32xf32>
    %524 = math.tanh %523 : vector<8x32xf32>
    %525 = vector.extract_strided_slice %514 {offsets = [0, 32], sizes = [8, 32], strides = [1, 1]} : vector<8x96xf32> to vector<8x32xf32>
    %526 = arith.mulf %525, %491 : vector<8x32xf32>
    %527 = vector.extract_strided_slice %514 {offsets = [0, 0], sizes = [8, 32], strides = [1, 1]} : vector<8x96xf32> to vector<8x32xf32>
    %528 = arith.mulf %527, %516 : vector<8x32xf32>
    %529 = arith.addf %526, %528 : vector<8x32xf32>
    %530 = vector.extract_strided_slice %522 {offsets = [0, 32], sizes = [8, 32], strides = [1, 1]} : vector<8x96xf32> to vector<8x32xf32>
    %531 = arith.mulf %530, %496 : vector<8x32xf32>
    %532 = vector.extract_strided_slice %522 {offsets = [0, 0], sizes = [8, 32], strides = [1, 1]} : vector<8x96xf32> to vector<8x32xf32>
    %533 = arith.mulf %532, %524 : vector<8x32xf32>
    %534 = arith.addf %531, %533 : vector<8x32xf32>
    %535 = vector.extract_strided_slice %514 {offsets = [0, 64], sizes = [8, 32], strides = [1, 1]} : vector<8x96xf32> to vector<8x32xf32>
    %536 = math.tanh %529 : vector<8x32xf32>
    %537 = arith.mulf %535, %536 : vector<8x32xf32>
    %538 = vector.extract_strided_slice %522 {offsets = [0, 64], sizes = [8, 32], strides = [1, 1]} : vector<8x96xf32> to vector<8x32xf32>
    %539 = math.tanh %534 : vector<8x32xf32>
    %540 = arith.mulf %538, %539 : vector<8x32xf32>
    %c40_118 = arith.constant 40 : index
    %c0_119 = arith.constant 0 : index
    %541 = vector.load %arg15[%c40_118, %c0_119] : memref<64x256xf32, #tpu.memory_space<vmem>>, vector<8x128xf32>
    %c16_120 = arith.constant 16 : index
    %c128_121 = arith.constant 128 : index
    %542 = vector.load %arg15[%c16_120, %c128_121] : memref<64x256xf32, #tpu.memory_space<vmem>>, vector<8x128xf32>
    %543 = tpu.concatenate %541, %542 in 1 : vector<8x128xf32>, vector<8x128xf32> -> vector<8x256xf32>
    %544 = tpu.concatenate %537, %540 in 1 : vector<8x32xf32>, vector<8x32xf32> -> vector<8x64xf32>
    %cst_122 = arith.constant dense<0.000000e+00> : vector<8x256xf32>
    %545 = tpu.matmul %544, %346, %cst_122 {dimension_numbers = #tpu.dot_dimension_numbers<[1], [0], [0], [1], [0, 0, 1, 1], [], []>} : vector<8x64xf32>, vector<64x256xf32>, vector<8x256xf32> -> vector<8x256xf32>
    %546 = arith.addf %543, %545 : vector<8x256xf32>
    %547 = vector.extract_strided_slice %546 {offsets = [0, 0], sizes = [8, 96], strides = [1, 1]} : vector<8x256xf32> to vector<8x96xf32>
    %548 = arith.negf %547 : vector<8x96xf32>
    %549 = math.exp %548 : vector<8x96xf32>
    %cst_123 = arith.constant 1.000000e+00 : f32
    %550 = vector.broadcast %cst_123 : f32 to vector<8x96xf32>
    %551 = arith.addf %550, %549 : vector<8x96xf32>
    %552 = arith.divf %550, %551 : vector<8x96xf32>
    %553 = vector.extract_strided_slice %546 {offsets = [0, 96], sizes = [8, 32], strides = [1, 1]} : vector<8x256xf32> to vector<8x32xf32>
    %554 = math.tanh %553 : vector<8x32xf32>
    %555 = vector.extract_strided_slice %546 {offsets = [0, 128], sizes = [8, 96], strides = [1, 1]} : vector<8x256xf32> to vector<8x96xf32>
    %556 = arith.negf %555 : vector<8x96xf32>
    %557 = math.exp %556 : vector<8x96xf32>
    %cst_124 = arith.constant 1.000000e+00 : f32
    %558 = vector.broadcast %cst_124 : f32 to vector<8x96xf32>
    %559 = arith.addf %558, %557 : vector<8x96xf32>
    %560 = arith.divf %558, %559 : vector<8x96xf32>
    %561 = vector.extract_strided_slice %546 {offsets = [0, 224], sizes = [8, 32], strides = [1, 1]} : vector<8x256xf32> to vector<8x32xf32>
    %562 = math.tanh %561 : vector<8x32xf32>
    %563 = vector.extract_strided_slice %552 {offsets = [0, 32], sizes = [8, 32], strides = [1, 1]} : vector<8x96xf32> to vector<8x32xf32>
    %564 = arith.mulf %563, %529 : vector<8x32xf32>
    %565 = vector.extract_strided_slice %552 {offsets = [0, 0], sizes = [8, 32], strides = [1, 1]} : vector<8x96xf32> to vector<8x32xf32>
    %566 = arith.mulf %565, %554 : vector<8x32xf32>
    %567 = arith.addf %564, %566 : vector<8x32xf32>
    %568 = vector.extract_strided_slice %560 {offsets = [0, 32], sizes = [8, 32], strides = [1, 1]} : vector<8x96xf32> to vector<8x32xf32>
    %569 = arith.mulf %568, %534 : vector<8x32xf32>
    %570 = vector.extract_strided_slice %560 {offsets = [0, 0], sizes = [8, 32], strides = [1, 1]} : vector<8x96xf32> to vector<8x32xf32>
    %571 = arith.mulf %570, %562 : vector<8x32xf32>
    %572 = arith.addf %569, %571 : vector<8x32xf32>
    %573 = vector.extract_strided_slice %552 {offsets = [0, 64], sizes = [8, 32], strides = [1, 1]} : vector<8x96xf32> to vector<8x32xf32>
    %574 = math.tanh %567 : vector<8x32xf32>
    %575 = arith.mulf %573, %574 : vector<8x32xf32>
    %576 = vector.extract_strided_slice %560 {offsets = [0, 64], sizes = [8, 32], strides = [1, 1]} : vector<8x96xf32> to vector<8x32xf32>
    %577 = math.tanh %572 : vector<8x32xf32>
    %578 = arith.mulf %576, %577 : vector<8x32xf32>
    %c48_125 = arith.constant 48 : index
    %c0_126 = arith.constant 0 : index
    %579 = vector.load %arg15[%c48_125, %c0_126] : memref<64x256xf32, #tpu.memory_space<vmem>>, vector<8x128xf32>
    %c8_127 = arith.constant 8 : index
    %c128_128 = arith.constant 128 : index
    %580 = vector.load %arg15[%c8_127, %c128_128] : memref<64x256xf32, #tpu.memory_space<vmem>>, vector<8x128xf32>
    %581 = tpu.concatenate %579, %580 in 1 : vector<8x128xf32>, vector<8x128xf32> -> vector<8x256xf32>
    %582 = tpu.concatenate %575, %578 in 1 : vector<8x32xf32>, vector<8x32xf32> -> vector<8x64xf32>
    %cst_129 = arith.constant dense<0.000000e+00> : vector<8x256xf32>
    %583 = tpu.matmul %582, %346, %cst_129 {dimension_numbers = #tpu.dot_dimension_numbers<[1], [0], [0], [1], [0, 0, 1, 1], [], []>} : vector<8x64xf32>, vector<64x256xf32>, vector<8x256xf32> -> vector<8x256xf32>
    %584 = arith.addf %581, %583 : vector<8x256xf32>
    %585 = vector.extract_strided_slice %584 {offsets = [0, 0], sizes = [8, 96], strides = [1, 1]} : vector<8x256xf32> to vector<8x96xf32>
    %586 = arith.negf %585 : vector<8x96xf32>
    %587 = math.exp %586 : vector<8x96xf32>
    %cst_130 = arith.constant 1.000000e+00 : f32
    %588 = vector.broadcast %cst_130 : f32 to vector<8x96xf32>
    %589 = arith.addf %588, %587 : vector<8x96xf32>
    %590 = arith.divf %588, %589 : vector<8x96xf32>
    %591 = vector.extract_strided_slice %584 {offsets = [0, 96], sizes = [8, 32], strides = [1, 1]} : vector<8x256xf32> to vector<8x32xf32>
    %592 = math.tanh %591 : vector<8x32xf32>
    %593 = vector.extract_strided_slice %584 {offsets = [0, 128], sizes = [8, 96], strides = [1, 1]} : vector<8x256xf32> to vector<8x96xf32>
    %594 = arith.negf %593 : vector<8x96xf32>
    %595 = math.exp %594 : vector<8x96xf32>
    %cst_131 = arith.constant 1.000000e+00 : f32
    %596 = vector.broadcast %cst_131 : f32 to vector<8x96xf32>
    %597 = arith.addf %596, %595 : vector<8x96xf32>
    %598 = arith.divf %596, %597 : vector<8x96xf32>
    %599 = vector.extract_strided_slice %584 {offsets = [0, 224], sizes = [8, 32], strides = [1, 1]} : vector<8x256xf32> to vector<8x32xf32>
    %600 = math.tanh %599 : vector<8x32xf32>
    %601 = vector.extract_strided_slice %590 {offsets = [0, 32], sizes = [8, 32], strides = [1, 1]} : vector<8x96xf32> to vector<8x32xf32>
    %602 = arith.mulf %601, %567 : vector<8x32xf32>
    %603 = vector.extract_strided_slice %590 {offsets = [0, 0], sizes = [8, 32], strides = [1, 1]} : vector<8x96xf32> to vector<8x32xf32>
    %604 = arith.mulf %603, %592 : vector<8x32xf32>
    %605 = arith.addf %602, %604 : vector<8x32xf32>
    %606 = vector.extract_strided_slice %598 {offsets = [0, 32], sizes = [8, 32], strides = [1, 1]} : vector<8x96xf32> to vector<8x32xf32>
    %607 = arith.mulf %606, %572 : vector<8x32xf32>
    %608 = vector.extract_strided_slice %598 {offsets = [0, 0], sizes = [8, 32], strides = [1, 1]} : vector<8x96xf32> to vector<8x32xf32>
    %609 = arith.mulf %608, %600 : vector<8x32xf32>
    %610 = arith.addf %607, %609 : vector<8x32xf32>
    %611 = vector.extract_strided_slice %590 {offsets = [0, 64], sizes = [8, 32], strides = [1, 1]} : vector<8x96xf32> to vector<8x32xf32>
    %612 = math.tanh %605 : vector<8x32xf32>
    %613 = arith.mulf %611, %612 : vector<8x32xf32>
    %614 = vector.extract_strided_slice %598 {offsets = [0, 64], sizes = [8, 32], strides = [1, 1]} : vector<8x96xf32> to vector<8x32xf32>
    %615 = math.tanh %610 : vector<8x32xf32>
    %616 = arith.mulf %614, %615 : vector<8x32xf32>
    %c56_132 = arith.constant 56 : index
    %c0_133 = arith.constant 0 : index
    %617 = vector.load %arg15[%c56_132, %c0_133] : memref<64x256xf32, #tpu.memory_space<vmem>>, vector<8x128xf32>
    %c0_134 = arith.constant 0 : index
    %c128_135 = arith.constant 128 : index
    %618 = vector.load %arg15[%c0_134, %c128_135] : memref<64x256xf32, #tpu.memory_space<vmem>>, vector<8x128xf32>
    %619 = tpu.concatenate %617, %618 in 1 : vector<8x128xf32>, vector<8x128xf32> -> vector<8x256xf32>
    %620 = tpu.concatenate %613, %616 in 1 : vector<8x32xf32>, vector<8x32xf32> -> vector<8x64xf32>
    %cst_136 = arith.constant dense<0.000000e+00> : vector<8x256xf32>
    %621 = tpu.matmul %620, %346, %cst_136 {dimension_numbers = #tpu.dot_dimension_numbers<[1], [0], [0], [1], [0, 0, 1, 1], [], []>} : vector<8x64xf32>, vector<64x256xf32>, vector<8x256xf32> -> vector<8x256xf32>
    %622 = arith.addf %619, %621 : vector<8x256xf32>
    %623 = vector.extract_strided_slice %622 {offsets = [0, 0], sizes = [8, 96], strides = [1, 1]} : vector<8x256xf32> to vector<8x96xf32>
    %624 = arith.negf %623 : vector<8x96xf32>
    %625 = math.exp %624 : vector<8x96xf32>
    %cst_137 = arith.constant 1.000000e+00 : f32
    %626 = vector.broadcast %cst_137 : f32 to vector<8x96xf32>
    %627 = arith.addf %626, %625 : vector<8x96xf32>
    %628 = arith.divf %626, %627 : vector<8x96xf32>
    %629 = vector.extract_strided_slice %622 {offsets = [0, 96], sizes = [8, 32], strides = [1, 1]} : vector<8x256xf32> to vector<8x32xf32>
    %630 = math.tanh %629 : vector<8x32xf32>
    %631 = vector.extract_strided_slice %622 {offsets = [0, 128], sizes = [8, 96], strides = [1, 1]} : vector<8x256xf32> to vector<8x96xf32>
    %632 = arith.negf %631 : vector<8x96xf32>
    %633 = math.exp %632 : vector<8x96xf32>
    %cst_138 = arith.constant 1.000000e+00 : f32
    %634 = vector.broadcast %cst_138 : f32 to vector<8x96xf32>
    %635 = arith.addf %634, %633 : vector<8x96xf32>
    %636 = arith.divf %634, %635 : vector<8x96xf32>
    %637 = vector.extract_strided_slice %622 {offsets = [0, 224], sizes = [8, 32], strides = [1, 1]} : vector<8x256xf32> to vector<8x32xf32>
    %638 = math.tanh %637 : vector<8x32xf32>
    %639 = vector.extract_strided_slice %628 {offsets = [0, 32], sizes = [8, 32], strides = [1, 1]} : vector<8x96xf32> to vector<8x32xf32>
    %640 = arith.mulf %639, %605 : vector<8x32xf32>
    %641 = vector.extract_strided_slice %628 {offsets = [0, 0], sizes = [8, 32], strides = [1, 1]} : vector<8x96xf32> to vector<8x32xf32>
    %642 = arith.mulf %641, %630 : vector<8x32xf32>
    %643 = arith.addf %640, %642 : vector<8x32xf32>
    %644 = vector.extract_strided_slice %636 {offsets = [0, 32], sizes = [8, 32], strides = [1, 1]} : vector<8x96xf32> to vector<8x32xf32>
    %645 = arith.mulf %644, %610 : vector<8x32xf32>
    %646 = vector.extract_strided_slice %636 {offsets = [0, 0], sizes = [8, 32], strides = [1, 1]} : vector<8x96xf32> to vector<8x32xf32>
    %647 = arith.mulf %646, %638 : vector<8x32xf32>
    %648 = arith.addf %645, %647 : vector<8x32xf32>
    %649 = vector.extract_strided_slice %628 {offsets = [0, 64], sizes = [8, 32], strides = [1, 1]} : vector<8x96xf32> to vector<8x32xf32>
    %650 = math.tanh %643 : vector<8x32xf32>
    %651 = arith.mulf %649, %650 : vector<8x32xf32>
    %652 = vector.extract_strided_slice %636 {offsets = [0, 64], sizes = [8, 32], strides = [1, 1]} : vector<8x96xf32> to vector<8x32xf32>
    %653 = math.tanh %648 : vector<8x32xf32>
    %654 = arith.mulf %652, %653 : vector<8x32xf32>
    %655 = tpu.concatenate %385, %654 in 1 : vector<8x32xf32>, vector<8x32xf32> -> vector<8x64xf32>
    %656 = tpu.concatenate %423, %616 in 1 : vector<8x32xf32>, vector<8x32xf32> -> vector<8x64xf32>
    %657 = tpu.concatenate %461, %578 in 1 : vector<8x32xf32>, vector<8x32xf32> -> vector<8x64xf32>
    %658 = tpu.concatenate %499, %540 in 1 : vector<8x32xf32>, vector<8x32xf32> -> vector<8x64xf32>
    %659 = tpu.concatenate %537, %502 in 1 : vector<8x32xf32>, vector<8x32xf32> -> vector<8x64xf32>
    %660 = tpu.concatenate %575, %464 in 1 : vector<8x32xf32>, vector<8x32xf32> -> vector<8x64xf32>
    %661 = tpu.concatenate %613, %426 in 1 : vector<8x32xf32>, vector<8x32xf32> -> vector<8x64xf32>
    %662 = tpu.concatenate %651, %388 in 1 : vector<8x32xf32>, vector<8x32xf32> -> vector<8x64xf32>
    %663 = arith.maximumf %655, %656 : vector<8x64xf32>
    %664 = arith.maximumf %663, %657 : vector<8x64xf32>
    %665 = arith.maximumf %664, %658 : vector<8x64xf32>
    %666 = arith.maximumf %665, %659 : vector<8x64xf32>
    %667 = arith.maximumf %666, %660 : vector<8x64xf32>
    %668 = arith.maximumf %667, %661 : vector<8x64xf32>
    %669 = arith.maximumf %668, %662 : vector<8x64xf32>
    %670 = tpu.concatenate %655, %656, %657, %658, %659, %660, %661, %662 in 0 : vector<8x64xf32>, vector<8x64xf32>, vector<8x64xf32>, vector<8x64xf32>, vector<8x64xf32>, vector<8x64xf32>, vector<8x64xf32>, vector<8x64xf32> -> vector<64x64xf32>
    %c0_139 = arith.constant 0 : index
    %c0_140 = arith.constant 0 : index
    %671 = vector.load %arg10[%c0_139, %c0_140] : memref<64x1xf32, #tpu.memory_space<vmem>>, vector<64x1xf32>
    %cst_141 = arith.constant dense<0.000000e+00> : vector<64x1xf32>
    %672 = tpu.matmul %670, %671, %cst_141 {dimension_numbers = #tpu.dot_dimension_numbers<[1], [0], [0], [1], [0, 0, 1, 1], [], []>} : vector<64x64xf32>, vector<64x1xf32>, vector<64x1xf32> -> vector<64x1xf32>
    %c0_142 = arith.constant 0 : index
    %c0_143 = arith.constant 0 : index
    %673 = vector.load %arg11[%c0_142, %c0_143] : memref<64x1xf32, #tpu.memory_space<vmem>>, vector<64x1xf32>
    %674 = arith.addf %672, %673 : vector<64x1xf32>
    %675 = math.tanh %674 : vector<64x1xf32>
    %676 = math.exp %675 : vector<64x1xf32>
    %677 = arith.mulf %676, %15 : vector<64x1xf32>
    %cst_144 = arith.constant 0.000000e+00 : f32
    %678 = vector.broadcast %cst_144 : f32 to vector<8x1xf32>
    %679 = vector.extract_strided_slice %677 {offsets = [0, 0], sizes = [8, 1], strides = [1, 1]} : vector<64x1xf32> to vector<8x1xf32>
    %680 = arith.addf %678, %679 : vector<8x1xf32>
    %681 = vector.extract_strided_slice %677 {offsets = [8, 0], sizes = [8, 1], strides = [1, 1]} : vector<64x1xf32> to vector<8x1xf32>
    %682 = arith.addf %680, %681 : vector<8x1xf32>
    %683 = vector.extract_strided_slice %677 {offsets = [16, 0], sizes = [8, 1], strides = [1, 1]} : vector<64x1xf32> to vector<8x1xf32>
    %684 = arith.addf %682, %683 : vector<8x1xf32>
    %685 = vector.extract_strided_slice %677 {offsets = [24, 0], sizes = [8, 1], strides = [1, 1]} : vector<64x1xf32> to vector<8x1xf32>
    %686 = arith.addf %684, %685 : vector<8x1xf32>
    %687 = vector.extract_strided_slice %677 {offsets = [32, 0], sizes = [8, 1], strides = [1, 1]} : vector<64x1xf32> to vector<8x1xf32>
    %688 = arith.addf %686, %687 : vector<8x1xf32>
    %689 = vector.extract_strided_slice %677 {offsets = [40, 0], sizes = [8, 1], strides = [1, 1]} : vector<64x1xf32> to vector<8x1xf32>
    %690 = arith.addf %688, %689 : vector<8x1xf32>
    %691 = vector.extract_strided_slice %677 {offsets = [48, 0], sizes = [8, 1], strides = [1, 1]} : vector<64x1xf32> to vector<8x1xf32>
    %692 = arith.addf %690, %691 : vector<8x1xf32>
    %693 = vector.extract_strided_slice %677 {offsets = [56, 0], sizes = [8, 1], strides = [1, 1]} : vector<64x1xf32> to vector<8x1xf32>
    %694 = arith.addf %692, %693 : vector<8x1xf32>
    %cst_145 = arith.constant 1.000000e+00 : f32
    %695 = vector.broadcast %cst_145 : f32 to vector<8x1xf32>
    %696 = arith.divf %695, %694 : vector<8x1xf32>
    %cst_146 = arith.constant 0.000000e+00 : f32
    %697 = vector.broadcast %cst_146 : f32 to vector<8x64xf32>
    %698 = vector.extract_strided_slice %677 {offsets = [0, 0], sizes = [8, 1], strides = [1, 1]} : vector<64x1xf32> to vector<8x1xf32>
    %699 = arith.mulf %698, %696 : vector<8x1xf32>
    %cst_147 = arith.constant 1.000000e-10 : f32
    %700 = vector.broadcast %cst_147 : f32 to vector<8x1xf32>
    %701 = arith.addf %699, %700 : vector<8x1xf32>
    %702 = vector.broadcast %701 : vector<8x1xf32> to vector<8x64xf32>
    %703 = arith.mulf %702, %655 : vector<8x64xf32>
    %704 = arith.addf %697, %703 : vector<8x64xf32>
    %705 = vector.extract_strided_slice %677 {offsets = [8, 0], sizes = [8, 1], strides = [1, 1]} : vector<64x1xf32> to vector<8x1xf32>
    %706 = arith.mulf %705, %696 : vector<8x1xf32>
    %cst_148 = arith.constant 1.000000e-10 : f32
    %707 = vector.broadcast %cst_148 : f32 to vector<8x1xf32>
    %708 = arith.addf %706, %707 : vector<8x1xf32>
    %709 = vector.broadcast %708 : vector<8x1xf32> to vector<8x64xf32>
    %710 = arith.mulf %709, %656 : vector<8x64xf32>
    %711 = arith.addf %704, %710 : vector<8x64xf32>
    %712 = vector.extract_strided_slice %677 {offsets = [16, 0], sizes = [8, 1], strides = [1, 1]} : vector<64x1xf32> to vector<8x1xf32>
    %713 = arith.mulf %712, %696 : vector<8x1xf32>
    %cst_149 = arith.constant 1.000000e-10 : f32
    %714 = vector.broadcast %cst_149 : f32 to vector<8x1xf32>
    %715 = arith.addf %713, %714 : vector<8x1xf32>
    %716 = vector.broadcast %715 : vector<8x1xf32> to vector<8x64xf32>
    %717 = arith.mulf %716, %657 : vector<8x64xf32>
    %718 = arith.addf %711, %717 : vector<8x64xf32>
    %719 = vector.extract_strided_slice %677 {offsets = [24, 0], sizes = [8, 1], strides = [1, 1]} : vector<64x1xf32> to vector<8x1xf32>
    %720 = arith.mulf %719, %696 : vector<8x1xf32>
    %cst_150 = arith.constant 1.000000e-10 : f32
    %721 = vector.broadcast %cst_150 : f32 to vector<8x1xf32>
    %722 = arith.addf %720, %721 : vector<8x1xf32>
    %723 = vector.broadcast %722 : vector<8x1xf32> to vector<8x64xf32>
    %724 = arith.mulf %723, %658 : vector<8x64xf32>
    %725 = arith.addf %718, %724 : vector<8x64xf32>
    %726 = vector.extract_strided_slice %677 {offsets = [32, 0], sizes = [8, 1], strides = [1, 1]} : vector<64x1xf32> to vector<8x1xf32>
    %727 = arith.mulf %726, %696 : vector<8x1xf32>
    %cst_151 = arith.constant 1.000000e-10 : f32
    %728 = vector.broadcast %cst_151 : f32 to vector<8x1xf32>
    %729 = arith.addf %727, %728 : vector<8x1xf32>
    %730 = vector.broadcast %729 : vector<8x1xf32> to vector<8x64xf32>
    %731 = arith.mulf %730, %659 : vector<8x64xf32>
    %732 = arith.addf %725, %731 : vector<8x64xf32>
    %733 = vector.extract_strided_slice %677 {offsets = [40, 0], sizes = [8, 1], strides = [1, 1]} : vector<64x1xf32> to vector<8x1xf32>
    %734 = arith.mulf %733, %696 : vector<8x1xf32>
    %cst_152 = arith.constant 1.000000e-10 : f32
    %735 = vector.broadcast %cst_152 : f32 to vector<8x1xf32>
    %736 = arith.addf %734, %735 : vector<8x1xf32>
    %737 = vector.broadcast %736 : vector<8x1xf32> to vector<8x64xf32>
    %738 = arith.mulf %737, %660 : vector<8x64xf32>
    %739 = arith.addf %732, %738 : vector<8x64xf32>
    %740 = vector.extract_strided_slice %677 {offsets = [48, 0], sizes = [8, 1], strides = [1, 1]} : vector<64x1xf32> to vector<8x1xf32>
    %741 = arith.mulf %740, %696 : vector<8x1xf32>
    %cst_153 = arith.constant 1.000000e-10 : f32
    %742 = vector.broadcast %cst_153 : f32 to vector<8x1xf32>
    %743 = arith.addf %741, %742 : vector<8x1xf32>
    %744 = vector.broadcast %743 : vector<8x1xf32> to vector<8x64xf32>
    %745 = arith.mulf %744, %661 : vector<8x64xf32>
    %746 = arith.addf %739, %745 : vector<8x64xf32>
    %747 = vector.extract_strided_slice %677 {offsets = [56, 0], sizes = [8, 1], strides = [1, 1]} : vector<64x1xf32> to vector<8x1xf32>
    %748 = arith.mulf %747, %696 : vector<8x1xf32>
    %cst_154 = arith.constant 1.000000e-10 : f32
    %749 = vector.broadcast %cst_154 : f32 to vector<8x1xf32>
    %750 = arith.addf %748, %749 : vector<8x1xf32>
    %751 = vector.broadcast %750 : vector<8x1xf32> to vector<8x64xf32>
    %752 = arith.mulf %751, %662 : vector<8x64xf32>
    %753 = arith.addf %746, %752 : vector<8x64xf32>
    %754 = tpu.concatenate %669, %753 in 1 : vector<8x64xf32>, vector<8x64xf32> -> vector<8x128xf32>
    %c0_155 = arith.constant 0 : index
    %c0_156 = arith.constant 0 : index
    %755 = vector.load %arg12[%c0_155, %c0_156] : memref<128x4xf32, #tpu.memory_space<vmem>>, vector<128x4xf32>
    %cst_157 = arith.constant dense<0.000000e+00> : vector<8x4xf32>
    %756 = tpu.matmul %754, %755, %cst_157 {dimension_numbers = #tpu.dot_dimension_numbers<[1], [0], [0], [1], [0, 0, 1, 1], [], []>} : vector<8x128xf32>, vector<128x4xf32>, vector<8x4xf32> -> vector<8x4xf32>
    %c0_158 = arith.constant 0 : index
    %c0_159 = arith.constant 0 : index
    %757 = vector.load %arg13[%c0_158, %c0_159] : memref<1x4xf32, #tpu.memory_space<vmem>>, vector<1x4xf32>
    %758 = vector.broadcast %757 : vector<1x4xf32> to vector<8x4xf32>
    %759 = arith.addf %756, %758 : vector<8x4xf32>
    %c0_160 = arith.constant 0 : index
    %c0_161 = arith.constant 0 : index
    %760 = vector.load %arg14[%c0_160, %c0_161] : memref<8x4xf32, #tpu.memory_space<vmem>>, vector<8x4xf32>
    tpu.vector_store %arg14[%c0_160, %c0_161], %759 {strides = array<i32>} : memref<8x4xf32, #tpu.memory_space<vmem>>, vector<8x4xf32>,
    return
  }
  func.func @transform_0(%arg0: i32) -> (i32, i32, i32) {
    %c0_i32 = arith.constant 0 : i32
    %c0_i32_0 = arith.constant 0 : i32
    %c0_i32_1 = arith.constant 0 : i32
    return %c0_i32, %arg0, %c0_i32_0 : i32, i32, i32
  }
  func.func @transform_1(%arg0: i32) -> (i32, i32) {
    %c0_i32 = arith.constant 0 : i32
    %c0_i32_0 = arith.constant 0 : i32
    %c0_i32_1 = arith.constant 0 : i32
    return %c0_i32, %c0_i32_0 : i32, i32
  }
  func.func @transform_2(%arg0: i32) -> (i32, i32) {
    %c0_i32 = arith.constant 0 : i32
    %c0_i32_0 = arith.constant 0 : i32
    %c0_i32_1 = arith.constant 0 : i32
    return %c0_i32, %c0_i32_0 : i32, i32
  }
  func.func @transform_3(%arg0: i32) -> (i32, i32) {
    %c0_i32 = arith.constant 0 : i32
    %c0_i32_0 = arith.constant 0 : i32
    %c0_i32_1 = arith.constant 0 : i32
    return %c0_i32, %c0_i32_0 : i32, i32
  }
  func.func @transform_4(%arg0: i32) -> (i32, i32) {
    %c0_i32 = arith.constant 0 : i32
    %c0_i32_0 = arith.constant 0 : i32
    %c0_i32_1 = arith.constant 0 : i32
    return %c0_i32, %c0_i32_0 : i32, i32
  }
  func.func @transform_5(%arg0: i32) -> (i32, i32) {
    %c0_i32 = arith.constant 0 : i32
    %c0_i32_0 = arith.constant 0 : i32
    %c0_i32_1 = arith.constant 0 : i32
    return %c0_i32, %c0_i32_0 : i32, i32
  }
  func.func @transform_6(%arg0: i32) -> (i32, i32) {
    %c0_i32 = arith.constant 0 : i32
    %c0_i32_0 = arith.constant 0 : i32
    %c0_i32_1 = arith.constant 0 : i32
    return %c0_i32, %c0_i32_0 : i32, i32
  }
  func.func @transform_7(%arg0: i32) -> (i32, i32) {
    %c0_i32 = arith.constant 0 : i32
    %c0_i32_0 = arith.constant 0 : i32
    %c0_i32_1 = arith.constant 0 : i32
    return %c0_i32, %c0_i32_0 : i32, i32
  }
  func.func @transform_8(%arg0: i32) -> (i32, i32) {
    %c0_i32 = arith.constant 0 : i32
    %c0_i32_0 = arith.constant 0 : i32
    %c0_i32_1 = arith.constant 0 : i32
    return %c0_i32, %c0_i32_0 : i32, i32
  }
  func.func @transform_9(%arg0: i32) -> (i32, i32) {
    %c0_i32 = arith.constant 0 : i32
    %c0_i32_0 = arith.constant 0 : i32
    %c0_i32_1 = arith.constant 0 : i32
    return %c0_i32, %c0_i32_0 : i32, i32
  }
  func.func @transform_10(%arg0: i32) -> (i32, i32) {
    %c0_i32 = arith.constant 0 : i32
    %c0_i32_0 = arith.constant 0 : i32
    %c0_i32_1 = arith.constant 0 : i32
    return %c0_i32, %c0_i32_0 : i32, i32
  }
  func.func @transform_11(%arg0: i32) -> (i32, i32) {
    %c0_i32 = arith.constant 0 : i32
    %c0_i32_0 = arith.constant 0 : i32
    %c0_i32_1 = arith.constant 0 : i32
    return %c0_i32, %c0_i32_0 : i32, i32
  }
  func.func @transform_12(%arg0: i32) -> (i32, i32) {
    %c0_i32 = arith.constant 0 : i32
    %c0_i32_0 = arith.constant 0 : i32
    %c0_i32_1 = arith.constant 0 : i32
    return %c0_i32, %c0_i32_0 : i32, i32
  }
  func.func @transform_13(%arg0: i32) -> (i32, i32) {
    %c0_i32 = arith.constant 0 : i32
    %c0_i32_0 = arith.constant 0 : i32
    return %arg0, %c0_i32 : i32, i32
  }
}

</mosaic_0001>

<llo_original>
// kernel: net_forward.1
$region0: #{net_forward.1}
  #allocation0 [shape = 'u32[]', space=smem, size = 0x4, offset = 0x4, fixed_abs, tag = 'smem constant byte address 0x4 - core index']
  #allocation1 [shape = 'u32[72,128]{1,0:T(1,128)}', space=vmem, size = 0x9000, scoped, tag = 'internal scratch']
  #allocation2 [shape = 'f32[64,256]{1,0:T(8,128)}', space=vmem, size = 0x10000, scoped, tag = 'scratch operand']
  %s0 = inlined_call_operand.vmem [shape: f32[6,16,768], index: 0, kind: input, shape index: {}]
  %s1 = inlined_call_operand.vmem [shape: f32[768,32], index: 1, kind: input, shape index: {}]
  %s2 = inlined_call_operand.vmem [shape: f32[1,32], index: 2, kind: input, shape index: {}]
  %s3 = inlined_call_operand.vmem [shape: f32[32,256], index: 3, kind: input, shape index: {}]
  %s4 = inlined_call_operand.vmem [shape: f32[64,256], index: 4, kind: input, shape index: {}]
  %s5 = inlined_call_operand.vmem [shape: f32[1,256], index: 5, kind: input, shape index: {}]
  %s6 = inlined_call_operand.vmem [shape: f32[64,256], index: 6, kind: input, shape index: {}]
  %s7 = inlined_call_operand.vmem [shape: f32[64,256], index: 7, kind: input, shape index: {}]
  %s8 = inlined_call_operand.vmem [shape: f32[1,256], index: 8, kind: input, shape index: {}]
  %s9 = inlined_call_operand.vmem [shape: f32[64,1], index: 9, kind: input, shape index: {}]
  %s10 = inlined_call_operand.vmem [shape: f32[64,1], index: 10, kind: input, shape index: {}]
  %s11 = inlined_call_operand.vmem [shape: f32[128,4], index: 11, kind: input, shape index: {}]
  %s12 = inlined_call_operand.vmem [shape: f32[1,4], index: 12, kind: input, shape index: {}]
  %s13 = inlined_call_operand.vmem [shape: f32[16,4], index: 13, kind: output, shape index: {}]
  %s14 = sld [smem:[#allocation0]]
  $region108: #{net_forward.1} parent=0
    _
  %s16 = ssub.s32 1, %s14
  %s17 = scalar_select 0, %s16, %s14
  $region1: #{net_forward.1} parent=0
    #allocation3 [shape = 'u8[294912]{0}', space=vmem, size = 0x48000, scoped, tag = 'input window, operand 0']
    loop: start=0, step=1, limit=4
    $region2: #{net_forward.1} parent=1 // loop_pre_header
      _
    $region3: #{net_forward.1} parent=1 // loop_header
      %s19 = sphi 0, %s23
      %p20 = scmp.ge.s32.totalorder %s19, 4
      %s29 = sphi 0, %s31
      %s32 = sphi 0, %s29
      %s33 = sphi 0, %s32
      %s49 = sphi 0, %s33
      %s53 = sphi 0, %s53
      %s55 = sphi 0, %s53
      %s56 = sphi 0, %s55
      %s70 = sphi 0, %s56
      %s74 = sphi 0, %s74
      %s76 = sphi 0, %s74
      %s77 = sphi 0, %s76
      %s91 = sphi 0, %s77
      %s95 = sphi 0, %s95
      %s97 = sphi 0, %s95
      %s98 = sphi 0, %s97
      %s112 = sphi 0, %s98
      %s116 = sphi 0, %s116
      %s118 = sphi 0, %s116
      %s119 = sphi 0, %s118
      %s133 = sphi 0, %s119
      %s137 = sphi 0, %s137
      %s139 = sphi 0, %s137
      %s140 = sphi 0, %s139
      %s154 = sphi 0, %s140
      %s158 = sphi 0, %s158
      %s160 = sphi 0, %s158
      %s161 = sphi 0, %s160
      %s175 = sphi 0, %s161
      %s179 = sphi 0, %s179
      %s181 = sphi 0, %s179
      %s182 = sphi 0, %s181
      %s196 = sphi 0, %s182
      %s200 = sphi 0, %s200
      %s202 = sphi 0, %s200
      %s203 = sphi 0, %s202
      %s217 = sphi 0, %s203
      %s221 = sphi 0, %s221
      %s223 = sphi 0, %s221
      %s224 = sphi 0, %s223
      %s238 = sphi 0, %s224
      %s242 = sphi 0, %s242
      %s244 = sphi 0, %s242
      %s245 = sphi 0, %s244
      %s259 = sphi 0, %s245
      %s263 = sphi 0, %s263
      %s265 = sphi 0, %s263
      %s266 = sphi 0, %s265
      %s280 = sphi 0, %s266
      %s284 = sphi 0, %s284
      %s286 = sphi 0, %s284
      %s287 = sphi 0, %s286
      %s301 = sphi 0, %s287
      %s307 = sphi 0, %s309
      %s310 = sphi 0, %s307
      %s311 = sphi 0, %s310
      %s327 = sphi 0, %s311
    $region4: #{net_forward.1} parent=1 // loop_header_branch
      %22 = sbr.rel (%p20) target = $region8
    $region5: #{net_forward.1} parent=1 // loop_body
      %s24 = ssub.s32 %s19, 1
      %s25 = ssub.s32 %s19, 2
      %s26 = sadd.s32 %s19, 1
      %s27 = ssub.s32 %s19, %s26
      %p28 = scmp.eq.s32.totalorder %s27, 0
      %s30 = sadd.s32 %s29, 1
      %s31 = scalar_select %p28, %s29, %s30
      %p34 = pneg %p28
      %p35 = scmp.eq.s32.totalorder %s19, 1
      %p36 = por %p34, %p35
      %p37 = scmp.ne.s32.totalorder %s29, %s32
      %p38 = scmp.eq.s32.totalorder %s19, 0
      %p39 = por %p37, %p38
      %p40 = scmp.ne.s32.totalorder %s29, %s32
      %p41 = scmp.eq.s32.totalorder %s24, 1
      %p42 = por %p40, %p41
      %p43 = scmp.ne.s32.totalorder %s32, %s33
      %p44 = scmp.eq.s32.totalorder %s24, 0
      %p45 = por %p43, %p44
      %p46 = scmp.ne.s32.totalorder %s32, %s33
      %p47 = scmp.eq.s32.totalorder %s25, 1
      %p48 = por %p46, %p47
      %p50 = scmp.ne.s32.totalorder %s33, %s49
      %p51 = scmp.eq.s32.totalorder %s25, 0
      %p52 = por %p50, %p51
      %s54 = sadd.s32 %s53, 1
      %p57 = scmp.eq.s32.totalorder %s19, 1
      %p58 = scmp.ne.s32.totalorder %s53, %s55
      %p59 = scmp.eq.s32.totalorder %s19, 0
      %p60 = por %p58, %p59
      %p61 = scmp.ne.s32.totalorder %s53, %s55
      %p62 = scmp.eq.s32.totalorder %s24, 1
      %p63 = por %p61, %p62
      %p64 = scmp.ne.s32.totalorder %s55, %s56
      %p65 = scmp.eq.s32.totalorder %s24, 0
      %p66 = por %p64, %p65
      %p67 = scmp.ne.s32.totalorder %s55, %s56
      %p68 = scmp.eq.s32.totalorder %s25, 1
      %p69 = por %p67, %p68
      %p71 = scmp.ne.s32.totalorder %s56, %s70
      %p72 = scmp.eq.s32.totalorder %s25, 0
      %p73 = por %p71, %p72
      %s75 = sadd.s32 %s74, 1
      %p78 = scmp.eq.s32.totalorder %s19, 1
      %p79 = scmp.ne.s32.totalorder %s74, %s76
      %p80 = scmp.eq.s32.totalorder %s19, 0
      %p81 = por %p79, %p80
      %p82 = scmp.ne.s32.totalorder %s74, %s76
      %p83 = scmp.eq.s32.totalorder %s24, 1
      %p84 = por %p82, %p83
      %p85 = scmp.ne.s32.totalorder %s76, %s77
      %p86 = scmp.eq.s32.totalorder %s24, 0
      %p87 = por %p85, %p86
      %p88 = scmp.ne.s32.totalorder %s76, %s77
      %p89 = scmp.eq.s32.totalorder %s25, 1
      %p90 = por %p88, %p89
      %p92 = scmp.ne.s32.totalorder %s77, %s91
      %p93 = scmp.eq.s32.totalorder %s25, 0
      %p94 = por %p92, %p93
      %s96 = sadd.s32 %s95, 1
      %p99 = scmp.eq.s32.totalorder %s19, 1
      %p100 = scmp.ne.s32.totalorder %s95, %s97
      %p101 = scmp.eq.s32.totalorder %s19, 0
      %p102 = por %p100, %p101
      %p103 = scmp.ne.s32.totalorder %s95, %s97
      %p104 = scmp.eq.s32.totalorder %s24, 1
      %p105 = por %p103, %p104
      %p106 = scmp.ne.s32.totalorder %s97, %s98
      %p107 = scmp.eq.s32.totalorder %s24, 0
      %p108 = por %p106, %p107
      %p109 = scmp.ne.s32.totalorder %s97, %s98
      %p110 = scmp.eq.s32.totalorder %s25, 1
      %p111 = por %p109, %p110
      %p113 = scmp.ne.s32.totalorder %s98, %s112
      %p114 = scmp.eq.s32.totalorder %s25, 0
      %p115 = por %p113, %p114
      %s117 = sadd.s32 %s116, 1
      %p120 = scmp.eq.s32.totalorder %s19, 1
      %p121 = scmp.ne.s32.totalorder %s116, %s118
      %p122 = scmp.eq.s32.totalorder %s19, 0
      %p123 = por %p121, %p122
      %p124 = scmp.ne.s32.totalorder %s116, %s118
      %p125 = scmp.eq.s32.totalorder %s24, 1
      %p126 = por %p124, %p125
      %p127 = scmp.ne.s32.totalorder %s118, %s119
      %p128 = scmp.eq.s32.totalorder %s24, 0
      %p129 = por %p127, %p128
      %p130 = scmp.ne.s32.totalorder %s118, %s119
      %p131 = scmp.eq.s32.totalorder %s25, 1
      %p132 = por %p130, %p131
      %p134 = scmp.ne.s32.totalorder %s119, %s133
      %p135 = scmp.eq.s32.totalorder %s25, 0
      %p136 = por %p134, %p135
      %s138 = sadd.s32 %s137, 1
      %p141 = scmp.eq.s32.totalorder %s19, 1
      %p142 = scmp.ne.s32.totalorder %s137, %s139
      %p143 = scmp.eq.s32.totalorder %s19, 0
      %p144 = por %p142, %p143
      %p145 = scmp.ne.s32.totalorder %s137, %s139
      %p146 = scmp.eq.s32.totalorder %s24, 1
      %p147 = por %p145, %p146
      %p148 = scmp.ne.s32.totalorder %s139, %s140
      %p149 = scmp.eq.s32.totalorder %s24, 0
      %p150 = por %p148, %p149
      %p151 = scmp.ne.s32.totalorder %s139, %s140
      %p152 = scmp.eq.s32.totalorder %s25, 1
      %p153 = por %p151, %p152
      %p155 = scmp.ne.s32.totalorder %s140, %s154
      %p156 = scmp.eq.s32.totalorder %s25, 0
      %p157 = por %p155, %p156
      %s159 = sadd.s32 %s158, 1
      %p162 = scmp.eq.s32.totalorder %s19, 1
      %p163 = scmp.ne.s32.totalorder %s158, %s160
      %p164 = scmp.eq.s32.totalorder %s19, 0
      %p165 = por %p163, %p164
      %p166 = scmp.ne.s32.totalorder %s158, %s160
      %p167 = scmp.eq.s32.totalorder %s24, 1
      %p168 = por %p166, %p167
      %p169 = scmp.ne.s32.totalorder %s160, %s161
      %p170 = scmp.eq.s32.totalorder %s24, 0
      %p171 = por %p169, %p170
      %p172 = scmp.ne.s32.totalorder %s160, %s161
      %p173 = scmp.eq.s32.totalorder %s25, 1
      %p174 = por %p172, %p173
      %p176 = scmp.ne.s32.totalorder %s161, %s175
      %p177 = scmp.eq.s32.totalorder %s25, 0
      %p178 = por %p176, %p177
      %s180 = sadd.s32 %s179, 1
      %p183 = scmp.eq.s32.totalorder %s19, 1
      %p184 = scmp.ne.s32.totalorder %s179, %s181
      %p185 = scmp.eq.s32.totalorder %s19, 0
      %p186 = por %p184, %p185
      %p187 = scmp.ne.s32.totalorder %s179, %s181
      %p188 = scmp.eq.s32.totalorder %s24, 1
      %p189 = por %p187, %p188
      %p190 = scmp.ne.s32.totalorder %s181, %s182
      %p191 = scmp.eq.s32.totalorder %s24, 0
      %p192 = por %p190, %p191
      %p193 = scmp.ne.s32.totalorder %s181, %s182
      %p194 = scmp.eq.s32.totalorder %s25, 1
      %p195 = por %p193, %p194
      %p197 = scmp.ne.s32.totalorder %s182, %s196
      %p198 = scmp.eq.s32.totalorder %s25, 0
      %p199 = por %p197, %p198
      %s201 = sadd.s32 %s200, 1
      %p204 = scmp.eq.s32.totalorder %s19, 1
      %p205 = scmp.ne.s32.totalorder %s200, %s202
      %p206 = scmp.eq.s32.totalorder %s19, 0
      %p207 = por %p205, %p206
      %p208 = scmp.ne.s32.totalorder %s200, %s202
      %p209 = scmp.eq.s32.totalorder %s24, 1
      %p210 = por %p208, %p209
      %p211 = scmp.ne.s32.totalorder %s202, %s203
      %p212 = scmp.eq.s32.totalorder %s24, 0
      %p213 = por %p211, %p212
      %p214 = scmp.ne.s32.totalorder %s202, %s203
      %p215 = scmp.eq.s32.totalorder %s25, 1
      %p216 = por %p214, %p215
      %p218 = scmp.ne.s32.totalorder %s203, %s217
      %p219 = scmp.eq.s32.totalorder %s25, 0
      %p220 = por %p218, %p219
      %s222 = sadd.s32 %s221, 1
      %p225 = scmp.eq.s32.totalorder %s19, 1
      %p226 = scmp.ne.s32.totalorder %s221, %s223
      %p227 = scmp.eq.s32.totalorder %s19, 0
      %p228 = por %p226, %p227
      %p229 = scmp.ne.s32.totalorder %s221, %s223
      %p230 = scmp.eq.s32.totalorder %s24, 1
      %p231 = por %p229, %p230
      %p232 = scmp.ne.s32.totalorder %s223, %s224
      %p233 = scmp.eq.s32.totalorder %s24, 0
      %p234 = por %p232, %p233
      %p235 = scmp.ne.s32.totalorder %s223, %s224
      %p236 = scmp.eq.s32.totalorder %s25, 1
      %p237 = por %p235, %p236
      %p239 = scmp.ne.s32.totalorder %s224, %s238
      %p240 = scmp.eq.s32.totalorder %s25, 0
      %p241 = por %p239, %p240
      %s243 = sadd.s32 %s242, 1
      %p246 = scmp.eq.s32.totalorder %s19, 1
      %p247 = scmp.ne.s32.totalorder %s242, %s244
      %p248 = scmp.eq.s32.totalorder %s19, 0
      %p249 = por %p247, %p248
      %p250 = scmp.ne.s32.totalorder %s242, %s244
      %p251 = scmp.eq.s32.totalorder %s24, 1
      %p252 = por %p250, %p251
      %p253 = scmp.ne.s32.totalorder %s244, %s245
      %p254 = scmp.eq.s32.totalorder %s24, 0
      %p255 = por %p253, %p254
      %p256 = scmp.ne.s32.totalorder %s244, %s245
      %p257 = scmp.eq.s32.totalorder %s25, 1
      %p258 = por %p256, %p257
      %p260 = scmp.ne.s32.totalorder %s245, %s259
      %p261 = scmp.eq.s32.totalorder %s25, 0
      %p262 = por %p260, %p261
      %s264 = sadd.s32 %s263, 1
      %p267 = scmp.eq.s32.totalorder %s19, 1
      %p268 = scmp.ne.s32.totalorder %s263, %s265
      %p269 = scmp.eq.s32.totalorder %s19, 0
      %p270 = por %p268, %p269
      %p271 = scmp.ne.s32.totalorder %s263, %s265
      %p272 = scmp.eq.s32.totalorder %s24, 1
      %p273 = por %p271, %p272
      %p274 = scmp.ne.s32.totalorder %s265, %s266
      %p275 = scmp.eq.s32.totalorder %s24, 0
      %p276 = por %p274, %p275
      %p277 = scmp.ne.s32.totalorder %s265, %s266
      %p278 = scmp.eq.s32.totalorder %s25, 1
      %p279 = por %p277, %p278
      %p281 = scmp.ne.s32.totalorder %s266, %s280
      %p282 = scmp.eq.s32.totalorder %s25, 0
      %p283 = por %p281, %p282
      %s285 = sadd.s32 %s284, 1
      %p288 = scmp.eq.s32.totalorder %s19, 1
      %p289 = scmp.ne.s32.totalorder %s284, %s286
      %p290 = scmp.eq.s32.totalorder %s19, 0
      %p291 = por %p289, %p290
      %p292 = scmp.ne.s32.totalorder %s284, %s286
      %p293 = scmp.eq.s32.totalorder %s24, 1
      %p294 = por %p292, %p293
      %p295 = scmp.ne.s32.totalorder %s286, %s287
      %p296 = scmp.eq.s32.totalorder %s24, 0
      %p297 = por %p295, %p296
      %p298 = scmp.ne.s32.totalorder %s286, %s287
      %p299 = scmp.eq.s32.totalorder %s25, 1
      %p300 = por %p298, %p299
      %p302 = scmp.ne.s32.totalorder %s287, %s301
      %p303 = scmp.eq.s32.totalorder %s25, 0
      %p304 = por %p302, %p303
      %s305 = ssub.s32 %s19, %s26
      %p306 = scmp.eq.s32.totalorder %s305, 0
      %s308 = sadd.s32 %s307, 1
      %s309 = scalar_select %p306, %s307, %s308
      %p312 = pneg %p306
      %p313 = scmp.eq.s32.totalorder %s19, 1
      %p314 = por %p312, %p313
      %p315 = scmp.ne.s32.totalorder %s307, %s310
      %p316 = scmp.eq.s32.totalorder %s19, 0
      %p317 = por %p315, %p316
      %p318 = scmp.ne.s32.totalorder %s307, %s310
      %p319 = scmp.eq.s32.totalorder %s24, 1
      %p320 = por %p318, %p319
      %p321 = scmp.ne.s32.totalorder %s310, %s311
      %p322 = scmp.eq.s32.totalorder %s24, 0
      %p323 = por %p321, %p322
      %p324 = scmp.ne.s32.totalorder %s310, %s311
      %p325 = scmp.eq.s32.totalorder %s25, 1
      %p326 = por %p324, %p325
      %p328 = scmp.ne.s32.totalorder %s311, %s327
      %p329 = scmp.eq.s32.totalorder %s25, 0
      %p330 = por %p328, %p329
      %p331 = scmp.le.s32.totalorder 1, %s19
      %p332 = scmp.lt.s32.totalorder %s19, 3
      %p333 = pnand %p331, %p332
      %p334 = pneg %p333
      // Predicated region
      $region9: #{net_forward.1} parent=5 // pred_check
        _
      $region10: #{net_forward.1} parent=5 // pred_check_branch
        %336 = sbr.rel (%p333) target = $region12
      $region11: #{net_forward.1} parent=5 // pred_region
        %s337 = ssub.s32 %s19, 1
        // Predicated region
        $region13: #{net_forward.1} parent=11 // pred_check
          %p338 = pneg %p66
        $region14: #{net_forward.1} parent=11 // pred_check_branch
          %340 = sbr.rel (%p338) target = $region16
        $region15: #{net_forward.1} parent=11 // pred_region
          _
        $region16: #{net_forward.1} parent=11 // pred_fallthru
          _
        // Predicated region
        $region17: #{net_forward.1} parent=11 // pred_check
          %p341 = pneg %p87
        $region18: #{net_forward.1} parent=11 // pred_check_branch
          %343 = sbr.rel (%p341) target = $region20
        $region19: #{net_forward.1} parent=11 // pred_region
          _
        $region20: #{net_forward.1} parent=11 // pred_fallthru
          _
        // Predicated region
        $region21: #{net_forward.1} parent=11 // pred_check
          %p344 = pneg %p108
        $region22: #{net_forward.1} parent=11 // pred_check_branch
          %346 = sbr.rel (%p344) target = $region24
        $region23: #{net_forward.1} parent=11 // pred_region
          _
        $region24: #{net_forward.1} parent=11 // pred_fallthru
          _
        // Predicated region
        $region25: #{net_forward.1} parent=11 // pred_check
          %p347 = pneg %p129
        $region26: #{net_forward.1} parent=11 // pred_check_branch
          %349 = sbr.rel (%p347) target = $region28
        $region27: #{net_forward.1} parent=11 // pred_region
          _
        $region28: #{net_forward.1} parent=11 // pred_fallthru
          _
        // Predicated region
        $region29: #{net_forward.1} parent=11 // pred_check
          %p350 = pneg %p150
        $region30: #{net_forward.1} parent=11 // pred_check_branch
          %352 = sbr.rel (%p350) target = $region32
        $region31: #{net_forward.1} parent=11 // pred_region
          _
        $region32: #{net_forward.1} parent=11 // pred_fallthru
          _
        // Predicated region
        $region33: #{net_forward.1} parent=11 // pred_check
          %p353 = pneg %p171
        $region34: #{net_forward.1} parent=11 // pred_check_branch
          %355 = sbr.rel (%p353) target = $region36
        $region35: #{net_forward.1} parent=11 // pred_region
          _
        $region36: #{net_forward.1} parent=11 // pred_fallthru
          _
        // Predicated region
        $region37: #{net_forward.1} parent=11 // pred_check
          %p356 = pneg %p192
        $region38: #{net_forward.1} parent=11 // pred_check_branch
          %358 = sbr.rel (%p356) target = $region40
        $region39: #{net_forward.1} parent=11 // pred_region
          _
        $region40: #{net_forward.1} parent=11 // pred_fallthru
          _
        // Predicated region
        $region41: #{net_forward.1} parent=11 // pred_check
          %p359 = pneg %p213
        $region42: #{net_forward.1} parent=11 // pred_check_branch
          %361 = sbr.rel (%p359) target = $region44
        $region43: #{net_forward.1} parent=11 // pred_region
          _
        $region44: #{net_forward.1} parent=11 // pred_fallthru
          _
        // Predicated region
        $region45: #{net_forward.1} parent=11 // pred_check
          %p362 = pneg %p234
        $region46: #{net_forward.1} parent=11 // pred_check_branch
          %364 = sbr.rel (%p362) target = $region48
        $region47: #{net_forward.1} parent=11 // pred_region
          _
        $region48: #{net_forward.1} parent=11 // pred_fallthru
          _
        // Predicated region
        $region49: #{net_forward.1} parent=11 // pred_check
          %p365 = pneg %p255
        $region50: #{net_forward.1} parent=11 // pred_check_branch
          %367 = sbr.rel (%p365) target = $region52
        $region51: #{net_forward.1} parent=11 // pred_region
          _
        $region52: #{net_forward.1} parent=11 // pred_fallthru
          _
        // Predicated region
        $region53: #{net_forward.1} parent=11 // pred_check
          %p368 = pneg %p276
        $region54: #{net_forward.1} parent=11 // pred_check_branch
          %370 = sbr.rel (%p368) target = $region56
        $region55: #{net_forward.1} parent=11 // pred_region
          _
        $region56: #{net_forward.1} parent=11 // pred_fallthru
          _
        // Predicated region
        $region57: #{net_forward.1} parent=11 // pred_check
          %p371 = pneg %p297
        $region58: #{net_forward.1} parent=11 // pred_check_branch
          %373 = sbr.rel (%p371) target = $region60
        $region59: #{net_forward.1} parent=11 // pred_region
          _
        $region60: #{net_forward.1} parent=11 // pred_fallthru
          _
      $region12: #{net_forward.1} parent=5 // pred_fallthru
        _
      %p374 = scmp.lt.s32.totalorder %s19, 2
      // Predicated region
      $region61: #{net_forward.1} parent=5 // pred_check
        %p375 = pneg %p374
      $region62: #{net_forward.1} parent=5 // pred_check_branch
        %377 = sbr.rel (%p375) target = $region64
      $region63: #{net_forward.1} parent=5 // pred_region
        // Predicated region
        $region65: #{net_forward.1} parent=63 // pred_check
          %p378 = pneg %p39
        $region66: #{net_forward.1} parent=63 // pred_check_branch
          %380 = sbr.rel (%p378) target = $region68
        $region67: #{net_forward.1} parent=63 // pred_region
          %s381 = sand.u32 %s29, 1
          %s382 = sand.u32 %s29, 1
          %s383 = smul.addr %s382, 288
          %s384 = scalar_lea.vmem [#allocation3], %s383
          %s385 = smul.addr %s19, 6
          %s386 = smul.addr %s385, 8
          %s387 = scalar_lea.vmem %s0, %s386
          // Predicated region
          $region69: #{net_forward.1} parent=67 // pred_check
            _
          $region70: #{net_forward.1} parent=67 // pred_check_branch
            %389 = sbr.rel (0) target = $region72
          $region71: #{net_forward.1} parent=67 // pred_region
            // Predicated region
            $region73: #{net_forward.1} parent=71 // pred_check
              _
            $region74: #{net_forward.1} parent=71 // pred_check_branch
              %391 = sbr.rel (0) target = $region76
            $region75: #{net_forward.1} parent=71 // pred_region
              loop: start=0, step=1, limit=1
              $region77: #{net_forward.1} parent=75 // loop_pre_header
                _
              $region78: #{net_forward.1} parent=75 // loop_header
                %s393 = sphi 0, %s397
                %p394 = scmp.ge.s32.totalorder %s393, 1
                %s398 = sphi %s387, %s387
                %s399 = sphi %s384, %s384
              $region79: #{net_forward.1} parent=75 // loop_header_branch
                %396 = sbr.rel (%p394) target = $region83
              $region80: #{net_forward.1} parent=75 // loop_body
                %v400 = vld [vmem:[%s398] sm:$0xff]
                %401 = vst [vmem:[%s399] sm:$0xff] %v400
                %v402 = vld [vmem:[%s398 + $0x8] sm:$0xff]
                %403 = vst [vmem:[%s399 + $0x8] sm:$0xff] %v402
                %v404 = vld [vmem:[%s398 + $0x10] sm:$0xff]
                %405 = vst [vmem:[%s399 + $0x10] sm:$0xff] %v404
                %v406 = vld [vmem:[%s398 + $0x18] sm:$0xff]
                %407 = vst [vmem:[%s399 + $0x18] sm:$0xff] %v406
                %v408 = vld [vmem:[%s398 + $0x20] sm:$0xff]
                %409 = vst [vmem:[%s399 + $0x20] sm:$0xff] %v408
                %v410 = vld [vmem:[%s398 + $0x28] sm:$0xff]
                %411 = vst [vmem:[%s399 + $0x28] sm:$0xff] %v410
                %v412 = vld [vmem:[%s398 + $0x60] sm:$0xff]
                %413 = vst [vmem:[%s399 + $0x30] sm:$0xff] %v412
                %v414 = vld [vmem:[%s398 + $0x68] sm:$0xff]
                %415 = vst [vmem:[%s399 + $0x38] sm:$0xff] %v414
                %v416 = vld [vmem:[%s398 + $0x70] sm:$0xff]
                %417 = vst [vmem:[%s399 + $0x40] sm:$0xff] %v416
                %v418 = vld [vmem:[%s398 + $0x78] sm:$0xff]
                %419 = vst [vmem:[%s399 + $0x48] sm:$0xff] %v418
                %v420 = vld [vmem:[%s398 + $0x80] sm:$0xff]
                %421 = vst [vmem:[%s399 + $0x50] sm:$0xff] %v420
                %v422 = vld [vmem:[%s398 + $0x88] sm:$0xff]
                %423 = vst [vmem:[%s399 + $0x58] sm:$0xff] %v422
                %v424 = vld [vmem:[%s398 + $0xc0] sm:$0xff]
                %425 = vst [vmem:[%s399 + $0x60] sm:$0xff] %v424
                %v426 = vld [vmem:[%s398 + $0xc8] sm:$0xff]
                %427 = vst [vmem:[%s399 + $0x68] sm:$0xff] %v426
                %v428 = vld [vmem:[%s398 + $0xd0] sm:$0xff]
                %429 = vst [vmem:[%s399 + $0x70] sm:$0xff] %v428
                %v430 = vld [vmem:[%s398 + $0xd8] sm:$0xff]
                %431 = vst [vmem:[%s399 + $0x78] sm:$0xff] %v430
                %v432 = vld [vmem:[%s398 + $0xe0] sm:$0xff]
                %433 = vst [vmem:[%s399 + $0x80] sm:$0xff] %v432
                %v434 = vld [vmem:[%s398 + $0xe8] sm:$0xff]
                %435 = vst [vmem:[%s399 + $0x88] sm:$0xff] %v434
                %v436 = vld [vmem:[%s398 + $0x120] sm:$0xff]
                %437 = vst [vmem:[%s399 + $0x90] sm:$0xff] %v436
                %v438 = vld [vmem:[%s398 + $0x128] sm:$0xff]
                %439 = vst [vmem:[%s399 + $0x98] sm:$0xff] %v438
                %v440 = vld [vmem:[%s398 + $0x130] sm:$0xff]
                %441 = vst [vmem:[%s399 + $0xa0] sm:$0xff] %v440
                %v442 = vld [vmem:[%s398 + $0x138] sm:$0xff]
                %443 = vst [vmem:[%s399 + $0xa8] sm:$0xff] %v442
                %v444 = vld [vmem:[%s398 + $0x140] sm:$0xff]
                %445 = vst [vmem:[%s399 + $0xb0] sm:$0xff] %v444
                %v446 = vld [vmem:[%s398 + $0x148] sm:$0xff]
                %447 = vst [vmem:[%s399 + $0xb8] sm:$0xff] %v446
                %v448 = vld [vmem:[%s398 + $0x180] sm:$0xff]
                %449 = vst [vmem:[%s399 + $0xc0] sm:$0xff] %v448
                %v450 = vld [vmem:[%s398 + $0x188] sm:$0xff]
                %451 = vst [vmem:[%s399 + $0xc8] sm:$0xff] %v450
                %v452 = vld [vmem:[%s398 + $0x190] sm:$0xff]
                %453 = vst [vmem:[%s399 + $0xd0] sm:$0xff] %v452
                %v454 = vld [vmem:[%s398 + $0x198] sm:$0xff]
                %455 = vst [vmem:[%s399 + $0xd8] sm:$0xff] %v454
                %v456 = vld [vmem:[%s398 + $0x1a0] sm:$0xff]
                %457 = vst [vmem:[%s399 + $0xe0] sm:$0xff] %v456
                %v458 = vld [vmem:[%s398 + $0x1a8] sm:$0xff]
                %459 = vst [vmem:[%s399 + $0xe8] sm:$0xff] %v458
                %v460 = vld [vmem:[%s398 + $0x1e0] sm:$0xff]
                %461 = vst [vmem:[%s399 + $0xf0] sm:$0xff] %v460
                %v462 = vld [vmem:[%s398 + $0x1e8] sm:$0xff]
                %463 = vst [vmem:[%s399 + $0xf8] sm:$0xff] %v462
                %v464 = vld [vmem:[%s398 + $0x1f0] sm:$0xff]
                %465 = vst [vmem:[%s399 + $0x100] sm:$0xff] %v464
                %v466 = vld [vmem:[%s398 + $0x1f8] sm:$0xff]
                %467 = vst [vmem:[%s399 + $0x108] sm:$0xff] %v466
                %v468 = vld [vmem:[%s398 + $0x200] sm:$0xff]
                %469 = vst [vmem:[%s399 + $0x110] sm:$0xff] %v468
                %v470 = vld [vmem:[%s398 + $0x208] sm:$0xff]
                %471 = vst [vmem:[%s399 + $0x118] sm:$0xff] %v470
              $region81: #{net_forward.1} parent=75 // loop_footer
                %s397 = sadd.s32 1, %s393
              $region82: #{net_forward.1} parent=75 // loop_footer_branch
                %392 = sbr.rel target = $region78
              $region83: #{net_forward.1} parent=75 // loop_exit
                _
            $region76: #{net_forward.1} parent=71 // pred_fallthru
              _
            // Predicated region
            $region84: #{net_forward.1} parent=71 // pred_check
              _
            $region85: #{net_forward.1} parent=71 // pred_check_branch
              %473 = sbr.rel target = $region87
            $region86: #{net_forward.1} parent=71 // pred_region
              _
            $region87: #{net_forward.1} parent=71 // pred_fallthru
              _
          $region72: #{net_forward.1} parent=67 // pred_fallthru
            _
          %474 = vnop
        $region68: #{net_forward.1} parent=63 // pred_fallthru
          _
      $region64: #{net_forward.1} parent=5 // pred_fallthru
        _
      %p475 = scmp.le.s32.totalorder 1, %s19
      %p476 = scmp.lt.s32.totalorder %s19, 3
      %p477 = pnand %p475, %p476
      %p478 = pneg %p477
      // Predicated region
      $region88: #{net_forward.1} parent=5 // pred_check
        _
      $region89: #{net_forward.1} parent=5 // pred_check_branch
        %480 = sbr.rel (%p477) target = $region91
      $region90: #{net_forward.1} parent=5 // pred_region
        %s481 = ssub.s32 %s19, 1
        %s482 = sand.u32 %s32, 1
        %s483 = sand.u32 %s32, 1
        %s484 = smul.addr %s483, 288
        %s485 = scalar_lea.vmem [#allocation3], %s484
        // Predicated region
        $region92: #{net_forward.1} parent=90 // pred_check
          %p486 = pneg %p45
        $region93: #{net_forward.1} parent=90 // pred_check_branch
          %488 = sbr.rel (%p486) target = $region95
        $region94: #{net_forward.1} parent=90 // pred_region
          _
        $region95: #{net_forward.1} parent=90 // pred_fallthru
          _
        %s489 = sand.u32 %s32, 1
        %s490 = sand.u32 %s32, 1
        %s491 = smul.addr %s490, 288
        %s492 = scalar_lea.vmem [#allocation3], %s491
        %p493 = pneg %p45
        %p494 = pneg %p42
        %p495 = pneg %p66
        %p496 = pneg %p63
        %p497 = pneg %p87
        %p498 = pneg %p84
        %p499 = pneg %p108
        %p500 = pneg %p105
        %p501 = pneg %p129
        %p502 = pneg %p126
        %p503 = pneg %p150
        %p504 = pneg %p147
        %p505 = pneg %p171
        %p506 = pneg %p168
        %p507 = pneg %p192
        %p508 = pneg %p189
        %p509 = pneg %p213
        %p510 = pneg %p210
        %p511 = pneg %p234
        %p512 = pneg %p231
        %p513 = pneg %p255
        %p514 = pneg %p252
        %p515 = pneg %p276
        %p516 = pneg %p273
        %p517 = pneg %p297
        %p518 = pneg %p294
        %p519 = pneg %p323
        %p520 = pneg %p320
        %p521 = scmp.lt.s32.totalorder %s24, 1
        %s522 = scalar_select %p521, %s24, 1
        %s523 = smul.addr %s522, 8
        %s524 = scalar_lea.vmem %s13, %s523
        %p525 = scmp.lt.s32.totalorder %s24, 1
        %s526 = scalar_select %p525, %s24, 1
        %s527 = smul.addr %s526, 8
        %s528 = scalar_lea.vmem %s13, %s527
        %v529 = vld [vmem:[%s485] sm:$0xff]
        %v530 = vld [vmem:[%s485 + $0x8] sm:$0xff]
        %v531 = vld [vmem:[%s485 + $0x10] sm:$0xff]
        %v532 = vld [vmem:[%s485 + $0x18] sm:$0xff]
        %v533 = vld [vmem:[%s485 + $0x20] sm:$0xff]
        %v534 = vld [vmem:[%s485 + $0x28] sm:$0xff]
        %v535 = vld [vmem:[%s485 + $0x30] sm:$0xff]
        %v536 = vld [vmem:[%s485 + $0x38] sm:$0xff]
        %v537 = vld [vmem:[%s485 + $0x40] sm:$0xff]
        %v538 = vld [vmem:[%s485 + $0x48] sm:$0xff]
        %v539 = vld [vmem:[%s485 + $0x50] sm:$0xff]
        %v540 = vld [vmem:[%s485 + $0x58] sm:$0xff]
        %v541 = vld [vmem:[%s485 + $0x60] sm:$0xff]
        %v542 = vld [vmem:[%s485 + $0x68] sm:$0xff]
        %v543 = vld [vmem:[%s485 + $0x70] sm:$0xff]
        %v544 = vld [vmem:[%s485 + $0x78] sm:$0xff]
        %v545 = vld [vmem:[%s485 + $0x80] sm:$0xff]
        %v546 = vld [vmem:[%s485 + $0x88] sm:$0xff]
        %v547 = vld [vmem:[%s485 + $0x90] sm:$0xff]
        %v548 = vld [vmem:[%s485 + $0x98] sm:$0xff]
        %v549 = vld [vmem:[%s485 + $0xa0] sm:$0xff]
        %v550 = vld [vmem:[%s485 + $0xa8] sm:$0xff]
        %v551 = vld [vmem:[%s485 + $0xb0] sm:$0xff]
        %v552 = vld [vmem:[%s485 + $0xb8] sm:$0xff]
        %v553 = vld [vmem:[%s485 + $0xc0] sm:$0xff]
        %v554 = vld [vmem:[%s485 + $0xc8] sm:$0xff]
        %v555 = vld [vmem:[%s485 + $0xd0] sm:$0xff]
        %v556 = vld [vmem:[%s485 + $0xd8] sm:$0xff]
        %v557 = vld [vmem:[%s485 + $0xe0] sm:$0xff]
        %v558 = vld [vmem:[%s485 + $0xe8] sm:$0xff]
        %v559 = vld [vmem:[%s485 + $0xf0] sm:$0xff]
        %v560 = vld [vmem:[%s485 + $0xf8] sm:$0xff]
        %v561 = vld [vmem:[%s485 + $0x100] sm:$0xff]
        %v562 = vld [vmem:[%s485 + $0x108] sm:$0xff]
        %v563 = vld [vmem:[%s485 + $0x110] sm:$0xff]
        %v564 = vld [vmem:[%s485 + $0x118] sm:$0xff]
        %v565 = vld [vmem:[%s1] sm:$0xff]
        %v566 = vld [vmem:[%s1 + $0x8] sm:$0xff]
        %v567 = vld [vmem:[%s1 + $0x10] sm:$0xff]
        %v568 = vld [vmem:[%s1 + $0x18] sm:$0xff]
        %v569 = vld [vmem:[%s1 + $0x20] sm:$0xff]
        %v570 = vld [vmem:[%s1 + $0x28] sm:$0xff]
        %v571 = vld [vmem:[%s1 + $0x30] sm:$0xff]
        %v572 = vld [vmem:[%s1 + $0x38] sm:$0xff]
        %v573 = vld [vmem:[%s1 + $0x40] sm:$0xff]
        %v574 = vld [vmem:[%s1 + $0x48] sm:$0xff]
        %v575 = vld [vmem:[%s1 + $0x50] sm:$0xff]
        %v576 = vld [vmem:[%s1 + $0x58] sm:$0xff]
        %v577 = vld [vmem:[%s1 + $0x60] sm:$0xff]
        %v578 = vld [vmem:[%s1 + $0x68] sm:$0xff]
        %v579 = vld [vmem:[%s1 + $0x70] sm:$0xff]
        %v580 = vld [vmem:[%s1 + $0x78] sm:$0xff]
        %v581 = vld [vmem:[%s1 + $0x80] sm:$0xff]
        %v582 = vld [vmem:[%s1 + $0x88] sm:$0xff]
        %v583 = vld [vmem:[%s1 + $0x90] sm:$0xff]
        %v584 = vld [vmem:[%s1 + $0x98] sm:$0xff]
        %v585 = vld [vmem:[%s1 + $0xa0] sm:$0xff]
        %v586 = vld [vmem:[%s1 + $0xa8] sm:$0xff]
        %v587 = vld [vmem:[%s1 + $0xb0] sm:$0xff]
        %v588 = vld [vmem:[%s1 + $0xb8] sm:$0xff]
        %v589 = vld [vmem:[%s1 + $0xc0] sm:$0xff]
        %v590 = vld [vmem:[%s1 + $0xc8] sm:$0xff]
        %v591 = vld [vmem:[%s1 + $0xd0] sm:$0xff]
        %v592 = vld [vmem:[%s1 + $0xd8] sm:$0xff]
        %v593 = vld [vmem:[%s1 + $0xe0] sm:$0xff]
        %v594 = vld [vmem:[%s1 + $0xe8] sm:$0xff]
        %v595 = vld [vmem:[%s1 + $0xf0] sm:$0xff]
        %v596 = vld [vmem:[%s1 + $0xf8] sm:$0xff]
        %v597 = vld [vmem:[%s1 + $0x100] sm:$0xff]
        %v598 = vld [vmem:[%s1 + $0x108] sm:$0xff]
        %v599 = vld [vmem:[%s1 + $0x110] sm:$0xff]
        %v600 = vld [vmem:[%s1 + $0x118] sm:$0xff]
        %v601 = vld [vmem:[%s1 + $0x120] sm:$0xff]
        %v602 = vld [vmem:[%s1 + $0x128] sm:$0xff]
        %v603 = vld [vmem:[%s1 + $0x130] sm:$0xff]
        %v604 = vld [vmem:[%s1 + $0x138] sm:$0xff]
        %v605 = vld [vmem:[%s1 + $0x140] sm:$0xff]
        %v606 = vld [vmem:[%s1 + $0x148] sm:$0xff]
        %v607 = vld [vmem:[%s1 + $0x150] sm:$0xff]
        %v608 = vld [vmem:[%s1 + $0x158] sm:$0xff]
        %v609 = vld [vmem:[%s1 + $0x160] sm:$0xff]
        %v610 = vld [vmem:[%s1 + $0x168] sm:$0xff]
        %v611 = vld [vmem:[%s1 + $0x170] sm:$0xff]
        %v612 = vld [vmem:[%s1 + $0x178] sm:$0xff]
        %v613 = vld [vmem:[%s1 + $0x180] sm:$0xff]
        %v614 = vld [vmem:[%s1 + $0x188] sm:$0xff]
        %v615 = vld [vmem:[%s1 + $0x190] sm:$0xff]
        %v616 = vld [vmem:[%s1 + $0x198] sm:$0xff]
        %v617 = vld [vmem:[%s1 + $0x1a0] sm:$0xff]
        %v618 = vld [vmem:[%s1 + $0x1a8] sm:$0xff]
        %v619 = vld [vmem:[%s1 + $0x1b0] sm:$0xff]
        %v620 = vld [vmem:[%s1 + $0x1b8] sm:$0xff]
        %v621 = vld [vmem:[%s1 + $0x1c0] sm:$0xff]
        %v622 = vld [vmem:[%s1 + $0x1c8] sm:$0xff]
        %v623 = vld [vmem:[%s1 + $0x1d0] sm:$0xff]
        %v624 = vld [vmem:[%s1 + $0x1d8] sm:$0xff]
        %v625 = vld [vmem:[%s1 + $0x1e0] sm:$0xff]
        %v626 = vld [vmem:[%s1 + $0x1e8] sm:$0xff]
        %v627 = vld [vmem:[%s1 + $0x1f0] sm:$0xff]
        %v628 = vld [vmem:[%s1 + $0x1f8] sm:$0xff]
        %v629 = vld [vmem:[%s1 + $0x200] sm:$0xff]
        %v630 = vld [vmem:[%s1 + $0x208] sm:$0xff]
        %v631 = vld [vmem:[%s1 + $0x210] sm:$0xff]
        %v632 = vld [vmem:[%s1 + $0x218] sm:$0xff]
        %v633 = vld [vmem:[%s1 + $0x220] sm:$0xff]
        %v634 = vld [vmem:[%s1 + $0x228] sm:$0xff]
        %v635 = vld [vmem:[%s1 + $0x230] sm:$0xff]
        %v636 = vld [vmem:[%s1 + $0x238] sm:$0xff]
        %v637 = vld [vmem:[%s1 + $0x240] sm:$0xff]
        %v638 = vld [vmem:[%s1 + $0x248] sm:$0xff]
        %v639 = vld [vmem:[%s1 + $0x250] sm:$0xff]
        %v640 = vld [vmem:[%s1 + $0x258] sm:$0xff]
        %v641 = vld [vmem:[%s1 + $0x260] sm:$0xff]
        %v642 = vld [vmem:[%s1 + $0x268] sm:$0xff]
        %v643 = vld [vmem:[%s1 + $0x270] sm:$0xff]
        %v644 = vld [vmem:[%s1 + $0x278] sm:$0xff]
        %v645 = vld [vmem:[%s1 + $0x280] sm:$0xff]
        %v646 = vld [vmem:[%s1 + $0x288] sm:$0xff]
        %v647 = vld [vmem:[%s1 + $0x290] sm:$0xff]
        %v648 = vld [vmem:[%s1 + $0x298] sm:$0xff]
        %v649 = vld [vmem:[%s1 + $0x2a0] sm:$0xff]
        %v650 = vld [vmem:[%s1 + $0x2a8] sm:$0xff]
        %v651 = vld [vmem:[%s1 + $0x2b0] sm:$0xff]
        %v652 = vld [vmem:[%s1 + $0x2b8] sm:$0xff]
        %v653 = vld [vmem:[%s1 + $0x2c0] sm:$0xff]
        %v654 = vld [vmem:[%s1 + $0x2c8] sm:$0xff]
        %v655 = vld [vmem:[%s1 + $0x2d0] sm:$0xff]
        %v656 = vld [vmem:[%s1 + $0x2d8] sm:$0xff]
        %v657 = vld [vmem:[%s1 + $0x2e0] sm:$0xff]
        %v658 = vld [vmem:[%s1 + $0x2e8] sm:$0xff]
        %v659 = vld [vmem:[%s1 + $0x2f0] sm:$0xff]
        %v660 = vld [vmem:[%s1 + $0x2f8] sm:$0xff]
        %v661 = vld [vmem:[%s2] sm:$0x1]
        %v663 = vperm.slane %v661, 0
        %665 = vmatpush.msra.mxu0 %v580
        %666 = vmatpush.msra.mxu0 %v579
        %667 = vmatpush.msra.mxu0 %v578
        %668 = vmatpush.msra.mxu0 %v577
        %669 = vmatpush.msra.mxu0 %v576
        %670 = vmatpush.msra.mxu0 %v575
        %671 = vmatpush.msra.mxu0 %v574
        %672 = vmatpush.msra.mxu0 %v573
        %673 = vmatpush.msra.mxu0 %v572
        %674 = vmatpush.msra.mxu0 %v571
        %675 = vmatpush.msra.mxu0 %v570
        %676 = vmatpush.msra.mxu0 %v569
        %677 = vmatpush.msra.mxu0 %v568
        %678 = vmatpush.msra.mxu0 %v567
        %679 = vmatpush.msra.mxu0 %v566
        %680 = vmatpush.msra.mxu0 %v565
        %681 = vmatmul.f32.gmra.mxu0 %v529
        %v682 = vpop.f32.mrf.mxu0
        %v683 = vadd.f32 %v663, %v682
        %684 = vmatmul.f32.gmra.mxu0 %v535
        %v685 = vpop.f32.mrf.mxu0
        %v686 = vadd.f32 %v663, %v685
        %687 = vmatmul.f32.gmra.mxu0 %v541
        %v688 = vpop.f32.mrf.mxu0
        %v689 = vadd.f32 %v663, %v688
        %690 = vmatmul.f32.gmra.mxu0 %v547
        %v691 = vpop.f32.mrf.mxu0
        %v692 = vadd.f32 %v663, %v691
        %693 = vmatmul.f32.gmra.mxu0 %v553
        %v694 = vpop.f32.mrf.mxu0
        %v695 = vadd.f32 %v663, %v694
        %696 = vmatmul.f32.gmra.mxu0 %v559
        %v697 = vpop.f32.mrf.mxu0
        %v698 = vadd.f32 %v663, %v697
        %699 = vdwg.mxu0
        %700 = vmatpush.msra.mxu0 %v596
        %701 = vmatpush.msra.mxu0 %v595
        %702 = vmatpush.msra.mxu0 %v594
        %703 = vmatpush.msra.mxu0 %v593
        %704 = vmatpush.msra.mxu0 %v592
        %705 = vmatpush.msra.mxu0 %v591
        %706 = vmatpush.msra.mxu0 %v590
        %707 = vmatpush.msra.mxu0 %v589
        %708 = vmatpush.msra.mxu0 %v588
        %709 = vmatpush.msra.mxu0 %v587
        %710 = vmatpush.msra.mxu0 %v586
        %711 = vmatpush.msra.mxu0 %v585
        %712 = vmatpush.msra.mxu0 %v584
        %713 = vmatpush.msra.mxu0 %v583
        %714 = vmatpush.msra.mxu0 %v582
        %715 = vmatpush.msra.mxu0 %v581
        %716 = vmatmul.f32.gmra.mxu0 %v530
        %v717 = vpop.f32.mrf.mxu0
        %v718 = vadd.f32 %v683, %v717
        %719 = vmatmul.f32.gmra.mxu0 %v536
        %v720 = vpop.f32.mrf.mxu0
        %v721 = vadd.f32 %v686, %v720
        %722 = vmatmul.f32.gmra.mxu0 %v542
        %v723 = vpop.f32.mrf.mxu0
        %v724 = vadd.f32 %v689, %v723
        %725 = vmatmul.f32.gmra.mxu0 %v548
        %v726 = vpop.f32.mrf.mxu0
        %v727 = vadd.f32 %v692, %v726
        %728 = vmatmul.f32.gmra.mxu0 %v554
        %v729 = vpop.f32.mrf.mxu0
        %v730 = vadd.f32 %v695, %v729
        %731 = vmatmul.f32.gmra.mxu0 %v560
        %v732 = vpop.f32.mrf.mxu0
        %v733 = vadd.f32 %v698, %v732
        %734 = vdwg.mxu0
        %735 = vmatpush.msra.mxu0 %v612
        %736 = vmatpush.msra.mxu0 %v611
        %737 = vmatpush.msra.mxu0 %v610
        %738 = vmatpush.msra.mxu0 %v609
        %739 = vmatpush.msra.mxu0 %v608
        %740 = vmatpush.msra.mxu0 %v607
        %741 = vmatpush.msra.mxu0 %v606
        %742 = vmatpush.msra.mxu0 %v605
        %743 = vmatpush.msra.mxu0 %v604
        %744 = vmatpush.msra.mxu0 %v603
        %745 = vmatpush.msra.mxu0 %v602
        %746 = vmatpush.msra.mxu0 %v601
        %747 = vmatpush.msra.mxu0 %v600
        %748 = vmatpush.msra.mxu0 %v599
        %749 = vmatpush.msra.mxu0 %v598
        %750 = vmatpush.msra.mxu0 %v597
        %751 = vmatmul.f32.gmra.mxu0 %v531
        %v752 = vpop.f32.mrf.mxu0
        %v753 = vadd.f32 %v718, %v752
        %754 = vmatmul.f32.gmra.mxu0 %v537
        %v755 = vpop.f32.mrf.mxu0
        %v756 = vadd.f32 %v721, %v755
        %757 = vmatmul.f32.gmra.mxu0 %v543
        %v758 = vpop.f32.mrf.mxu0
        %v759 = vadd.f32 %v724, %v758
        %760 = vmatmul.f32.gmra.mxu0 %v549
        %v761 = vpop.f32.mrf.mxu0
        %v762 = vadd.f32 %v727, %v761
        %763 = vmatmul.f32.gmra.mxu0 %v555
        %v764 = vpop.f32.mrf.mxu0
        %v765 = vadd.f32 %v730, %v764
        %766 = vmatmul.f32.gmra.mxu0 %v561
        %v767 = vpop.f32.mrf.mxu0
        %v768 = vadd.f32 %v733, %v767
        %769 = vdwg.mxu0
        %770 = vmatpush.msra.mxu0 %v628
        %771 = vmatpush.msra.mxu0 %v627
        %772 = vmatpush.msra.mxu0 %v626
        %773 = vmatpush.msra.mxu0 %v625
        %774 = vmatpush.msra.mxu0 %v624
        %775 = vmatpush.msra.mxu0 %v623
        %776 = vmatpush.msra.mxu0 %v622
        %777 = vmatpush.msra.mxu0 %v621
        %778 = vmatpush.msra.mxu0 %v620
        %779 = vmatpush.msra.mxu0 %v619
        %780 = vmatpush.msra.mxu0 %v618
        %781 = vmatpush.msra.mxu0 %v617
        %782 = vmatpush.msra.mxu0 %v616
        %783 = vmatpush.msra.mxu0 %v615
        %784 = vmatpush.msra.mxu0 %v614
        %785 = vmatpush.msra.mxu0 %v613
        %786 = vmatmul.f32.gmra.mxu0 %v532
        %v787 = vpop.f32.mrf.mxu0
        %v788 = vadd.f32 %v753, %v787
        %789 = vmatmul.f32.gmra.mxu0 %v538
        %v790 = vpop.f32.mrf.mxu0
        %v791 = vadd.f32 %v756, %v790
        %792 = vmatmul.f32.gmra.mxu0 %v544
        %v793 = vpop.f32.mrf.mxu0
        %v794 = vadd.f32 %v759, %v793
        %795 = vmatmul.f32.gmra.mxu0 %v550
        %v796 = vpop.f32.mrf.mxu0
        %v797 = vadd.f32 %v762, %v796
        %798 = vmatmul.f32.gmra.mxu0 %v556
        %v799 = vpop.f32.mrf.mxu0
        %v800 = vadd.f32 %v765, %v799
        %801 = vmatmul.f32.gmra.mxu0 %v562
        %v802 = vpop.f32.mrf.mxu0
        %v803 = vadd.f32 %v768, %v802
        %804 = vdwg.mxu0
        %805 = vmatpush.msra.mxu0 %v644
        %806 = vmatpush.msra.mxu0 %v643
        %807 = vmatpush.msra.mxu0 %v642
        %808 = vmatpush.msra.mxu0 %v641
        %809 = vmatpush.msra.mxu0 %v640
        %810 = vmatpush.msra.mxu0 %v639
        %811 = vmatpush.msra.mxu0 %v638
        %812 = vmatpush.msra.mxu0 %v637
        %813 = vmatpush.msra.mxu0 %v636
        %814 = vmatpush.msra.mxu0 %v635
        %815 = vmatpush.msra.mxu0 %v634
        %816 = vmatpush.msra.mxu0 %v633
        %817 = vmatpush.msra.mxu0 %v632
        %818 = vmatpush.msra.mxu0 %v631
        %819 = vmatpush.msra.mxu0 %v630
        %820 = vmatpush.msra.mxu0 %v629
        %821 = vmatmul.f32.gmra.mxu0 %v533
        %v822 = vpop.f32.mrf.mxu0
        %v823 = vadd.f32 %v788, %v822
        %824 = vmatmul.f32.gmra.mxu0 %v539
        %v825 = vpop.f32.mrf.mxu0
        %v826 = vadd.f32 %v791, %v825
        %827 = vmatmul.f32.gmra.mxu0 %v545
        %v828 = vpop.f32.mrf.mxu0
        %v829 = vadd.f32 %v794, %v828
        %830 = vmatmul.f32.gmra.mxu0 %v551
        %v831 = vpop.f32.mrf.mxu0
        %v832 = vadd.f32 %v797, %v831
        %833 = vmatmul.f32.gmra.mxu0 %v557
        %v834 = vpop.f32.mrf.mxu0
        %v835 = vadd.f32 %v800, %v834
        %836 = vmatmul.f32.gmra.mxu0 %v563
        %v837 = vpop.f32.mrf.mxu0
        %v838 = vadd.f32 %v803, %v837
        %839 = vdwg.mxu0
        %840 = vmatpush.msra.mxu0 %v660
        %841 = vmatpush.msra.mxu0 %v659
        %842 = vmatpush.msra.mxu0 %v658
        %843 = vmatpush.msra.mxu0 %v657
        %844 = vmatpush.msra.mxu0 %v656
        %845 = vmatpush.msra.mxu0 %v655
        %846 = vmatpush.msra.mxu0 %v654
        %847 = vmatpush.msra.mxu0 %v653
        %848 = vmatpush.msra.mxu0 %v652
        %849 = vmatpush.msra.mxu0 %v651
        %850 = vmatpush.msra.mxu0 %v650
        %851 = vmatpush.msra.mxu0 %v649
        %852 = vmatpush.msra.mxu0 %v648
        %853 = vmatpush.msra.mxu0 %v647
        %854 = vmatpush.msra.mxu0 %v646
        %855 = vmatpush.msra.mxu0 %v645
        %856 = vmatmul.f32.gmra.mxu0 %v534
        %v857 = vpop.f32.mrf.mxu0
        %v858 = vadd.f32 %v823, %v857
        %859 = vmatmul.f32.gmra.mxu0 %v540
        %v860 = vpop.f32.mrf.mxu0
        %v861 = vadd.f32 %v826, %v860
        %862 = vmatmul.f32.gmra.mxu0 %v546
        %v863 = vpop.f32.mrf.mxu0
        %v864 = vadd.f32 %v829, %v863
        %865 = vmatmul.f32.gmra.mxu0 %v552
        %v866 = vpop.f32.mrf.mxu0
        %v867 = vadd.f32 %v832, %v866
        %868 = vmatmul.f32.gmra.mxu0 %v558
        %v869 = vpop.f32.mrf.mxu0
        %v870 = vadd.f32 %v835, %v869
        %871 = vmatmul.f32.gmra.mxu0 %v564
        %v872 = vpop.f32.mrf.mxu0
        %v873 = vadd.f32 %v838, %v872
        %874 = vdwg.mxu0
        %v875 = vand.u32 2147483647, %v858
        %v876 = vand.u32 2147483647, %v861
        %v877 = vand.u32 2147483647, %v864
        %v878 = vand.u32 2147483647, %v867
        %v879 = vand.u32 2147483647, %v870
        %v880 = vand.u32 2147483647, %v873
        %vm881 = vcmask 261120
        %v882 = vsel %vm881, %v875, 0.0
        %883 = vadd.xlane.f32.xlu0 %v882
        %v884 = vpop.xlane.xlu0 %883
        %v885 = vsel %vm881, %v876, 0.0
        %886 = vadd.xlane.f32.xlu0 %v885
        %v887 = vpop.xlane.xlu0 %886
        %v888 = vsel %vm881, %v877, 0.0
        %889 = vadd.xlane.f32.xlu0 %v888
        %v890 = vpop.xlane.xlu0 %889
        %v891 = vsel %vm881, %v878, 0.0
        %892 = vadd.xlane.f32.xlu0 %v891
        %v893 = vpop.xlane.xlu0 %892
        %v894 = vsel %vm881, %v879, 0.0
        %895 = vadd.xlane.f32.xlu0 %v894
        %v896 = vpop.xlane.xlu0 %895
        %v897 = vsel %vm881, %v880, 0.0
        %898 = vadd.xlane.f32.xlu0 %v897
        %v899 = vpop.xlane.xlu0 %898
        %900 = vadd.xlane.f32.xlu0 0.0
        %v901 = vpop.xlane.xlu0 %900
        %vm902 = vcmp.gt.f32.partialorder %v884, 0.0
        %vm903 = vcmp.gt.f32.partialorder %v887, 0.0
        %vm904 = vcmp.gt.f32.partialorder %v890, 0.0
        %vm905 = vcmp.gt.f32.partialorder %v893, 0.0
        %vm906 = vcmp.gt.f32.partialorder %v896, 0.0
        %vm907 = vcmp.gt.f32.partialorder %v899, 0.0
        %vm908 = vcmp.gt.f32.partialorder %v901, 0.0
        %v909 = vsel %vm902, 1, 0
        %v910 = vsel %vm903, 1, 0
        %v911 = vsel %vm904, 1, 0
        %v912 = vsel %vm905, 1, 0
        %v913 = vsel %vm906, 1, 0
        %v914 = vsel %vm907, 1, 0
        %v915 = vsel %vm908, 1, 0
        %v916 = vcvt.s32.f32 %v909
        %v917 = vcvt.s32.f32 %v910
        %v918 = vcvt.s32.f32 %v911
        %v919 = vcvt.s32.f32 %v912
        %v920 = vcvt.s32.f32 %v913
        %v921 = vcvt.s32.f32 %v914
        %v922 = vcvt.s32.f32 %v915
        %v923 = vld [vmem:[%s3] sm:$0xff]
        %v924 = vld [vmem:[%s3 + $0x8] sm:$0xff]
        %v925 = vld [vmem:[%s3 + $0x10] sm:$0xff]
        %v926 = vld [vmem:[%s3 + $0x18] sm:$0xff]
        %v927 = vld [vmem:[%s3 + $0x20] sm:$0xff]
        %v928 = vld [vmem:[%s3 + $0x28] sm:$0xff]
        %v929 = vld [vmem:[%s3 + $0x30] sm:$0xff]
        %v930 = vld [vmem:[%s3 + $0x38] sm:$0xff]
        %v931 = vld [vmem:[%s5] sm:$0x3]
        %v933 = vperm.slane %v931, 0
        %v934 = vperm.slane %v931, 1
        %v938 = vsel %vm881, %v858, 0
        %v941 = vsel %vm881, %v861, 0
        %v944 = vsel %vm881, %v864, 0
        %v947 = vsel %vm881, %v867, 0
        %v950 = vsel %vm881, %v870, 0
        %v953 = vsel %vm881, %v873, 0
        %v956 = vsel %vm881, 0.0, 0
        %958 = vmatpush.msra.mxu0 0.0
        %959 = vmatpush.msra.mxu0 0.0
        %960 = vmatpush.msra.mxu0 0.0
        %961 = vmatpush.msra.mxu0 0.0
        %962 = vmatpush.msra.mxu0 0.0
        %963 = vmatpush.msra.mxu0 0.0
        %964 = vmatpush.msra.mxu0 0.0
        %965 = vmatpush.msra.mxu0 0.0
        %966 = vmatpush.msra.mxu0 0.0
        %967 = vmatpush.msra.mxu0 0.0
        %968 = vmatpush.msra.mxu0 0.0
        %969 = vmatpush.msra.mxu0 0.0
        %970 = vmatpush.msra.mxu0 %v929
        %971 = vmatpush.msra.mxu0 %v927
        %972 = vmatpush.msra.mxu0 %v925
        %973 = vmatpush.msra.mxu0 %v923
        %974 = vmatmul.f32.gmra.mxu0 %v938
        %v975 = vpop.f32.mrf.mxu0
        %v976 = vadd.f32 %v933, %v975
        %977 = vmatmul.f32.gmra.mxu0 %v941
        %v978 = vpop.f32.mrf.mxu0
        %v979 = vadd.f32 %v933, %v978
        %980 = vmatmul.f32.gmra.mxu0 %v944
        %v981 = vpop.f32.mrf.mxu0
        %v982 = vadd.f32 %v933, %v981
        %983 = vmatmul.f32.gmra.mxu0 %v947
        %v984 = vpop.f32.mrf.mxu0
        %v985 = vadd.f32 %v933, %v984
        %986 = vmatmul.f32.gmra.mxu0 %v950
        %v987 = vpop.f32.mrf.mxu0
        %v988 = vadd.f32 %v933, %v987
        %989 = vmatmul.f32.gmra.mxu0 %v953
        %v990 = vpop.f32.mrf.mxu0
        %v991 = vadd.f32 %v933, %v990
        %992 = vmatmul.f32.gmra.mxu0 %v956
        %v993 = vpop.f32.mrf.mxu0
        %v994 = vadd.f32 %v933, %v993
        %995 = vmatmul.f32.gmra.mxu0 %v956
        %v996 = vpop.f32.mrf.mxu0
        %v997 = vadd.f32 %v933, %v996
        %998 = vdwg.mxu0
        %999 = vmatpush.msra.mxu0 0.0
        %1000 = vmatpush.msra.mxu0 0.0
        %1001 = vmatpush.msra.mxu0 0.0
        %1002 = vmatpush.msra.mxu0 0.0
        %1003 = vmatpush.msra.mxu0 0.0
        %1004 = vmatpush.msra.mxu0 0.0
        %1005 = vmatpush.msra.mxu0 0.0
        %1006 = vmatpush.msra.mxu0 0.0
        %1007 = vmatpush.msra.mxu0 0.0
        %1008 = vmatpush.msra.mxu0 0.0
        %1009 = vmatpush.msra.mxu0 0.0
        %1010 = vmatpush.msra.mxu0 0.0
        %1011 = vmatpush.msra.mxu0 %v930
        %1012 = vmatpush.msra.mxu0 %v928
        %1013 = vmatpush.msra.mxu0 %v926
        %1014 = vmatpush.msra.mxu0 %v924
        %1015 = vmatmul.f32.gmra.mxu0 %v938
        %v1016 = vpop.f32.mrf.mxu0
        %v1017 = vadd.f32 %v934, %v1016
        %1018 = vmatmul.f32.gmra.mxu0 %v941
        %v1019 = vpop.f32.mrf.mxu0
        %v1020 = vadd.f32 %v934, %v1019
        %1021 = vmatmul.f32.gmra.mxu0 %v944
        %v1022 = vpop.f32.mrf.mxu0
        %v1023 = vadd.f32 %v934, %v1022
        %1024 = vmatmul.f32.gmra.mxu0 %v947
        %v1025 = vpop.f32.mrf.mxu0
        %v1026 = vadd.f32 %v934, %v1025
        %1027 = vmatmul.f32.gmra.mxu0 %v950
        %v1028 = vpop.f32.mrf.mxu0
        %v1029 = vadd.f32 %v934, %v1028
        %1030 = vmatmul.f32.gmra.mxu0 %v953
        %v1031 = vpop.f32.mrf.mxu0
        %v1032 = vadd.f32 %v934, %v1031
        %1033 = vmatmul.f32.gmra.mxu0 %v956
        %v1034 = vpop.f32.mrf.mxu0
        %v1035 = vadd.f32 %v934, %v1034
        %1036 = vmatmul.f32.gmra.mxu0 %v956
        %v1037 = vpop.f32.mrf.mxu0
        %v1038 = vadd.f32 %v934, %v1037
        %1039 = vdwg.mxu0
        %1040 = vst [vmem:[#allocation2] sm:$0xff] %v976
        %1041 = vst [vmem:[#allocation2 + $0x8] sm:$0xff] %v1017
        %1042 = vst [vmem:[#allocation2 + $0x10] sm:$0xff] %v979
        %1043 = vst [vmem:[#allocation2 + $0x18] sm:$0xff] %v1020
        %1044 = vst [vmem:[#allocation2 + $0x20] sm:$0xff] %v982
        %1045 = vst [vmem:[#allocation2 + $0x28] sm:$0xff] %v1023
        %1046 = vst [vmem:[#allocation2 + $0x30] sm:$0xff] %v985
        %1047 = vst [vmem:[#allocation2 + $0x38] sm:$0xff] %v1026
        %1048 = vst [vmem:[#allocation2 + $0x40] sm:$0xff] %v988
        %1049 = vst [vmem:[#allocation2 + $0x48] sm:$0xff] %v1029
        %1050 = vst [vmem:[#allocation2 + $0x50] sm:$0xff] %v991
        %1051 = vst [vmem:[#allocation2 + $0x58] sm:$0xff] %v1032
        %1052 = vst [vmem:[#allocation2 + $0x60] sm:$0xff] %v994
        %1053 = vst [vmem:[#allocation2 + $0x68] sm:$0xff] %v1035
        %1054 = vst [vmem:[#allocation2 + $0x70] sm:$0xff] %v997
        %1055 = vst [vmem:[#allocation2 + $0x78] sm:$0xff] %v1038
        %v1056 = vld [vmem:[%s4] sm:$0xff]
        %v1057 = vld [vmem:[%s4 + $0x8] sm:$0xff]
        %v1058 = vld [vmem:[%s4 + $0x10] sm:$0xff]
        %v1059 = vld [vmem:[%s4 + $0x18] sm:$0xff]
        %v1060 = vld [vmem:[%s4 + $0x20] sm:$0xff]
        %v1061 = vld [vmem:[%s4 + $0x28] sm:$0xff]
        %v1062 = vld [vmem:[%s4 + $0x30] sm:$0xff]
        %v1063 = vld [vmem:[%s4 + $0x38] sm:$0xff]
        %v1064 = vld [vmem:[%s4 + $0x40] sm:$0xff]
        %v1065 = vld [vmem:[%s4 + $0x48] sm:$0xff]
        %v1066 = vld [vmem:[%s4 + $0x50] sm:$0xff]
        %v1067 = vld [vmem:[%s4 + $0x58] sm:$0xff]
        %v1068 = vld [vmem:[%s4 + $0x60] sm:$0xff]
        %v1069 = vld [vmem:[%s4 + $0x68] sm:$0xff]
        %v1070 = vld [vmem:[%s4 + $0x70] sm:$0xff]
        %v1071 = vld [vmem:[%s4 + $0x78] sm:$0xff]
        %v1072 = vld [vmem:[#allocation2] sm:$0xff]
        %v1073 = vld [vmem:[#allocation2 + $0x78] sm:$0xff]
        %vm1074 = vcmask 523264
        %v1075 = vsel %vm1074, 0.0, 0
        %1077 = vmatpush.msra.mxu0 0.0
        %1078 = vmatpush.msra.mxu0 0.0
        %1079 = vmatpush.msra.mxu0 0.0
        %1080 = vmatpush.msra.mxu0 0.0
        %1081 = vmatpush.msra.mxu0 0.0
        %1082 = vmatpush.msra.mxu0 0.0
        %1083 = vmatpush.msra.mxu0 0.0
        %1084 = vmatpush.msra.mxu0 0.0
        %1085 = vmatpush.msra.mxu0 %v1070
        %1086 = vmatpush.msra.mxu0 %v1068
        %1087 = vmatpush.msra.mxu0 %v1066
        %1088 = vmatpush.msra.mxu0 %v1064
        %1089 = vmatpush.msra.mxu0 %v1062
        %1090 = vmatpush.msra.mxu0 %v1060
        %1091 = vmatpush.msra.mxu0 %v1058
        %1092 = vmatpush.msra.mxu0 %v1056
        %1093 = vmatmul.f32.gmra.mxu0 %v1075
        %v1094 = vpop.f32.mrf.mxu0
        %v1095 = vadd.f32 0.0, %v1094
        %1096 = vdwg.mxu0
        %1097 = vmatpush.msra.mxu0 0.0
        %1098 = vmatpush.msra.mxu0 0.0
        %1099 = vmatpush.msra.mxu0 0.0
        %1100 = vmatpush.msra.mxu0 0.0
        %1101 = vmatpush.msra.mxu0 0.0
        %1102 = vmatpush.msra.mxu0 0.0
        %1103 = vmatpush.msra.mxu0 0.0
        %1104 = vmatpush.msra.mxu0 0.0
        %1105 = vmatpush.msra.mxu0 %v1071
        %1106 = vmatpush.msra.mxu0 %v1069
        %1107 = vmatpush.msra.mxu0 %v1067
        %1108 = vmatpush.msra.mxu0 %v1065
        %1109 = vmatpush.msra.mxu0 %v1063
        %1110 = vmatpush.msra.mxu0 %v1061
        %1111 = vmatpush.msra.mxu0 %v1059
        %1112 = vmatpush.msra.mxu0 %v1057
        %1113 = vmatmul.f32.gmra.mxu0 %v1075
        %v1114 = vpop.f32.mrf.mxu0
        %v1115 = vadd.f32 0.0, %v1114
        %1116 = vdwg.mxu0
        %v1117 = vadd.f32 %v1072, %v1095
        %v1118 = vadd.f32 %v1073, %v1115
        %v1119 = vxor.u32 %v1117, 2147483648
        %v1120 = vmul.f32 %v1119, 1.442695
        %v1121 = vpow.pop %v1120
        %v1122 = vadd.f32 %v1121, 1.0
        %v1123 = vrcp.pop %v1122
        %v1124 = vmul.f32 %v1122, %v1123
        %v1125 = vsub.f32 1.0, %v1124
        %v1126 = vmul.f32 %v1123, %v1125
        %v1127 = vadd.f32 %v1123, %v1126
        %vm1128 = vweird.f32 %v1122
        %vm1129 = vweird.f32 %v1123
        %vm1130 = vmor %vm1128, %vm1129
        %v1131 = vsel %vm1130, %v1123, %v1127
        %v1132 = vand.u32 2147483647, %v1122
        %vm1133 = vcmp.eq.f32.partialorder %v1132, 8.507059e+37
        %v1134 = vand.u32 %v1122, 2147483648
        %v1135 = vor.u32 1.1754944e-38, %v1134
        %v1136 = vsel %vm1133, %v1135, %v1131
        %v1137 = vmul.f32 1.0, %v1136
        %v1138 = vtanh.pop %v1117
        %v1139 = vxor.u32 %v1118, 2147483648
        %v1140 = vmul.f32 %v1139, 1.442695
        %v1141 = vpow.pop %v1140
        %v1142 = vadd.f32 %v1141, 1.0
        %v1143 = vrcp.pop %v1142
        %v1144 = vmul.f32 %v1142, %v1143
        %v1145 = vsub.f32 1.0, %v1144
        %v1146 = vmul.f32 %v1143, %v1145
        %v1147 = vadd.f32 %v1143, %v1146
        %vm1148 = vweird.f32 %v1142
        %vm1149 = vweird.f32 %v1143
        %vm1150 = vmor %vm1148, %vm1149
        %v1151 = vsel %vm1150, %v1143, %v1147
        %v1152 = vand.u32 2147483647, %v1142
        %vm1153 = vcmp.eq.f32.partialorder %v1152, 8.507059e+37
        %v1154 = vand.u32 %v1142, 2147483648
        %v1155 = vor.u32 1.1754944e-38, %v1154
        %v1156 = vsel %vm1153, %v1155, %v1151
        %v1157 = vmul.f32 1.0, %v1156
        %v1158 = vtanh.pop %v1118
        %v1159 = vmul.f32 %v1137, 0.0
        %1161 = vrot.lane.b32.xlu0 %v1138, 32
        %v1162 = vpop.permute.xlu0 %1161
        %v1164 = vmul.f32 %v1137, %v1162
        %1166 = vrot.lane.b32.xlu0 %v1164, 32
        %v1167 = vpop.permute.xlu0 %1166
        %v1169 = vadd.f32 %v1159, %v1167
        %v1170 = vmul.f32 %v1157, 0.0
        %1172 = vrot.lane.b32.xlu0 %v1158, 32
        %v1173 = vpop.permute.xlu0 %1172
        %v1175 = vmul.f32 %v1157, %v1173
        %1177 = vrot.lane.b32.xlu0 %v1175, 32
        %v1178 = vpop.permute.xlu0 %1177
        %v1180 = vadd.f32 %v1170, %v1178
        %v1181 = vtanh.pop %v1169
        %1183 = vrot.lane.b32.xlu0 %v1181, 32
        %v1184 = vpop.permute.xlu0 %1183
        %v1186 = vmul.f32 %v1137, %v1184
        %v1187 = vtanh.pop %v1180
        %1189 = vrot.lane.b32.xlu0 %v1187, 32
        %v1190 = vpop.permute.xlu0 %1189
        %v1192 = vmul.f32 %v1157, %v1190
        %v1193 = vld [vmem:[#allocation2 + $0x10] sm:$0xff]
        %v1194 = vld [vmem:[#allocation2 + $0x68] sm:$0xff]
        %1196 = vrot.lane.b32.xlu0 %v1186, 64
        %v1197 = vpop.permute.xlu0 %1196
        %1200 = vrot.lane.b32.xlu0 %v1192, 96
        %v1201 = vpop.permute.xlu0 %1200
        %v1203 = vsel %vm881, %v1197, %v1201
        %v1205 = vsel %vm1074, %v1203, 0
        %1207 = vmatpush.msra.mxu0 0.0
        %1208 = vmatpush.msra.mxu0 0.0
        %1209 = vmatpush.msra.mxu0 0.0
        %1210 = vmatpush.msra.mxu0 0.0
        %1211 = vmatpush.msra.mxu0 0.0
        %1212 = vmatpush.msra.mxu0 0.0
        %1213 = vmatpush.msra.mxu0 0.0
        %1214 = vmatpush.msra.mxu0 0.0
        %1215 = vmatpush.msra.mxu0 %v1070
        %1216 = vmatpush.msra.mxu0 %v1068
        %1217 = vmatpush.msra.mxu0 %v1066
        %1218 = vmatpush.msra.mxu0 %v1064
        %1219 = vmatpush.msra.mxu0 %v1062
        %1220 = vmatpush.msra.mxu0 %v1060
        %1221 = vmatpush.msra.mxu0 %v1058
        %1222 = vmatpush.msra.mxu0 %v1056
        %1223 = vmatmul.f32.gmra.mxu0 %v1205
        %v1224 = vpop.f32.mrf.mxu0
        %v1225 = vadd.f32 0.0, %v1224
        %1226 = vdwg.mxu0
        %1227 = vmatpush.msra.mxu0 0.0
        %1228 = vmatpush.msra.mxu0 0.0
        %1229 = vmatpush.msra.mxu0 0.0
        %1230 = vmatpush.msra.mxu0 0.0
        %1231 = vmatpush.msra.mxu0 0.0
        %1232 = vmatpush.msra.mxu0 0.0
        %1233 = vmatpush.msra.mxu0 0.0
        %1234 = vmatpush.msra.mxu0 0.0
        %1235 = vmatpush.msra.mxu0 %v1071
        %1236 = vmatpush.msra.mxu0 %v1069
        %1237 = vmatpush.msra.mxu0 %v1067
        %1238 = vmatpush.msra.mxu0 %v1065
        %1239 = vmatpush.msra.mxu0 %v1063
        %1240 = vmatpush.msra.mxu0 %v1061
        %1241 = vmatpush.msra.mxu0 %v1059
        %1242 = vmatpush.msra.mxu0 %v1057
        %1243 = vmatmul.f32.gmra.mxu0 %v1205
        %v1244 = vpop.f32.mrf.mxu0
        %v1245 = vadd.f32 0.0, %v1244
        %1246 = vdwg.mxu0
        %v1247 = vadd.f32 %v1193, %v1225
        %v1248 = vadd.f32 %v1194, %v1245
        %v1249 = vxor.u32 %v1247, 2147483648
        %v1250 = vmul.f32 %v1249, 1.442695
        %v1251 = vpow.pop %v1250
        %v1252 = vadd.f32 %v1251, 1.0
        %v1253 = vrcp.pop %v1252
        %v1254 = vmul.f32 %v1252, %v1253
        %v1255 = vsub.f32 1.0, %v1254
        %v1256 = vmul.f32 %v1253, %v1255
        %v1257 = vadd.f32 %v1253, %v1256
        %vm1258 = vweird.f32 %v1252
        %vm1259 = vweird.f32 %v1253
        %vm1260 = vmor %vm1258, %vm1259
        %v1261 = vsel %vm1260, %v1253, %v1257
        %v1262 = vand.u32 2147483647, %v1252
        %vm1263 = vcmp.eq.f32.partialorder %v1262, 8.507059e+37
        %v1264 = vand.u32 %v1252, 2147483648
        %v1265 = vor.u32 1.1754944e-38, %v1264
        %v1266 = vsel %vm1263, %v1265, %v1261
        %v1267 = vmul.f32 1.0, %v1266
        %v1268 = vtanh.pop %v1247
        %v1269 = vxor.u32 %v1248, 2147483648
        %v1270 = vmul.f32 %v1269, 1.442695
        %v1271 = vpow.pop %v1270
        %v1272 = vadd.f32 %v1271, 1.0
        %v1273 = vrcp.pop %v1272
        %v1274 = vmul.f32 %v1272, %v1273
        %v1275 = vsub.f32 1.0, %v1274
        %v1276 = vmul.f32 %v1273, %v1275
        %v1277 = vadd.f32 %v1273, %v1276
        %vm1278 = vweird.f32 %v1272
        %vm1279 = vweird.f32 %v1273
        %vm1280 = vmor %vm1278, %vm1279
        %v1281 = vsel %vm1280, %v1273, %v1277
        %v1282 = vand.u32 2147483647, %v1272
        %vm1283 = vcmp.eq.f32.partialorder %v1282, 8.507059e+37
        %v1284 = vand.u32 %v1272, 2147483648
        %v1285 = vor.u32 1.1754944e-38, %v1284
        %v1286 = vsel %vm1283, %v1285, %v1281
        %v1287 = vmul.f32 1.0, %v1286
        %v1288 = vtanh.pop %v1248
        %v1289 = vmul.f32 %v1267, %v1169
        %1291 = vrot.lane.b32.xlu0 %v1268, 32
        %v1292 = vpop.permute.xlu0 %1291
        %v1294 = vmul.f32 %v1267, %v1292
        %1296 = vrot.lane.b32.xlu0 %v1294, 32
        %v1297 = vpop.permute.xlu0 %1296
        %v1299 = vadd.f32 %v1289, %v1297
        %v1300 = vmul.f32 %v1287, %v1180
        %1302 = vrot.lane.b32.xlu0 %v1288, 32
        %v1303 = vpop.permute.xlu0 %1302
        %v1305 = vmul.f32 %v1287, %v1303
        %1307 = vrot.lane.b32.xlu0 %v1305, 32
        %v1308 = vpop.permute.xlu0 %1307
        %v1310 = vadd.f32 %v1300, %v1308
        %v1311 = vtanh.pop %v1299
        %1313 = vrot.lane.b32.xlu0 %v1311, 32
        %v1314 = vpop.permute.xlu0 %1313
        %v1316 = vmul.f32 %v1267, %v1314
        %v1317 = vtanh.pop %v1310
        %1319 = vrot.lane.b32.xlu0 %v1317, 32
        %v1320 = vpop.permute.xlu0 %1319
        %v1322 = vmul.f32 %v1287, %v1320
        %v1323 = vld [vmem:[#allocation2 + $0x20] sm:$0xff]
        %v1324 = vld [vmem:[#allocation2 + $0x58] sm:$0xff]
        %1326 = vrot.lane.b32.xlu0 %v1316, 64
        %v1327 = vpop.permute.xlu0 %1326
        %1330 = vrot.lane.b32.xlu0 %v1322, 96
        %v1331 = vpop.permute.xlu0 %1330
        %v1333 = vsel %vm881, %v1327, %v1331
        %v1335 = vsel %vm1074, %v1333, 0
        %1337 = vmatpush.msra.mxu0 0.0
        %1338 = vmatpush.msra.mxu0 0.0
        %1339 = vmatpush.msra.mxu0 0.0
        %1340 = vmatpush.msra.mxu0 0.0
        %1341 = vmatpush.msra.mxu0 0.0
        %1342 = vmatpush.msra.mxu0 0.0
        %1343 = vmatpush.msra.mxu0 0.0
        %1344 = vmatpush.msra.mxu0 0.0
        %1345 = vmatpush.msra.mxu0 %v1070
        %1346 = vmatpush.msra.mxu0 %v1068
        %1347 = vmatpush.msra.mxu0 %v1066
        %1348 = vmatpush.msra.mxu0 %v1064
        %1349 = vmatpush.msra.mxu0 %v1062
        %1350 = vmatpush.msra.mxu0 %v1060
        %1351 = vmatpush.msra.mxu0 %v1058
        %1352 = vmatpush.msra.mxu0 %v1056
        %1353 = vmatmul.f32.gmra.mxu0 %v1335
        %v1354 = vpop.f32.mrf.mxu0
        %v1355 = vadd.f32 0.0, %v1354
        %1356 = vdwg.mxu0
        %1357 = vmatpush.msra.mxu0 0.0
        %1358 = vmatpush.msra.mxu0 0.0
        %1359 = vmatpush.msra.mxu0 0.0
        %1360 = vmatpush.msra.mxu0 0.0
        %1361 = vmatpush.msra.mxu0 0.0
        %1362 = vmatpush.msra.mxu0 0.0
        %1363 = vmatpush.msra.mxu0 0.0
        %1364 = vmatpush.msra.mxu0 0.0
        %1365 = vmatpush.msra.mxu0 %v1071
        %1366 = vmatpush.msra.mxu0 %v1069
        %1367 = vmatpush.msra.mxu0 %v1067
        %1368 = vmatpush.msra.mxu0 %v1065
        %1369 = vmatpush.msra.mxu0 %v1063
        %1370 = vmatpush.msra.mxu0 %v1061
        %1371 = vmatpush.msra.mxu0 %v1059
        %1372 = vmatpush.msra.mxu0 %v1057
        %1373 = vmatmul.f32.gmra.mxu0 %v1335
        %v1374 = vpop.f32.mrf.mxu0
        %v1375 = vadd.f32 0.0, %v1374
        %1376 = vdwg.mxu0
        %v1377 = vadd.f32 %v1323, %v1355
        %v1378 = vadd.f32 %v1324, %v1375
        %v1379 = vxor.u32 %v1377, 2147483648
        %v1380 = vmul.f32 %v1379, 1.442695
        %v1381 = vpow.pop %v1380
        %v1382 = vadd.f32 %v1381, 1.0
        %v1383 = vrcp.pop %v1382
        %v1384 = vmul.f32 %v1382, %v1383
        %v1385 = vsub.f32 1.0, %v1384
        %v1386 = vmul.f32 %v1383, %v1385
        %v1387 = vadd.f32 %v1383, %v1386
        %vm1388 = vweird.f32 %v1382
        %vm1389 = vweird.f32 %v1383
        %vm1390 = vmor %vm1388, %vm1389
        %v1391 = vsel %vm1390, %v1383, %v1387
        %v1392 = vand.u32 2147483647, %v1382
        %vm1393 = vcmp.eq.f32.partialorder %v1392, 8.507059e+37
        %v1394 = vand.u32 %v1382, 2147483648
        %v1395 = vor.u32 1.1754944e-38, %v1394
        %v1396 = vsel %vm1393, %v1395, %v1391
        %v1397 = vmul.f32 1.0, %v1396
        %v1398 = vtanh.pop %v1377
        %v1399 = vxor.u32 %v1378, 2147483648
        %v1400 = vmul.f32 %v1399, 1.442695
        %v1401 = vpow.pop %v1400
        %v1402 = vadd.f32 %v1401, 1.0
        %v1403 = vrcp.pop %v1402
        %v1404 = vmul.f32 %v1402, %v1403
        %v1405 = vsub.f32 1.0, %v1404
        %v1406 = vmul.f32 %v1403, %v1405
        %v1407 = vadd.f32 %v1403, %v1406
        %vm1408 = vweird.f32 %v1402
        %vm1409 = vweird.f32 %v1403
        %vm1410 = vmor %vm1408, %vm1409
        %v1411 = vsel %vm1410, %v1403, %v1407
        %v1412 = vand.u32 2147483647, %v1402
        %vm1413 = vcmp.eq.f32.partialorder %v1412, 8.507059e+37
        %v1414 = vand.u32 %v1402, 2147483648
        %v1415 = vor.u32 1.1754944e-38, %v1414
        %v1416 = vsel %vm1413, %v1415, %v1411
        %v1417 = vmul.f32 1.0, %v1416
        %v1418 = vtanh.pop %v1378
        %v1419 = vmul.f32 %v1397, %v1299
        %1421 = vrot.lane.b32.xlu0 %v1398, 32
        %v1422 = vpop.permute.xlu0 %1421
        %v1424 = vmul.f32 %v1397, %v1422
        %1426 = vrot.lane.b32.xlu0 %v1424, 32
        %v1427 = vpop.permute.xlu0 %1426
        %v1429 = vadd.f32 %v1419, %v1427
        %v1430 = vmul.f32 %v1417, %v1310
        %1432 = vrot.lane.b32.xlu0 %v1418, 32
        %v1433 = vpop.permute.xlu0 %1432
        %v1435 = vmul.f32 %v1417, %v1433
        %1437 = vrot.lane.b32.xlu0 %v1435, 32
        %v1438 = vpop.permute.xlu0 %1437
        %v1440 = vadd.f32 %v1430, %v1438
        %v1441 = vtanh.pop %v1429
        %1443 = vrot.lane.b32.xlu0 %v1441, 32
        %v1444 = vpop.permute.xlu0 %1443
        %v1446 = vmul.f32 %v1397, %v1444
        %v1447 = vtanh.pop %v1440
        %1449 = vrot.lane.b32.xlu0 %v1447, 32
        %v1450 = vpop.permute.xlu0 %1449
        %v1452 = vmul.f32 %v1417, %v1450
        %v1453 = vld [vmem:[#allocation2 + $0x30] sm:$0xff]
        %v1454 = vld [vmem:[#allocation2 + $0x48] sm:$0xff]
        %1456 = vrot.lane.b32.xlu0 %v1446, 64
        %v1457 = vpop.permute.xlu0 %1456
        %1460 = vrot.lane.b32.xlu0 %v1452, 96
        %v1461 = vpop.permute.xlu0 %1460
        %v1463 = vsel %vm881, %v1457, %v1461
        %v1465 = vsel %vm1074, %v1463, 0
        %1467 = vmatpush.msra.mxu0 0.0
        %1468 = vmatpush.msra.mxu0 0.0
        %1469 = vmatpush.msra.mxu0 0.0
        %1470 = vmatpush.msra.mxu0 0.0
        %1471 = vmatpush.msra.mxu0 0.0
        %1472 = vmatpush.msra.mxu0 0.0
        %1473 = vmatpush.msra.mxu0 0.0
        %1474 = vmatpush.msra.mxu0 0.0
        %1475 = vmatpush.msra.mxu0 %v1070
        %1476 = vmatpush.msra.mxu0 %v1068
        %1477 = vmatpush.msra.mxu0 %v1066
        %1478 = vmatpush.msra.mxu0 %v1064
        %1479 = vmatpush.msra.mxu0 %v1062
        %1480 = vmatpush.msra.mxu0 %v1060
        %1481 = vmatpush.msra.mxu0 %v1058
        %1482 = vmatpush.msra.mxu0 %v1056
        %1483 = vmatmul.f32.gmra.mxu0 %v1465
        %v1484 = vpop.f32.mrf.mxu0
        %v1485 = vadd.f32 0.0, %v1484
        %1486 = vdwg.mxu0
        %1487 = vmatpush.msra.mxu0 0.0
        %1488 = vmatpush.msra.mxu0 0.0
        %1489 = vmatpush.msra.mxu0 0.0
        %1490 = vmatpush.msra.mxu0 0.0
        %1491 = vmatpush.msra.mxu0 0.0
        %1492 = vmatpush.msra.mxu0 0.0
        %1493 = vmatpush.msra.mxu0 0.0
        %1494 = vmatpush.msra.mxu0 0.0
        %1495 = vmatpush.msra.mxu0 %v1071
        %1496 = vmatpush.msra.mxu0 %v1069
        %1497 = vmatpush.msra.mxu0 %v1067
        %1498 = vmatpush.msra.mxu0 %v1065
        %1499 = vmatpush.msra.mxu0 %v1063
        %1500 = vmatpush.msra.mxu0 %v1061
        %1501 = vmatpush.msra.mxu0 %v1059
        %1502 = vmatpush.msra.mxu0 %v1057
        %1503 = vmatmul.f32.gmra.mxu0 %v1465
        %v1504 = vpop.f32.mrf.mxu0
        %v1505 = vadd.f32 0.0, %v1504
        %1506 = vdwg.mxu0
        %v1507 = vadd.f32 %v1453, %v1485
        %v1508 = vadd.f32 %v1454, %v1505
        %v1509 = vxor.u32 %v1507, 2147483648
        %v1510 = vmul.f32 %v1509, 1.442695
        %v1511 = vpow.pop %v1510
        %v1512 = vadd.f32 %v1511, 1.0
        %v1513 = vrcp.pop %v1512
        %v1514 = vmul.f32 %v1512, %v1513
        %v1515 = vsub.f32 1.0, %v1514
        %v1516 = vmul.f32 %v1513, %v1515
        %v1517 = vadd.f32 %v1513, %v1516
        %vm1518 = vweird.f32 %v1512
        %vm1519 = vweird.f32 %v1513
        %vm1520 = vmor %vm1518, %vm1519
        %v1521 = vsel %vm1520, %v1513, %v1517
        %v1522 = vand.u32 2147483647, %v1512
        %vm1523 = vcmp.eq.f32.partialorder %v1522, 8.507059e+37
        %v1524 = vand.u32 %v1512, 2147483648
        %v1525 = vor.u32 1.1754944e-38, %v1524
        %v1526 = vsel %vm1523, %v1525, %v1521
        %v1527 = vmul.f32 1.0, %v1526
        %v1528 = vtanh.pop %v1507
        %v1529 = vxor.u32 %v1508, 2147483648
        %v1530 = vmul.f32 %v1529, 1.442695
        %v1531 = vpow.pop %v1530
        %v1532 = vadd.f32 %v1531, 1.0
        %v1533 = vrcp.pop %v1532
        %v1534 = vmul.f32 %v1532, %v1533
        %v1535 = vsub.f32 1.0, %v1534
        %v1536 = vmul.f32 %v1533, %v1535
        %v1537 = vadd.f32 %v1533, %v1536
        %vm1538 = vweird.f32 %v1532
        %vm1539 = vweird.f32 %v1533
        %vm1540 = vmor %vm1538, %vm1539
        %v1541 = vsel %vm1540, %v1533, %v1537
        %v1542 = vand.u32 2147483647, %v1532
        %vm1543 = vcmp.eq.f32.partialorder %v1542, 8.507059e+37
        %v1544 = vand.u32 %v1532, 2147483648
        %v1545 = vor.u32 1.1754944e-38, %v1544
        %v1546 = vsel %vm1543, %v1545, %v1541
        %v1547 = vmul.f32 1.0, %v1546
        %v1548 = vtanh.pop %v1508
        %v1549 = vmul.f32 %v1527, %v1429
        %1551 = vrot.lane.b32.xlu0 %v1528, 32
        %v1552 = vpop.permute.xlu0 %1551
        %v1554 = vmul.f32 %v1527, %v1552
        %1556 = vrot.lane.b32.xlu0 %v1554, 32
        %v1557 = vpop.permute.xlu0 %1556
        %v1559 = vadd.f32 %v1549, %v1557
        %v1560 = vmul.f32 %v1547, %v1440
        %1562 = vrot.lane.b32.xlu0 %v1548, 32
        %v1563 = vpop.permute.xlu0 %1562
        %v1565 = vmul.f32 %v1547, %v1563
        %1567 = vrot.lane.b32.xlu0 %v1565, 32
        %v1568 = vpop.permute.xlu0 %1567
        %v1570 = vadd.f32 %v1560, %v1568
        %v1571 = vtanh.pop %v1559
        %1573 = vrot.lane.b32.xlu0 %v1571, 32
        %v1574 = vpop.permute.xlu0 %1573
        %v1576 = vmul.f32 %v1527, %v1574
        %v1577 = vtanh.pop %v1570
        %1579 = vrot.lane.b32.xlu0 %v1577, 32
        %v1580 = vpop.permute.xlu0 %1579
        %v1582 = vmul.f32 %v1547, %v1580
        %v1583 = vld [vmem:[#allocation2 + $0x40] sm:$0xff]
        %v1584 = vld [vmem:[#allocation2 + $0x38] sm:$0xff]
        %1586 = vrot.lane.b32.xlu0 %v1576, 64
        %v1587 = vpop.permute.xlu0 %1586
        %1590 = vrot.lane.b32.xlu0 %v1582, 96
        %v1591 = vpop.permute.xlu0 %1590
        %v1593 = vsel %vm881, %v1587, %v1591
        %v1595 = vsel %vm1074, %v1593, 0
        %1597 = vmatpush.msra.mxu0 0.0
        %1598 = vmatpush.msra.mxu0 0.0
        %1599 = vmatpush.msra.mxu0 0.0
        %1600 = vmatpush.msra.mxu0 0.0
        %1601 = vmatpush.msra.mxu0 0.0
        %1602 = vmatpush.msra.mxu0 0.0
        %1603 = vmatpush.msra.mxu0 0.0
        %1604 = vmatpush.msra.mxu0 0.0
        %1605 = vmatpush.msra.mxu0 %v1070
        %1606 = vmatpush.msra.mxu0 %v1068
        %1607 = vmatpush.msra.mxu0 %v1066
        %1608 = vmatpush.msra.mxu0 %v1064
        %1609 = vmatpush.msra.mxu0 %v1062
        %1610 = vmatpush.msra.mxu0 %v1060
        %1611 = vmatpush.msra.mxu0 %v1058
        %1612 = vmatpush.msra.mxu0 %v1056
        %1613 = vmatmul.f32.gmra.mxu0 %v1595
        %v1614 = vpop.f32.mrf.mxu0
        %v1615 = vadd.f32 0.0, %v1614
        %1616 = vdwg.mxu0
        %1617 = vmatpush.msra.mxu0 0.0
        %1618 = vmatpush.msra.mxu0 0.0
        %1619 = vmatpush.msra.mxu0 0.0
        %1620 = vmatpush.msra.mxu0 0.0
        %1621 = vmatpush.msra.mxu0 0.0
        %1622 = vmatpush.msra.mxu0 0.0
        %1623 = vmatpush.msra.mxu0 0.0
        %1624 = vmatpush.msra.mxu0 0.0
        %1625 = vmatpush.msra.mxu0 %v1071
        %1626 = vmatpush.msra.mxu0 %v1069
        %1627 = vmatpush.msra.mxu0 %v1067
        %1628 = vmatpush.msra.mxu0 %v1065
        %1629 = vmatpush.msra.mxu0 %v1063
        %1630 = vmatpush.msra.mxu0 %v1061
        %1631 = vmatpush.msra.mxu0 %v1059
        %1632 = vmatpush.msra.mxu0 %v1057
        %1633 = vmatmul.f32.gmra.mxu0 %v1595
        %v1634 = vpop.f32.mrf.mxu0
        %v1635 = vadd.f32 0.0, %v1634
        %1636 = vdwg.mxu0
        %v1637 = vadd.f32 %v1583, %v1615
        %v1638 = vadd.f32 %v1584, %v1635
        %v1639 = vxor.u32 %v1637, 2147483648
        %v1640 = vmul.f32 %v1639, 1.442695
        %v1641 = vpow.pop %v1640
        %v1642 = vadd.f32 %v1641, 1.0
        %v1643 = vrcp.pop %v1642
        %v1644 = vmul.f32 %v1642, %v1643
        %v1645 = vsub.f32 1.0, %v1644
        %v1646 = vmul.f32 %v1643, %v1645
        %v1647 = vadd.f32 %v1643, %v1646
        %vm1648 = vweird.f32 %v1642
        %vm1649 = vweird.f32 %v1643
        %vm1650 = vmor %vm1648, %vm1649
        %v1651 = vsel %vm1650, %v1643, %v1647
        %v1652 = vand.u32 2147483647, %v1642
        %vm1653 = vcmp.eq.f32.partialorder %v1652, 8.507059e+37
        %v1654 = vand.u32 %v1642, 2147483648
        %v1655 = vor.u32 1.1754944e-38, %v1654
        %v1656 = vsel %vm1653, %v1655, %v1651
        %v1657 = vmul.f32 1.0, %v1656
        %v1658 = vtanh.pop %v1637
        %v1659 = vxor.u32 %v1638, 2147483648
        %v1660 = vmul.f32 %v1659, 1.442695
        %v1661 = vpow.pop %v1660
        %v1662 = vadd.f32 %v1661, 1.0
        %v1663 = vrcp.pop %v1662
        %v1664 = vmul.f32 %v1662, %v1663
        %v1665 = vsub.f32 1.0, %v1664
        %v1666 = vmul.f32 %v1663, %v1665
        %v1667 = vadd.f32 %v1663, %v1666
        %vm1668 = vweird.f32 %v1662
        %vm1669 = vweird.f32 %v1663
        %vm1670 = vmor %vm1668, %vm1669
        %v1671 = vsel %vm1670, %v1663, %v1667
        %v1672 = vand.u32 2147483647, %v1662
        %vm1673 = vcmp.eq.f32.partialorder %v1672, 8.507059e+37
        %v1674 = vand.u32 %v1662, 2147483648
        %v1675 = vor.u32 1.1754944e-38, %v1674
        %v1676 = vsel %vm1673, %v1675, %v1671
        %v1677 = vmul.f32 1.0, %v1676
        %v1678 = vtanh.pop %v1638
        %v1679 = vmul.f32 %v1657, %v1559
        %1681 = vrot.lane.b32.xlu0 %v1658, 32
        %v1682 = vpop.permute.xlu0 %1681
        %v1684 = vmul.f32 %v1657, %v1682
        %1686 = vrot.lane.b32.xlu0 %v1684, 32
        %v1687 = vpop.permute.xlu0 %1686
        %v1689 = vadd.f32 %v1679, %v1687
        %v1690 = vmul.f32 %v1677, %v1570
        %1692 = vrot.lane.b32.xlu0 %v1678, 32
        %v1693 = vpop.permute.xlu0 %1692
        %v1695 = vmul.f32 %v1677, %v1693
        %1697 = vrot.lane.b32.xlu0 %v1695, 32
        %v1698 = vpop.permute.xlu0 %1697
        %v1700 = vadd.f32 %v1690, %v1698
        %v1701 = vtanh.pop %v1689
        %1703 = vrot.lane.b32.xlu0 %v1701, 32
        %v1704 = vpop.permute.xlu0 %1703
        %v1706 = vmul.f32 %v1657, %v1704
        %v1707 = vtanh.pop %v1700
        %1709 = vrot.lane.b32.xlu0 %v1707, 32
        %v1710 = vpop.permute.xlu0 %1709
        %v1712 = vmul.f32 %v1677, %v1710
        %v1713 = vld [vmem:[#allocation2 + $0x50] sm:$0xff]
        %v1714 = vld [vmem:[#allocation2 + $0x28] sm:$0xff]
        %1716 = vrot.lane.b32.xlu0 %v1706, 64
        %v1717 = vpop.permute.xlu0 %1716
        %1720 = vrot.lane.b32.xlu0 %v1712, 96
        %v1721 = vpop.permute.xlu0 %1720
        %v1723 = vsel %vm881, %v1717, %v1721
        %v1725 = vsel %vm1074, %v1723, 0
        %1727 = vmatpush.msra.mxu0 0.0
        %1728 = vmatpush.msra.mxu0 0.0
        %1729 = vmatpush.msra.mxu0 0.0
        %1730 = vmatpush.msra.mxu0 0.0
        %1731 = vmatpush.msra.mxu0 0.0
        %1732 = vmatpush.msra.mxu0 0.0
        %1733 = vmatpush.msra.mxu0 0.0
        %1734 = vmatpush.msra.mxu0 0.0
        %1735 = vmatpush.msra.mxu0 %v1070
        %1736 = vmatpush.msra.mxu0 %v1068
        %1737 = vmatpush.msra.mxu0 %v1066
        %1738 = vmatpush.msra.mxu0 %v1064
        %1739 = vmatpush.msra.mxu0 %v1062
        %1740 = vmatpush.msra.mxu0 %v1060
        %1741 = vmatpush.msra.mxu0 %v1058
        %1742 = vmatpush.msra.mxu0 %v1056
        %1743 = vmatmul.f32.gmra.mxu0 %v1725
        %v1744 = vpop.f32.mrf.mxu0
        %v1745 = vadd.f32 0.0, %v1744
        %1746 = vdwg.mxu0
        %1747 = vmatpush.msra.mxu0 0.0
        %1748 = vmatpush.msra.mxu0 0.0
        %1749 = vmatpush.msra.mxu0 0.0
        %1750 = vmatpush.msra.mxu0 0.0
        %1751 = vmatpush.msra.mxu0 0.0
        %1752 = vmatpush.msra.mxu0 0.0
        %1753 = vmatpush.msra.mxu0 0.0
        %1754 = vmatpush.msra.mxu0 0.0
        %1755 = vmatpush.msra.mxu0 %v1071
        %1756 = vmatpush.msra.mxu0 %v1069
        %1757 = vmatpush.msra.mxu0 %v1067
        %1758 = vmatpush.msra.mxu0 %v1065
        %1759 = vmatpush.msra.mxu0 %v1063
        %1760 = vmatpush.msra.mxu0 %v1061
        %1761 = vmatpush.msra.mxu0 %v1059
        %1762 = vmatpush.msra.mxu0 %v1057
        %1763 = vmatmul.f32.gmra.mxu0 %v1725
        %v1764 = vpop.f32.mrf.mxu0
        %v1765 = vadd.f32 0.0, %v1764
        %1766 = vdwg.mxu0
        %v1767 = vadd.f32 %v1713, %v1745
        %v1768 = vadd.f32 %v1714, %v1765
        %v1769 = vxor.u32 %v1767, 2147483648
        %v1770 = vmul.f32 %v1769, 1.442695
        %v1771 = vpow.pop %v1770
        %v1772 = vadd.f32 %v1771, 1.0
        %v1773 = vrcp.pop %v1772
        %v1774 = vmul.f32 %v1772, %v1773
        %v1775 = vsub.f32 1.0, %v1774
        %v1776 = vmul.f32 %v1773, %v1775
        %v1777 = vadd.f32 %v1773, %v1776
        %vm1778 = vweird.f32 %v1772
        %vm1779 = vweird.f32 %v1773
        %vm1780 = vmor %vm1778, %vm1779
        %v1781 = vsel %vm1780, %v1773, %v1777
        %v1782 = vand.u32 2147483647, %v1772
        %vm1783 = vcmp.eq.f32.partialorder %v1782, 8.507059e+37
        %v1784 = vand.u32 %v1772, 2147483648
        %v1785 = vor.u32 1.1754944e-38, %v1784
        %v1786 = vsel %vm1783, %v1785, %v1781
        %v1787 = vmul.f32 1.0, %v1786
        %v1788 = vtanh.pop %v1767
        %v1789 = vxor.u32 %v1768, 2147483648
        %v1790 = vmul.f32 %v1789, 1.442695
        %v1791 = vpow.pop %v1790
        %v1792 = vadd.f32 %v1791, 1.0
        %v1793 = vrcp.pop %v1792
        %v1794 = vmul.f32 %v1792, %v1793
        %v1795 = vsub.f32 1.0, %v1794
        %v1796 = vmul.f32 %v1793, %v1795
        %v1797 = vadd.f32 %v1793, %v1796
        %vm1798 = vweird.f32 %v1792
        %vm1799 = vweird.f32 %v1793
        %vm1800 = vmor %vm1798, %vm1799
        %v1801 = vsel %vm1800, %v1793, %v1797
        %v1802 = vand.u32 2147483647, %v1792
        %vm1803 = vcmp.eq.f32.partialorder %v1802, 8.507059e+37
        %v1804 = vand.u32 %v1792, 2147483648
        %v1805 = vor.u32 1.1754944e-38, %v1804
        %v1806 = vsel %vm1803, %v1805, %v1801
        %v1807 = vmul.f32 1.0, %v1806
        %v1808 = vtanh.pop %v1768
        %v1809 = vmul.f32 %v1787, %v1689
        %1811 = vrot.lane.b32.xlu0 %v1788, 32
        %v1812 = vpop.permute.xlu0 %1811
        %v1814 = vmul.f32 %v1787, %v1812
        %1816 = vrot.lane.b32.xlu0 %v1814, 32
        %v1817 = vpop.permute.xlu0 %1816
        %v1819 = vadd.f32 %v1809, %v1817
        %v1820 = vmul.f32 %v1807, %v1700
        %1822 = vrot.lane.b32.xlu0 %v1808, 32
        %v1823 = vpop.permute.xlu0 %1822
        %v1825 = vmul.f32 %v1807, %v1823
        %1827 = vrot.lane.b32.xlu0 %v1825, 32
        %v1828 = vpop.permute.xlu0 %1827
        %v1830 = vadd.f32 %v1820, %v1828
        %v1831 = vtanh.pop %v1819
        %1833 = vrot.lane.b32.xlu0 %v1831, 32
        %v1834 = vpop.permute.xlu0 %1833
        %v1836 = vmul.f32 %v1787, %v1834
        %v1837 = vtanh.pop %v1830
        %1839 = vrot.lane.b32.xlu0 %v1837, 32
        %v1840 = vpop.permute.xlu0 %1839
        %v1842 = vmul.f32 %v1807, %v1840
        %v1843 = vld [vmem:[#allocation2 + $0x60] sm:$0xff]
        %v1844 = vld [vmem:[#allocation2 + $0x18] sm:$0xff]
        %1846 = vrot.lane.b32.xlu0 %v1836, 64
        %v1847 = vpop.permute.xlu0 %1846
        %1850 = vrot.lane.b32.xlu0 %v1842, 96
        %v1851 = vpop.permute.xlu0 %1850
        %v1853 = vsel %vm881, %v1847, %v1851
        %v1855 = vsel %vm1074, %v1853, 0
        %1857 = vmatpush.msra.mxu0 0.0
        %1858 = vmatpush.msra.mxu0 0.0
        %1859 = vmatpush.msra.mxu0 0.0
        %1860 = vmatpush.msra.mxu0 0.0
        %1861 = vmatpush.msra.mxu0 0.0
        %1862 = vmatpush.msra.mxu0 0.0
        %1863 = vmatpush.msra.mxu0 0.0
        %1864 = vmatpush.msra.mxu0 0.0
        %1865 = vmatpush.msra.mxu0 %v1070
        %1866 = vmatpush.msra.mxu0 %v1068
        %1867 = vmatpush.msra.mxu0 %v1066
        %1868 = vmatpush.msra.mxu0 %v1064
        %1869 = vmatpush.msra.mxu0 %v1062
        %1870 = vmatpush.msra.mxu0 %v1060
        %1871 = vmatpush.msra.mxu0 %v1058
        %1872 = vmatpush.msra.mxu0 %v1056
        %1873 = vmatmul.f32.gmra.mxu0 %v1855
        %v1874 = vpop.f32.mrf.mxu0
        %v1875 = vadd.f32 0.0, %v1874
        %1876 = vdwg.mxu0
        %1877 = vmatpush.msra.mxu0 0.0
        %1878 = vmatpush.msra.mxu0 0.0
        %1879 = vmatpush.msra.mxu0 0.0
        %1880 = vmatpush.msra.mxu0 0.0
        %1881 = vmatpush.msra.mxu0 0.0
        %1882 = vmatpush.msra.mxu0 0.0
        %1883 = vmatpush.msra.mxu0 0.0
        %1884 = vmatpush.msra.mxu0 0.0
        %1885 = vmatpush.msra.mxu0 %v1071
        %1886 = vmatpush.msra.mxu0 %v1069
        %1887 = vmatpush.msra.mxu0 %v1067
        %1888 = vmatpush.msra.mxu0 %v1065
        %1889 = vmatpush.msra.mxu0 %v1063
        %1890 = vmatpush.msra.mxu0 %v1061
        %1891 = vmatpush.msra.mxu0 %v1059
        %1892 = vmatpush.msra.mxu0 %v1057
        %1893 = vmatmul.f32.gmra.mxu0 %v1855
        %v1894 = vpop.f32.mrf.mxu0
        %v1895 = vadd.f32 0.0, %v1894
        %1896 = vdwg.mxu0
        %v1897 = vadd.f32 %v1843, %v1875
        %v1898 = vadd.f32 %v1844, %v1895
        %v1899 = vxor.u32 %v1897, 2147483648
        %v1900 = vmul.f32 %v1899, 1.442695
        %v1901 = vpow.pop %v1900
        %v1902 = vadd.f32 %v1901, 1.0
        %v1903 = vrcp.pop %v1902
        %v1904 = vmul.f32 %v1902, %v1903
        %v1905 = vsub.f32 1.0, %v1904
        %v1906 = vmul.f32 %v1903, %v1905
        %v1907 = vadd.f32 %v1903, %v1906
        %vm1908 = vweird.f32 %v1902
        %vm1909 = vweird.f32 %v1903
        %vm1910 = vmor %vm1908, %vm1909
        %v1911 = vsel %vm1910, %v1903, %v1907
        %v1912 = vand.u32 2147483647, %v1902
        %vm1913 = vcmp.eq.f32.partialorder %v1912, 8.507059e+37
        %v1914 = vand.u32 %v1902, 2147483648
        %v1915 = vor.u32 1.1754944e-38, %v1914
        %v1916 = vsel %vm1913, %v1915, %v1911
        %v1917 = vmul.f32 1.0, %v1916
        %v1918 = vtanh.pop %v1897
        %v1919 = vxor.u32 %v1898, 2147483648
        %v1920 = vmul.f32 %v1919, 1.442695
        %v1921 = vpow.pop %v1920
        %v1922 = vadd.f32 %v1921, 1.0
        %v1923 = vrcp.pop %v1922
        %v1924 = vmul.f32 %v1922, %v1923
        %v1925 = vsub.f32 1.0, %v1924
        %v1926 = vmul.f32 %v1923, %v1925
        %v1927 = vadd.f32 %v1923, %v1926
        %vm1928 = vweird.f32 %v1922
        %vm1929 = vweird.f32 %v1923
        %vm1930 = vmor %vm1928, %vm1929
        %v1931 = vsel %vm1930, %v1923, %v1927
        %v1932 = vand.u32 2147483647, %v1922
        %vm1933 = vcmp.eq.f32.partialorder %v1932, 8.507059e+37
        %v1934 = vand.u32 %v1922, 2147483648
        %v1935 = vor.u32 1.1754944e-38, %v1934
        %v1936 = vsel %vm1933, %v1935, %v1931
        %v1937 = vmul.f32 1.0, %v1936
        %v1938 = vtanh.pop %v1898
        %v1939 = vmul.f32 %v1917, %v1819
        %1941 = vrot.lane.b32.xlu0 %v1918, 32
        %v1942 = vpop.permute.xlu0 %1941
        %v1944 = vmul.f32 %v1917, %v1942
        %1946 = vrot.lane.b32.xlu0 %v1944, 32
        %v1947 = vpop.permute.xlu0 %1946
        %v1949 = vadd.f32 %v1939, %v1947
        %v1950 = vmul.f32 %v1937, %v1830
        %1952 = vrot.lane.b32.xlu0 %v1938, 32
        %v1953 = vpop.permute.xlu0 %1952
        %v1955 = vmul.f32 %v1937, %v1953
        %1957 = vrot.lane.b32.xlu0 %v1955, 32
        %v1958 = vpop.permute.xlu0 %1957
        %v1960 = vadd.f32 %v1950, %v1958
        %v1961 = vtanh.pop %v1949
        %1963 = vrot.lane.b32.xlu0 %v1961, 32
        %v1964 = vpop.permute.xlu0 %1963
        %v1966 = vmul.f32 %v1917, %v1964
        %v1967 = vtanh.pop %v1960
        %1969 = vrot.lane.b32.xlu0 %v1967, 32
        %v1970 = vpop.permute.xlu0 %1969
        %v1972 = vmul.f32 %v1937, %v1970
        %v1973 = vld [vmem:[#allocation2 + $0x70] sm:$0xff]
        %v1974 = vld [vmem:[#allocation2 + $0x8] sm:$0xff]
        %1976 = vrot.lane.b32.xlu0 %v1966, 64
        %v1977 = vpop.permute.xlu0 %1976
        %1980 = vrot.lane.b32.xlu0 %v1972, 96
        %v1981 = vpop.permute.xlu0 %1980
        %v1983 = vsel %vm881, %v1977, %v1981
        %v1985 = vsel %vm1074, %v1983, 0
        %1987 = vmatpush.msra.mxu0 0.0
        %1988 = vmatpush.msra.mxu0 0.0
        %1989 = vmatpush.msra.mxu0 0.0
        %1990 = vmatpush.msra.mxu0 0.0
        %1991 = vmatpush.msra.mxu0 0.0
        %1992 = vmatpush.msra.mxu0 0.0
        %1993 = vmatpush.msra.mxu0 0.0
        %1994 = vmatpush.msra.mxu0 0.0
        %1995 = vmatpush.msra.mxu0 %v1070
        %1996 = vmatpush.msra.mxu0 %v1068
        %1997 = vmatpush.msra.mxu0 %v1066
        %1998 = vmatpush.msra.mxu0 %v1064
        %1999 = vmatpush.msra.mxu0 %v1062
        %2000 = vmatpush.msra.mxu0 %v1060
        %2001 = vmatpush.msra.mxu0 %v1058
        %2002 = vmatpush.msra.mxu0 %v1056
        %2003 = vmatmul.f32.gmra.mxu0 %v1985
        %v2004 = vpop.f32.mrf.mxu0
        %v2005 = vadd.f32 0.0, %v2004
        %2006 = vdwg.mxu0
        %2007 = vmatpush.msra.mxu0 0.0
        %2008 = vmatpush.msra.mxu0 0.0
        %2009 = vmatpush.msra.mxu0 0.0
        %2010 = vmatpush.msra.mxu0 0.0
        %2011 = vmatpush.msra.mxu0 0.0
        %2012 = vmatpush.msra.mxu0 0.0
        %2013 = vmatpush.msra.mxu0 0.0
        %2014 = vmatpush.msra.mxu0 0.0
        %2015 = vmatpush.msra.mxu0 %v1071
        %2016 = vmatpush.msra.mxu0 %v1069
        %2017 = vmatpush.msra.mxu0 %v1067
        %2018 = vmatpush.msra.mxu0 %v1065
        %2019 = vmatpush.msra.mxu0 %v1063
        %2020 = vmatpush.msra.mxu0 %v1061
        %2021 = vmatpush.msra.mxu0 %v1059
        %2022 = vmatpush.msra.mxu0 %v1057
        %2023 = vmatmul.f32.gmra.mxu0 %v1985
        %v2024 = vpop.f32.mrf.mxu0
        %v2025 = vadd.f32 0.0, %v2024
        %2026 = vdwg.mxu0
        %v2027 = vadd.f32 %v1973, %v2005
        %v2028 = vadd.f32 %v1974, %v2025
        %v2029 = vxor.u32 %v2027, 2147483648
        %v2030 = vmul.f32 %v2029, 1.442695
        %v2031 = vpow.pop %v2030
        %v2032 = vadd.f32 %v2031, 1.0
        %v2033 = vrcp.pop %v2032
        %v2034 = vmul.f32 %v2032, %v2033
        %v2035 = vsub.f32 1.0, %v2034
        %v2036 = vmul.f32 %v2033, %v2035
        %v2037 = vadd.f32 %v2033, %v2036
        %vm2038 = vweird.f32 %v2032
        %vm2039 = vweird.f32 %v2033
        %vm2040 = vmor %vm2038, %vm2039
        %v2041 = vsel %vm2040, %v2033, %v2037
        %v2042 = vand.u32 2147483647, %v2032
        %vm2043 = vcmp.eq.f32.partialorder %v2042, 8.507059e+37
        %v2044 = vand.u32 %v2032, 2147483648
        %v2045 = vor.u32 1.1754944e-38, %v2044
        %v2046 = vsel %vm2043, %v2045, %v2041
        %v2047 = vmul.f32 1.0, %v2046
        %v2048 = vtanh.pop %v2027
        %v2049 = vxor.u32 %v2028, 2147483648
        %v2050 = vmul.f32 %v2049, 1.442695
        %v2051 = vpow.pop %v2050
        %v2052 = vadd.f32 %v2051, 1.0
        %v2053 = vrcp.pop %v2052
        %v2054 = vmul.f32 %v2052, %v2053
        %v2055 = vsub.f32 1.0, %v2054
        %v2056 = vmul.f32 %v2053, %v2055
        %v2057 = vadd.f32 %v2053, %v2056
        %vm2058 = vweird.f32 %v2052
        %vm2059 = vweird.f32 %v2053
        %vm2060 = vmor %vm2058, %vm2059
        %v2061 = vsel %vm2060, %v2053, %v2057
        %v2062 = vand.u32 2147483647, %v2052
        %vm2063 = vcmp.eq.f32.partialorder %v2062, 8.507059e+37
        %v2064 = vand.u32 %v2052, 2147483648
        %v2065 = vor.u32 1.1754944e-38, %v2064
        %v2066 = vsel %vm2063, %v2065, %v2061
        %v2067 = vmul.f32 1.0, %v2066
        %v2068 = vtanh.pop %v2028
        %v2069 = vmul.f32 %v2047, %v1949
        %2071 = vrot.lane.b32.xlu0 %v2048, 32
        %v2072 = vpop.permute.xlu0 %2071
        %v2074 = vmul.f32 %v2047, %v2072
        %2076 = vrot.lane.b32.xlu0 %v2074, 32
        %v2077 = vpop.permute.xlu0 %2076
        %v2079 = vadd.f32 %v2069, %v2077
        %v2080 = vmul.f32 %v2067, %v1960
        %2082 = vrot.lane.b32.xlu0 %v2068, 32
        %v2083 = vpop.permute.xlu0 %2082
        %v2085 = vmul.f32 %v2067, %v2083
        %2087 = vrot.lane.b32.xlu0 %v2085, 32
        %v2088 = vpop.permute.xlu0 %2087
        %v2090 = vadd.f32 %v2080, %v2088
        %v2091 = vtanh.pop %v2079
        %2093 = vrot.lane.b32.xlu0 %v2091, 32
        %v2094 = vpop.permute.xlu0 %2093
        %v2096 = vmul.f32 %v2047, %v2094
        %v2097 = vtanh.pop %v2090
        %2099 = vrot.lane.b32.xlu0 %v2097, 32
        %v2100 = vpop.permute.xlu0 %2099
        %v2102 = vmul.f32 %v2067, %v2100
        %2104 = vrot.lane.b32.xlu0 %v2102, 96
        %v2105 = vpop.permute.xlu0 %2104
        %v2107 = vsel %vm881, %v1197, %v2105
        %v2108 = vsel %vm881, %v1327, %v1981
        %v2109 = vsel %vm881, %v1457, %v1851
        %v2110 = vsel %vm881, %v1587, %v1721
        %v2111 = vsel %vm881, %v1717, %v1591
        %v2112 = vsel %vm881, %v1847, %v1461
        %v2113 = vsel %vm881, %v1977, %v1331
        %2115 = vrot.lane.b32.xlu0 %v2096, 64
        %v2116 = vpop.permute.xlu0 %2115
        %v2118 = vsel %vm881, %v2116, %v1201
        %v2119 = vld [vmem:[%s6] sm:$0xff]
        %v2120 = vld [vmem:[%s6 + $0x8] sm:$0xff]
        %v2121 = vld [vmem:[%s6 + $0x10] sm:$0xff]
        %v2122 = vld [vmem:[%s6 + $0x18] sm:$0xff]
        %v2123 = vld [vmem:[%s6 + $0x20] sm:$0xff]
        %v2124 = vld [vmem:[%s6 + $0x28] sm:$0xff]
        %v2125 = vld [vmem:[%s6 + $0x30] sm:$0xff]
        %v2126 = vld [vmem:[%s6 + $0x38] sm:$0xff]
        %v2127 = vld [vmem:[%s6 + $0x40] sm:$0xff]
        %v2128 = vld [vmem:[%s6 + $0x48] sm:$0xff]
        %v2129 = vld [vmem:[%s6 + $0x50] sm:$0xff]
        %v2130 = vld [vmem:[%s6 + $0x58] sm:$0xff]
        %v2131 = vld [vmem:[%s6 + $0x60] sm:$0xff]
        %v2132 = vld [vmem:[%s6 + $0x68] sm:$0xff]
        %v2133 = vld [vmem:[%s6 + $0x70] sm:$0xff]
        %v2134 = vld [vmem:[%s6 + $0x78] sm:$0xff]
        %v2135 = vld [vmem:[%s8] sm:$0x3]
        %v2137 = vperm.slane %v2135, 0
        %v2138 = vperm.slane %v2135, 1
        %v2142 = vsel %vm1074, %v2107, 0
        %v2145 = vsel %vm1074, %v2108, 0
        %v2148 = vsel %vm1074, %v2109, 0
        %v2151 = vsel %vm1074, %v2110, 0
        %v2154 = vsel %vm1074, %v2111, 0
        %v2157 = vsel %vm1074, %v2112, 0
        %v2160 = vsel %vm1074, %v2113, 0
        %v2163 = vsel %vm1074, %v2118, 0
        %2165 = vmatpush.msra.mxu0 0.0
        %2166 = vmatpush.msra.mxu0 0.0
        %2167 = vmatpush.msra.mxu0 0.0
        %2168 = vmatpush.msra.mxu0 0.0
        %2169 = vmatpush.msra.mxu0 0.0
        %2170 = vmatpush.msra.mxu0 0.0
        %2171 = vmatpush.msra.mxu0 0.0
        %2172 = vmatpush.msra.mxu0 0.0
        %2173 = vmatpush.msra.mxu0 %v2133
        %2174 = vmatpush.msra.mxu0 %v2131
        %2175 = vmatpush.msra.mxu0 %v2129
        %2176 = vmatpush.msra.mxu0 %v2127
        %2177 = vmatpush.msra.mxu0 %v2125
        %2178 = vmatpush.msra.mxu0 %v2123
        %2179 = vmatpush.msra.mxu0 %v2121
        %2180 = vmatpush.msra.mxu0 %v2119
        %2181 = vmatmul.f32.gmra.mxu0 %v2142
        %v2182 = vpop.f32.mrf.mxu0
        %v2183 = vadd.f32 %v2137, %v2182
        %2184 = vmatmul.f32.gmra.mxu0 %v2145
        %v2185 = vpop.f32.mrf.mxu0
        %v2186 = vadd.f32 %v2137, %v2185
        %2187 = vmatmul.f32.gmra.mxu0 %v2148
        %v2188 = vpop.f32.mrf.mxu0
        %v2189 = vadd.f32 %v2137, %v2188
        %2190 = vmatmul.f32.gmra.mxu0 %v2151
        %v2191 = vpop.f32.mrf.mxu0
        %v2192 = vadd.f32 %v2137, %v2191
        %2193 = vmatmul.f32.gmra.mxu0 %v2154
        %v2194 = vpop.f32.mrf.mxu0
        %v2195 = vadd.f32 %v2137, %v2194
        %2196 = vmatmul.f32.gmra.mxu0 %v2157
        %v2197 = vpop.f32.mrf.mxu0
        %v2198 = vadd.f32 %v2137, %v2197
        %2199 = vmatmul.f32.gmra.mxu0 %v2160
        %v2200 = vpop.f32.mrf.mxu0
        %v2201 = vadd.f32 %v2137, %v2200
        %2202 = vmatmul.f32.gmra.mxu0 %v2163
        %v2203 = vpop.f32.mrf.mxu0
        %v2204 = vadd.f32 %v2137, %v2203
        %2205 = vdwg.mxu0
        %2206 = vmatpush.msra.mxu0 0.0
        %2207 = vmatpush.msra.mxu0 0.0
        %2208 = vmatpush.msra.mxu0 0.0
        %2209 = vmatpush.msra.mxu0 0.0
        %2210 = vmatpush.msra.mxu0 0.0
        %2211 = vmatpush.msra.mxu0 0.0
        %2212 = vmatpush.msra.mxu0 0.0
        %2213 = vmatpush.msra.mxu0 0.0
        %2214 = vmatpush.msra.mxu0 %v2134
        %2215 = vmatpush.msra.mxu0 %v2132
        %2216 = vmatpush.msra.mxu0 %v2130
        %2217 = vmatpush.msra.mxu0 %v2128
        %2218 = vmatpush.msra.mxu0 %v2126
        %2219 = vmatpush.msra.mxu0 %v2124
        %2220 = vmatpush.msra.mxu0 %v2122
        %2221 = vmatpush.msra.mxu0 %v2120
        %2222 = vmatmul.f32.gmra.mxu0 %v2142
        %v2223 = vpop.f32.mrf.mxu0
        %v2224 = vadd.f32 %v2138, %v2223
        %2225 = vmatmul.f32.gmra.mxu0 %v2145
        %v2226 = vpop.f32.mrf.mxu0
        %v2227 = vadd.f32 %v2138, %v2226
        %2228 = vmatmul.f32.gmra.mxu0 %v2148
        %v2229 = vpop.f32.mrf.mxu0
        %v2230 = vadd.f32 %v2138, %v2229
        %2231 = vmatmul.f32.gmra.mxu0 %v2151
        %v2232 = vpop.f32.mrf.mxu0
        %v2233 = vadd.f32 %v2138, %v2232
        %2234 = vmatmul.f32.gmra.mxu0 %v2154
        %v2235 = vpop.f32.mrf.mxu0
        %v2236 = vadd.f32 %v2138, %v2235
        %2237 = vmatmul.f32.gmra.mxu0 %v2157
        %v2238 = vpop.f32.mrf.mxu0
        %v2239 = vadd.f32 %v2138, %v2238
        %2240 = vmatmul.f32.gmra.mxu0 %v2160
        %v2241 = vpop.f32.mrf.mxu0
        %v2242 = vadd.f32 %v2138, %v2241
        %2243 = vmatmul.f32.gmra.mxu0 %v2163
        %v2244 = vpop.f32.mrf.mxu0
        %v2245 = vadd.f32 %v2138, %v2244
        %2246 = vdwg.mxu0
        %2247 = vst [vmem:[#allocation2] sm:$0xff] %v2183
        %2248 = vst [vmem:[#allocation2 + $0x8] sm:$0xff] %v2224
        %2249 = vst [vmem:[#allocation2 + $0x10] sm:$0xff] %v2186
        %2250 = vst [vmem:[#allocation2 + $0x18] sm:$0xff] %v2227
        %2251 = vst [vmem:[#allocation2 + $0x20] sm:$0xff] %v2189
        %2252 = vst [vmem:[#allocation2 + $0x28] sm:$0xff] %v2230
        %2253 = vst [vmem:[#allocation2 + $0x30] sm:$0xff] %v2192
        %2254 = vst [vmem:[#allocation2 + $0x38] sm:$0xff] %v2233
        %2255 = vst [vmem:[#allocation2 + $0x40] sm:$0xff] %v2195
        %2256 = vst [vmem:[#allocation2 + $0x48] sm:$0xff] %v2236
        %2257 = vst [vmem:[#allocation2 + $0x50] sm:$0xff] %v2198
        %2258 = vst [vmem:[#allocation2 + $0x58] sm:$0xff] %v2239
        %2259 = vst [vmem:[#allocation2 + $0x60] sm:$0xff] %v2201
        %2260 = vst [vmem:[#allocation2 + $0x68] sm:$0xff] %v2242
        %2261 = vst [vmem:[#allocation2 + $0x70] sm:$0xff] %v2204
        %2262 = vst [vmem:[#allocation2 + $0x78] sm:$0xff] %v2245
        %v2263 = vld [vmem:[%s7] sm:$0xff]
        %v2264 = vld [vmem:[%s7 + $0x8] sm:$0xff]
        %v2265 = vld [vmem:[%s7 + $0x10] sm:$0xff]
        %v2266 = vld [vmem:[%s7 + $0x18] sm:$0xff]
        %v2267 = vld [vmem:[%s7 + $0x20] sm:$0xff]
        %v2268 = vld [vmem:[%s7 + $0x28] sm:$0xff]
        %v2269 = vld [vmem:[%s7 + $0x30] sm:$0xff]
        %v2270 = vld [vmem:[%s7 + $0x38] sm:$0xff]
        %v2271 = vld [vmem:[%s7 + $0x40] sm:$0xff]
        %v2272 = vld [vmem:[%s7 + $0x48] sm:$0xff]
        %v2273 = vld [vmem:[%s7 + $0x50] sm:$0xff]
        %v2274 = vld [vmem:[%s7 + $0x58] sm:$0xff]
        %v2275 = vld [vmem:[%s7 + $0x60] sm:$0xff]
        %v2276 = vld [vmem:[%s7 + $0x68] sm:$0xff]
        %v2277 = vld [vmem:[%s7 + $0x70] sm:$0xff]
        %v2278 = vld [vmem:[%s7 + $0x78] sm:$0xff]
        %v2279 = vld [vmem:[#allocation2] sm:$0xff]
        %v2280 = vld [vmem:[#allocation2 + $0x78] sm:$0xff]
        %2281 = vmatpush.msra.mxu0 0.0
        %2282 = vmatpush.msra.mxu0 0.0
        %2283 = vmatpush.msra.mxu0 0.0
        %2284 = vmatpush.msra.mxu0 0.0
        %2285 = vmatpush.msra.mxu0 0.0
        %2286 = vmatpush.msra.mxu0 0.0
        %2287 = vmatpush.msra.mxu0 0.0
        %2288 = vmatpush.msra.mxu0 0.0
        %2289 = vmatpush.msra.mxu0 %v2277
        %2290 = vmatpush.msra.mxu0 %v2275
        %2291 = vmatpush.msra.mxu0 %v2273
        %2292 = vmatpush.msra.mxu0 %v2271
        %2293 = vmatpush.msra.mxu0 %v2269
        %2294 = vmatpush.msra.mxu0 %v2267
        %2295 = vmatpush.msra.mxu0 %v2265
        %2296 = vmatpush.msra.mxu0 %v2263
        %2297 = vmatmul.f32.gmra.mxu0 %v1075
        %v2298 = vpop.f32.mrf.mxu0
        %v2299 = vadd.f32 0.0, %v2298
        %2300 = vdwg.mxu0
        %2301 = vmatpush.msra.mxu0 0.0
        %2302 = vmatpush.msra.mxu0 0.0
        %2303 = vmatpush.msra.mxu0 0.0
        %2304 = vmatpush.msra.mxu0 0.0
        %2305 = vmatpush.msra.mxu0 0.0
        %2306 = vmatpush.msra.mxu0 0.0
        %2307 = vmatpush.msra.mxu0 0.0
        %2308 = vmatpush.msra.mxu0 0.0
        %2309 = vmatpush.msra.mxu0 %v2278
        %2310 = vmatpush.msra.mxu0 %v2276
        %2311 = vmatpush.msra.mxu0 %v2274
        %2312 = vmatpush.msra.mxu0 %v2272
        %2313 = vmatpush.msra.mxu0 %v2270
        %2314 = vmatpush.msra.mxu0 %v2268
        %2315 = vmatpush.msra.mxu0 %v2266
        %2316 = vmatpush.msra.mxu0 %v2264
        %2317 = vmatmul.f32.gmra.mxu0 %v1075
        %v2318 = vpop.f32.mrf.mxu0
        %v2319 = vadd.f32 0.0, %v2318
        %2320 = vdwg.mxu0
        %v2321 = vadd.f32 %v2279, %v2299
        %v2322 = vadd.f32 %v2280, %v2319
        %v2323 = vxor.u32 %v2321, 2147483648
        %v2324 = vmul.f32 %v2323, 1.442695
        %v2325 = vpow.pop %v2324
        %v2326 = vadd.f32 %v2325, 1.0
        %v2327 = vrcp.pop %v2326
        %v2328 = vmul.f32 %v2326, %v2327
        %v2329 = vsub.f32 1.0, %v2328
        %v2330 = vmul.f32 %v2327, %v2329
        %v2331 = vadd.f32 %v2327, %v2330
        %vm2332 = vweird.f32 %v2326
        %vm2333 = vweird.f32 %v2327
        %vm2334 = vmor %vm2332, %vm2333
        %v2335 = vsel %vm2334, %v2327, %v2331
        %v2336 = vand.u32 2147483647, %v2326
        %vm2337 = vcmp.eq.f32.partialorder %v2336, 8.507059e+37
        %v2338 = vand.u32 %v2326, 2147483648
        %v2339 = vor.u32 1.1754944e-38, %v2338
        %v2340 = vsel %vm2337, %v2339, %v2335
        %v2341 = vmul.f32 1.0, %v2340
        %v2342 = vtanh.pop %v2321
        %v2343 = vxor.u32 %v2322, 2147483648
        %v2344 = vmul.f32 %v2343, 1.442695
        %v2345 = vpow.pop %v2344
        %v2346 = vadd.f32 %v2345, 1.0
        %v2347 = vrcp.pop %v2346
        %v2348 = vmul.f32 %v2346, %v2347
        %v2349 = vsub.f32 1.0, %v2348
        %v2350 = vmul.f32 %v2347, %v2349
        %v2351 = vadd.f32 %v2347, %v2350
        %vm2352 = vweird.f32 %v2346
        %vm2353 = vweird.f32 %v2347
        %vm2354 = vmor %vm2352, %vm2353
        %v2355 = vsel %vm2354, %v2347, %v2351
        %v2356 = vand.u32 2147483647, %v2346
        %vm2357 = vcmp.eq.f32.partialorder %v2356, 8.507059e+37
        %v2358 = vand.u32 %v2346, 2147483648
        %v2359 = vor.u32 1.1754944e-38, %v2358
        %v2360 = vsel %vm2357, %v2359, %v2355
        %v2361 = vmul.f32 1.0, %v2360
        %v2362 = vtanh.pop %v2322
        %v2363 = vmul.f32 %v2341, 0.0
        %2365 = vrot.lane.b32.xlu0 %v2342, 32
        %v2366 = vpop.permute.xlu0 %2365
        %v2368 = vmul.f32 %v2341, %v2366
        %2370 = vrot.lane.b32.xlu0 %v2368, 32
        %v2371 = vpop.permute.xlu0 %2370
        %v2373 = vadd.f32 %v2363, %v2371
        %v2374 = vmul.f32 %v2361, 0.0
        %2376 = vrot.lane.b32.xlu0 %v2362, 32
        %v2377 = vpop.permute.xlu0 %2376
        %v2379 = vmul.f32 %v2361, %v2377
        %2381 = vrot.lane.b32.xlu0 %v2379, 32
        %v2382 = vpop.permute.xlu0 %2381
        %v2384 = vadd.f32 %v2374, %v2382
        %v2385 = vtanh.pop %v2373
        %2387 = vrot.lane.b32.xlu0 %v2385, 32
        %v2388 = vpop.permute.xlu0 %2387
        %v2390 = vmul.f32 %v2341, %v2388
        %v2391 = vtanh.pop %v2384
        %2393 = vrot.lane.b32.xlu0 %v2391, 32
        %v2394 = vpop.permute.xlu0 %2393
        %v2396 = vmul.f32 %v2361, %v2394
        %v2397 = vld [vmem:[#allocation2 + $0x10] sm:$0xff]
        %v2398 = vld [vmem:[#allocation2 + $0x68] sm:$0xff]
        %2400 = vrot.lane.b32.xlu0 %v2390, 64
        %v2401 = vpop.permute.xlu0 %2400
        %2404 = vrot.lane.b32.xlu0 %v2396, 96
        %v2405 = vpop.permute.xlu0 %2404
        %v2407 = vsel %vm881, %v2401, %v2405
        %v2409 = vsel %vm1074, %v2407, 0
        %2411 = vmatpush.msra.mxu0 0.0
        %2412 = vmatpush.msra.mxu0 0.0
        %2413 = vmatpush.msra.mxu0 0.0
        %2414 = vmatpush.msra.mxu0 0.0
        %2415 = vmatpush.msra.mxu0 0.0
        %2416 = vmatpush.msra.mxu0 0.0
        %2417 = vmatpush.msra.mxu0 0.0
        %2418 = vmatpush.msra.mxu0 0.0
        %2419 = vmatpush.msra.mxu0 %v2277
        %2420 = vmatpush.msra.mxu0 %v2275
        %2421 = vmatpush.msra.mxu0 %v2273
        %2422 = vmatpush.msra.mxu0 %v2271
        %2423 = vmatpush.msra.mxu0 %v2269
        %2424 = vmatpush.msra.mxu0 %v2267
        %2425 = vmatpush.msra.mxu0 %v2265
        %2426 = vmatpush.msra.mxu0 %v2263
        %2427 = vmatmul.f32.gmra.mxu0 %v2409
        %v2428 = vpop.f32.mrf.mxu0
        %v2429 = vadd.f32 0.0, %v2428
        %2430 = vdwg.mxu0
        %2431 = vmatpush.msra.mxu0 0.0
        %2432 = vmatpush.msra.mxu0 0.0
        %2433 = vmatpush.msra.mxu0 0.0
        %2434 = vmatpush.msra.mxu0 0.0
        %2435 = vmatpush.msra.mxu0 0.0
        %2436 = vmatpush.msra.mxu0 0.0
        %2437 = vmatpush.msra.mxu0 0.0
        %2438 = vmatpush.msra.mxu0 0.0
        %2439 = vmatpush.msra.mxu0 %v2278
        %2440 = vmatpush.msra.mxu0 %v2276
        %2441 = vmatpush.msra.mxu0 %v2274
        %2442 = vmatpush.msra.mxu0 %v2272
        %2443 = vmatpush.msra.mxu0 %v2270
        %2444 = vmatpush.msra.mxu0 %v2268
        %2445 = vmatpush.msra.mxu0 %v2266
        %2446 = vmatpush.msra.mxu0 %v2264
        %2447 = vmatmul.f32.gmra.mxu0 %v2409
        %v2448 = vpop.f32.mrf.mxu0
        %v2449 = vadd.f32 0.0, %v2448
        %2450 = vdwg.mxu0
        %v2451 = vadd.f32 %v2397, %v2429
        %v2452 = vadd.f32 %v2398, %v2449
        %v2453 = vxor.u32 %v2451, 2147483648
        %v2454 = vmul.f32 %v2453, 1.442695
        %v2455 = vpow.pop %v2454
        %v2456 = vadd.f32 %v2455, 1.0
        %v2457 = vrcp.pop %v2456
        %v2458 = vmul.f32 %v2456, %v2457
        %v2459 = vsub.f32 1.0, %v2458
        %v2460 = vmul.f32 %v2457, %v2459
        %v2461 = vadd.f32 %v2457, %v2460
        %vm2462 = vweird.f32 %v2456
        %vm2463 = vweird.f32 %v2457
        %vm2464 = vmor %vm2462, %vm2463
        %v2465 = vsel %vm2464, %v2457, %v2461
        %v2466 = vand.u32 2147483647, %v2456
        %vm2467 = vcmp.eq.f32.partialorder %v2466, 8.507059e+37
        %v2468 = vand.u32 %v2456, 2147483648
        %v2469 = vor.u32 1.1754944e-38, %v2468
        %v2470 = vsel %vm2467, %v2469, %v2465
        %v2471 = vmul.f32 1.0, %v2470
        %v2472 = vtanh.pop %v2451
        %v2473 = vxor.u32 %v2452, 2147483648
        %v2474 = vmul.f32 %v2473, 1.442695
        %v2475 = vpow.pop %v2474
        %v2476 = vadd.f32 %v2475, 1.0
        %v2477 = vrcp.pop %v2476
        %v2478 = vmul.f32 %v2476, %v2477
        %v2479 = vsub.f32 1.0, %v2478
        %v2480 = vmul.f32 %v2477, %v2479
        %v2481 = vadd.f32 %v2477, %v2480
        %vm2482 = vweird.f32 %v2476
        %vm2483 = vweird.f32 %v2477
        %vm2484 = vmor %vm2482, %vm2483
        %v2485 = vsel %vm2484, %v2477, %v2481
        %v2486 = vand.u32 2147483647, %v2476
        %vm2487 = vcmp.eq.f32.partialorder %v2486, 8.507059e+37
        %v2488 = vand.u32 %v2476, 2147483648
        %v2489 = vor.u32 1.1754944e-38, %v2488
        %v2490 = vsel %vm2487, %v2489, %v2485
        %v2491 = vmul.f32 1.0, %v2490
        %v2492 = vtanh.pop %v2452
        %v2493 = vmul.f32 %v2471, %v2373
        %2495 = vrot.lane.b32.xlu0 %v2472, 32
        %v2496 = vpop.permute.xlu0 %2495
        %v2498 = vmul.f32 %v2471, %v2496
        %2500 = vrot.lane.b32.xlu0 %v2498, 32
        %v2501 = vpop.permute.xlu0 %2500
        %v2503 = vadd.f32 %v2493, %v2501
        %v2504 = vmul.f32 %v2491, %v2384
        %2506 = vrot.lane.b32.xlu0 %v2492, 32
        %v2507 = vpop.permute.xlu0 %2506
        %v2509 = vmul.f32 %v2491, %v2507
        %2511 = vrot.lane.b32.xlu0 %v2509, 32
        %v2512 = vpop.permute.xlu0 %2511
        %v2514 = vadd.f32 %v2504, %v2512
        %v2515 = vtanh.pop %v2503
        %2517 = vrot.lane.b32.xlu0 %v2515, 32
        %v2518 = vpop.permute.xlu0 %2517
        %v2520 = vmul.f32 %v2471, %v2518
        %v2521 = vtanh.pop %v2514
        %2523 = vrot.lane.b32.xlu0 %v2521, 32
        %v2524 = vpop.permute.xlu0 %2523
        %v2526 = vmul.f32 %v2491, %v2524
        %v2527 = vld [vmem:[#allocation2 + $0x20] sm:$0xff]
        %v2528 = vld [vmem:[#allocation2 + $0x58] sm:$0xff]
        %2530 = vrot.lane.b32.xlu0 %v2520, 64
        %v2531 = vpop.permute.xlu0 %2530
        %2534 = vrot.lane.b32.xlu0 %v2526, 96
        %v2535 = vpop.permute.xlu0 %2534
        %v2537 = vsel %vm881, %v2531, %v2535
        %v2539 = vsel %vm1074, %v2537, 0
        %2541 = vmatpush.msra.mxu0 0.0
        %2542 = vmatpush.msra.mxu0 0.0
        %2543 = vmatpush.msra.mxu0 0.0
        %2544 = vmatpush.msra.mxu0 0.0
        %2545 = vmatpush.msra.mxu0 0.0
        %2546 = vmatpush.msra.mxu0 0.0
        %2547 = vmatpush.msra.mxu0 0.0
        %2548 = vmatpush.msra.mxu0 0.0
        %2549 = vmatpush.msra.mxu0 %v2277
        %2550 = vmatpush.msra.mxu0 %v2275
        %2551 = vmatpush.msra.mxu0 %v2273
        %2552 = vmatpush.msra.mxu0 %v2271
        %2553 = vmatpush.msra.mxu0 %v2269
        %2554 = vmatpush.msra.mxu0 %v2267
        %2555 = vmatpush.msra.mxu0 %v2265
        %2556 = vmatpush.msra.mxu0 %v2263
        %2557 = vmatmul.f32.gmra.mxu0 %v2539
        %v2558 = vpop.f32.mrf.mxu0
        %v2559 = vadd.f32 0.0, %v2558
        %2560 = vdwg.mxu0
        %2561 = vmatpush.msra.mxu0 0.0
        %2562 = vmatpush.msra.mxu0 0.0
        %2563 = vmatpush.msra.mxu0 0.0
        %2564 = vmatpush.msra.mxu0 0.0
        %2565 = vmatpush.msra.mxu0 0.0
        %2566 = vmatpush.msra.mxu0 0.0
        %2567 = vmatpush.msra.mxu0 0.0
        %2568 = vmatpush.msra.mxu0 0.0
        %2569 = vmatpush.msra.mxu0 %v2278
        %2570 = vmatpush.msra.mxu0 %v2276
        %2571 = vmatpush.msra.mxu0 %v2274
        %2572 = vmatpush.msra.mxu0 %v2272
        %2573 = vmatpush.msra.mxu0 %v2270
        %2574 = vmatpush.msra.mxu0 %v2268
        %2575 = vmatpush.msra.mxu0 %v2266
        %2576 = vmatpush.msra.mxu0 %v2264
        %2577 = vmatmul.f32.gmra.mxu0 %v2539
        %v2578 = vpop.f32.mrf.mxu0
        %v2579 = vadd.f32 0.0, %v2578
        %2580 = vdwg.mxu0
        %v2581 = vadd.f32 %v2527, %v2559
        %v2582 = vadd.f32 %v2528, %v2579
        %v2583 = vxor.u32 %v2581, 2147483648
        %v2584 = vmul.f32 %v2583, 1.442695
        %v2585 = vpow.pop %v2584
        %v2586 = vadd.f32 %v2585, 1.0
        %v2587 = vrcp.pop %v2586
        %v2588 = vmul.f32 %v2586, %v2587
        %v2589 = vsub.f32 1.0, %v2588
        %v2590 = vmul.f32 %v2587, %v2589
        %v2591 = vadd.f32 %v2587, %v2590
        %vm2592 = vweird.f32 %v2586
        %vm2593 = vweird.f32 %v2587
        %vm2594 = vmor %vm2592, %vm2593
        %v2595 = vsel %vm2594, %v2587, %v2591
        %v2596 = vand.u32 2147483647, %v2586
        %vm2597 = vcmp.eq.f32.partialorder %v2596, 8.507059e+37
        %v2598 = vand.u32 %v2586, 2147483648
        %v2599 = vor.u32 1.1754944e-38, %v2598
        %v2600 = vsel %vm2597, %v2599, %v2595
        %v2601 = vmul.f32 1.0, %v2600
        %v2602 = vtanh.pop %v2581
        %v2603 = vxor.u32 %v2582, 2147483648
        %v2604 = vmul.f32 %v2603, 1.442695
        %v2605 = vpow.pop %v2604
        %v2606 = vadd.f32 %v2605, 1.0
        %v2607 = vrcp.pop %v2606
        %v2608 = vmul.f32 %v2606, %v2607
        %v2609 = vsub.f32 1.0, %v2608
        %v2610 = vmul.f32 %v2607, %v2609
        %v2611 = vadd.f32 %v2607, %v2610
        %vm2612 = vweird.f32 %v2606
        %vm2613 = vweird.f32 %v2607
        %vm2614 = vmor %vm2612, %vm2613
        %v2615 = vsel %vm2614, %v2607, %v2611
        %v2616 = vand.u32 2147483647, %v2606
        %vm2617 = vcmp.eq.f32.partialorder %v2616, 8.507059e+37
        %v2618 = vand.u32 %v2606, 2147483648
        %v2619 = vor.u32 1.1754944e-38, %v2618
        %v2620 = vsel %vm2617, %v2619, %v2615
        %v2621 = vmul.f32 1.0, %v2620
        %v2622 = vtanh.pop %v2582
        %v2623 = vmul.f32 %v2601, %v2503
        %2625 = vrot.lane.b32.xlu0 %v2602, 32
        %v2626 = vpop.permute.xlu0 %2625
        %v2628 = vmul.f32 %v2601, %v2626
        %2630 = vrot.lane.b32.xlu0 %v2628, 32
        %v2631 = vpop.permute.xlu0 %2630
        %v2633 = vadd.f32 %v2623, %v2631
        %v2634 = vmul.f32 %v2621, %v2514
        %2636 = vrot.lane.b32.xlu0 %v2622, 32
        %v2637 = vpop.permute.xlu0 %2636
        %v2639 = vmul.f32 %v2621, %v2637
        %2641 = vrot.lane.b32.xlu0 %v2639, 32
        %v2642 = vpop.permute.xlu0 %2641
        %v2644 = vadd.f32 %v2634, %v2642
        %v2645 = vtanh.pop %v2633
        %2647 = vrot.lane.b32.xlu0 %v2645, 32
        %v2648 = vpop.permute.xlu0 %2647
        %v2650 = vmul.f32 %v2601, %v2648
        %v2651 = vtanh.pop %v2644
        %2653 = vrot.lane.b32.xlu0 %v2651, 32
        %v2654 = vpop.permute.xlu0 %2653
        %v2656 = vmul.f32 %v2621, %v2654
        %v2657 = vld [vmem:[#allocation2 + $0x30] sm:$0xff]
        %v2658 = vld [vmem:[#allocation2 + $0x48] sm:$0xff]
        %2660 = vrot.lane.b32.xlu0 %v2650, 64
        %v2661 = vpop.permute.xlu0 %2660
        %2664 = vrot.lane.b32.xlu0 %v2656, 96
        %v2665 = vpop.permute.xlu0 %2664
        %v2667 = vsel %vm881, %v2661, %v2665
        %v2669 = vsel %vm1074, %v2667, 0
        %2671 = vmatpush.msra.mxu0 0.0
        %2672 = vmatpush.msra.mxu0 0.0
        %2673 = vmatpush.msra.mxu0 0.0
        %2674 = vmatpush.msra.mxu0 0.0
        %2675 = vmatpush.msra.mxu0 0.0
        %2676 = vmatpush.msra.mxu0 0.0
        %2677 = vmatpush.msra.mxu0 0.0
        %2678 = vmatpush.msra.mxu0 0.0
        %2679 = vmatpush.msra.mxu0 %v2277
        %2680 = vmatpush.msra.mxu0 %v2275
        %2681 = vmatpush.msra.mxu0 %v2273
        %2682 = vmatpush.msra.mxu0 %v2271
        %2683 = vmatpush.msra.mxu0 %v2269
        %2684 = vmatpush.msra.mxu0 %v2267
        %2685 = vmatpush.msra.mxu0 %v2265
        %2686 = vmatpush.msra.mxu0 %v2263
        %2687 = vmatmul.f32.gmra.mxu0 %v2669
        %v2688 = vpop.f32.mrf.mxu0
        %v2689 = vadd.f32 0.0, %v2688
        %2690 = vdwg.mxu0
        %2691 = vmatpush.msra.mxu0 0.0
        %2692 = vmatpush.msra.mxu0 0.0
        %2693 = vmatpush.msra.mxu0 0.0
        %2694 = vmatpush.msra.mxu0 0.0
        %2695 = vmatpush.msra.mxu0 0.0
        %2696 = vmatpush.msra.mxu0 0.0
        %2697 = vmatpush.msra.mxu0 0.0
        %2698 = vmatpush.msra.mxu0 0.0
        %2699 = vmatpush.msra.mxu0 %v2278
        %2700 = vmatpush.msra.mxu0 %v2276
        %2701 = vmatpush.msra.mxu0 %v2274
        %2702 = vmatpush.msra.mxu0 %v2272
        %2703 = vmatpush.msra.mxu0 %v2270
        %2704 = vmatpush.msra.mxu0 %v2268
        %2705 = vmatpush.msra.mxu0 %v2266
        %2706 = vmatpush.msra.mxu0 %v2264
        %2707 = vmatmul.f32.gmra.mxu0 %v2669
        %v2708 = vpop.f32.mrf.mxu0
        %v2709 = vadd.f32 0.0, %v2708
        %2710 = vdwg.mxu0
        %v2711 = vadd.f32 %v2657, %v2689
        %v2712 = vadd.f32 %v2658, %v2709
        %v2713 = vxor.u32 %v2711, 2147483648
        %v2714 = vmul.f32 %v2713, 1.442695
        %v2715 = vpow.pop %v2714
        %v2716 = vadd.f32 %v2715, 1.0
        %v2717 = vrcp.pop %v2716
        %v2718 = vmul.f32 %v2716, %v2717
        %v2719 = vsub.f32 1.0, %v2718
        %v2720 = vmul.f32 %v2717, %v2719
        %v2721 = vadd.f32 %v2717, %v2720
        %vm2722 = vweird.f32 %v2716
        %vm2723 = vweird.f32 %v2717
        %vm2724 = vmor %vm2722, %vm2723
        %v2725 = vsel %vm2724, %v2717, %v2721
        %v2726 = vand.u32 2147483647, %v2716
        %vm2727 = vcmp.eq.f32.partialorder %v2726, 8.507059e+37
        %v2728 = vand.u32 %v2716, 2147483648
        %v2729 = vor.u32 1.1754944e-38, %v2728
        %v2730 = vsel %vm2727, %v2729, %v2725
        %v2731 = vmul.f32 1.0, %v2730
        %v2732 = vtanh.pop %v2711
        %v2733 = vxor.u32 %v2712, 2147483648
        %v2734 = vmul.f32 %v2733, 1.442695
        %v2735 = vpow.pop %v2734
        %v2736 = vadd.f32 %v2735, 1.0
        %v2737 = vrcp.pop %v2736
        %v2738 = vmul.f32 %v2736, %v2737
        %v2739 = vsub.f32 1.0, %v2738
        %v2740 = vmul.f32 %v2737, %v2739
        %v2741 = vadd.f32 %v2737, %v2740
        %vm2742 = vweird.f32 %v2736
        %vm2743 = vweird.f32 %v2737
        %vm2744 = vmor %vm2742, %vm2743
        %v2745 = vsel %vm2744, %v2737, %v2741
        %v2746 = vand.u32 2147483647, %v2736
        %vm2747 = vcmp.eq.f32.partialorder %v2746, 8.507059e+37
        %v2748 = vand.u32 %v2736, 2147483648
        %v2749 = vor.u32 1.1754944e-38, %v2748
        %v2750 = vsel %vm2747, %v2749, %v2745
        %v2751 = vmul.f32 1.0, %v2750
        %v2752 = vtanh.pop %v2712
        %v2753 = vmul.f32 %v2731, %v2633
        %2755 = vrot.lane.b32.xlu0 %v2732, 32
        %v2756 = vpop.permute.xlu0 %2755
        %v2758 = vmul.f32 %v2731, %v2756
        %2760 = vrot.lane.b32.xlu0 %v2758, 32
        %v2761 = vpop.permute.xlu0 %2760
        %v2763 = vadd.f32 %v2753, %v2761
        %v2764 = vmul.f32 %v2751, %v2644
        %2766 = vrot.lane.b32.xlu0 %v2752, 32
        %v2767 = vpop.permute.xlu0 %2766
        %v2769 = vmul.f32 %v2751, %v2767
        %2771 = vrot.lane.b32.xlu0 %v2769, 32
        %v2772 = vpop.permute.xlu0 %2771
        %v2774 = vadd.f32 %v2764, %v2772
        %v2775 = vtanh.pop %v2763
        %2777 = vrot.lane.b32.xlu0 %v2775, 32
        %v2778 = vpop.permute.xlu0 %2777
        %v2780 = vmul.f32 %v2731, %v2778
        %v2781 = vtanh.pop %v2774
        %2783 = vrot.lane.b32.xlu0 %v2781, 32
        %v2784 = vpop.permute.xlu0 %2783
        %v2786 = vmul.f32 %v2751, %v2784
        %v2787 = vld [vmem:[#allocation2 + $0x40] sm:$0xff]
        %v2788 = vld [vmem:[#allocation2 + $0x38] sm:$0xff]
        %2790 = vrot.lane.b32.xlu0 %v2780, 64
        %v2791 = vpop.permute.xlu0 %2790
        %2794 = vrot.lane.b32.xlu0 %v2786, 96
        %v2795 = vpop.permute.xlu0 %2794
        %v2797 = vsel %vm881, %v2791, %v2795
        %v2799 = vsel %vm1074, %v2797, 0
        %2801 = vmatpush.msra.mxu0 0.0
        %2802 = vmatpush.msra.mxu0 0.0
        %2803 = vmatpush.msra.mxu0 0.0
        %2804 = vmatpush.msra.mxu0 0.0
        %2805 = vmatpush.msra.mxu0 0.0
        %2806 = vmatpush.msra.mxu0 0.0
        %2807 = vmatpush.msra.mxu0 0.0
        %2808 = vmatpush.msra.mxu0 0.0
        %2809 = vmatpush.msra.mxu0 %v2277
        %2810 = vmatpush.msra.mxu0 %v2275
        %2811 = vmatpush.msra.mxu0 %v2273
        %2812 = vmatpush.msra.mxu0 %v2271
        %2813 = vmatpush.msra.mxu0 %v2269
        %2814 = vmatpush.msra.mxu0 %v2267
        %2815 = vmatpush.msra.mxu0 %v2265
        %2816 = vmatpush.msra.mxu0 %v2263
        %2817 = vmatmul.f32.gmra.mxu0 %v2799
        %v2818 = vpop.f32.mrf.mxu0
        %v2819 = vadd.f32 0.0, %v2818
        %2820 = vdwg.mxu0
        %2821 = vmatpush.msra.mxu0 0.0
        %2822 = vmatpush.msra.mxu0 0.0
        %2823 = vmatpush.msra.mxu0 0.0
        %2824 = vmatpush.msra.mxu0 0.0
        %2825 = vmatpush.msra.mxu0 0.0
        %2826 = vmatpush.msra.mxu0 0.0
        %2827 = vmatpush.msra.mxu0 0.0
        %2828 = vmatpush.msra.mxu0 0.0
        %2829 = vmatpush.msra.mxu0 %v2278
        %2830 = vmatpush.msra.mxu0 %v2276
        %2831 = vmatpush.msra.mxu0 %v2274
        %2832 = vmatpush.msra.mxu0 %v2272
        %2833 = vmatpush.msra.mxu0 %v2270
        %2834 = vmatpush.msra.mxu0 %v2268
        %2835 = vmatpush.msra.mxu0 %v2266
        %2836 = vmatpush.msra.mxu0 %v2264
        %2837 = vmatmul.f32.gmra.mxu0 %v2799
        %v2838 = vpop.f32.mrf.mxu0
        %v2839 = vadd.f32 0.0, %v2838
        %2840 = vdwg.mxu0
        %v2841 = vadd.f32 %v2787, %v2819
        %v2842 = vadd.f32 %v2788, %v2839
        %v2843 = vxor.u32 %v2841, 2147483648
        %v2844 = vmul.f32 %v2843, 1.442695
        %v2845 = vpow.pop %v2844
        %v2846 = vadd.f32 %v2845, 1.0
        %v2847 = vrcp.pop %v2846
        %v2848 = vmul.f32 %v2846, %v2847
        %v2849 = vsub.f32 1.0, %v2848
        %v2850 = vmul.f32 %v2847, %v2849
        %v2851 = vadd.f32 %v2847, %v2850
        %vm2852 = vweird.f32 %v2846
        %vm2853 = vweird.f32 %v2847
        %vm2854 = vmor %vm2852, %vm2853
        %v2855 = vsel %vm2854, %v2847, %v2851
        %v2856 = vand.u32 2147483647, %v2846
        %vm2857 = vcmp.eq.f32.partialorder %v2856, 8.507059e+37
        %v2858 = vand.u32 %v2846, 2147483648
        %v2859 = vor.u32 1.1754944e-38, %v2858
        %v2860 = vsel %vm2857, %v2859, %v2855
        %v2861 = vmul.f32 1.0, %v2860
        %v2862 = vtanh.pop %v2841
        %v2863 = vxor.u32 %v2842, 2147483648
        %v2864 = vmul.f32 %v2863, 1.442695
        %v2865 = vpow.pop %v2864
        %v2866 = vadd.f32 %v2865, 1.0
        %v2867 = vrcp.pop %v2866
        %v2868 = vmul.f32 %v2866, %v2867
        %v2869 = vsub.f32 1.0, %v2868
        %v2870 = vmul.f32 %v2867, %v2869
        %v2871 = vadd.f32 %v2867, %v2870
        %vm2872 = vweird.f32 %v2866
        %vm2873 = vweird.f32 %v2867
        %vm2874 = vmor %vm2872, %vm2873
        %v2875 = vsel %vm2874, %v2867, %v2871
        %v2876 = vand.u32 2147483647, %v2866
        %vm2877 = vcmp.eq.f32.partialorder %v2876, 8.507059e+37
        %v2878 = vand.u32 %v2866, 2147483648
        %v2879 = vor.u32 1.1754944e-38, %v2878
        %v2880 = vsel %vm2877, %v2879, %v2875
        %v2881 = vmul.f32 1.0, %v2880
        %v2882 = vtanh.pop %v2842
        %v2883 = vmul.f32 %v2861, %v2763
        %2885 = vrot.lane.b32.xlu0 %v2862, 32
        %v2886 = vpop.permute.xlu0 %2885
        %v2888 = vmul.f32 %v2861, %v2886
        %2890 = vrot.lane.b32.xlu0 %v2888, 32
        %v2891 = vpop.permute.xlu0 %2890
        %v2893 = vadd.f32 %v2883, %v2891
        %v2894 = vmul.f32 %v2881, %v2774
        %2896 = vrot.lane.b32.xlu0 %v2882, 32
        %v2897 = vpop.permute.xlu0 %2896
        %v2899 = vmul.f32 %v2881, %v2897
        %2901 = vrot.lane.b32.xlu0 %v2899, 32
        %v2902 = vpop.permute.xlu0 %2901
        %v2904 = vadd.f32 %v2894, %v2902
        %v2905 = vtanh.pop %v2893
        %2907 = vrot.lane.b32.xlu0 %v2905, 32
        %v2908 = vpop.permute.xlu0 %2907
        %v2910 = vmul.f32 %v2861, %v2908
        %v2911 = vtanh.pop %v2904
        %2913 = vrot.lane.b32.xlu0 %v2911, 32
        %v2914 = vpop.permute.xlu0 %2913
        %v2916 = vmul.f32 %v2881, %v2914
        %v2917 = vld [vmem:[#allocation2 + $0x50] sm:$0xff]
        %v2918 = vld [vmem:[#allocation2 + $0x28] sm:$0xff]
        %2920 = vrot.lane.b32.xlu0 %v2910, 64
        %v2921 = vpop.permute.xlu0 %2920
        %2924 = vrot.lane.b32.xlu0 %v2916, 96
        %v2925 = vpop.permute.xlu0 %2924
        %v2927 = vsel %vm881, %v2921, %v2925
        %v2929 = vsel %vm1074, %v2927, 0
        %2931 = vmatpush.msra.mxu0 0.0
        %2932 = vmatpush.msra.mxu0 0.0
        %2933 = vmatpush.msra.mxu0 0.0
        %2934 = vmatpush.msra.mxu0 0.0
        %2935 = vmatpush.msra.mxu0 0.0
        %2936 = vmatpush.msra.mxu0 0.0
        %2937 = vmatpush.msra.mxu0 0.0
        %2938 = vmatpush.msra.mxu0 0.0
        %2939 = vmatpush.msra.mxu0 %v2277
        %2940 = vmatpush.msra.mxu0 %v2275
        %2941 = vmatpush.msra.mxu0 %v2273
        %2942 = vmatpush.msra.mxu0 %v2271
        %2943 = vmatpush.msra.mxu0 %v2269
        %2944 = vmatpush.msra.mxu0 %v2267
        %2945 = vmatpush.msra.mxu0 %v2265
        %2946 = vmatpush.msra.mxu0 %v2263
        %2947 = vmatmul.f32.gmra.mxu0 %v2929
        %v2948 = vpop.f32.mrf.mxu0
        %v2949 = vadd.f32 0.0, %v2948
        %2950 = vdwg.mxu0
        %2951 = vmatpush.msra.mxu0 0.0
        %2952 = vmatpush.msra.mxu0 0.0
        %2953 = vmatpush.msra.mxu0 0.0
        %2954 = vmatpush.msra.mxu0 0.0
        %2955 = vmatpush.msra.mxu0 0.0
        %2956 = vmatpush.msra.mxu0 0.0
        %2957 = vmatpush.msra.mxu0 0.0
        %2958 = vmatpush.msra.mxu0 0.0
        %2959 = vmatpush.msra.mxu0 %v2278
        %2960 = vmatpush.msra.mxu0 %v2276
        %2961 = vmatpush.msra.mxu0 %v2274
        %2962 = vmatpush.msra.mxu0 %v2272
        %2963 = vmatpush.msra.mxu0 %v2270
        %2964 = vmatpush.msra.mxu0 %v2268
        %2965 = vmatpush.msra.mxu0 %v2266
        %2966 = vmatpush.msra.mxu0 %v2264
        %2967 = vmatmul.f32.gmra.mxu0 %v2929
        %v2968 = vpop.f32.mrf.mxu0
        %v2969 = vadd.f32 0.0, %v2968
        %2970 = vdwg.mxu0
        %v2971 = vadd.f32 %v2917, %v2949
        %v2972 = vadd.f32 %v2918, %v2969
        %v2973 = vxor.u32 %v2971, 2147483648
        %v2974 = vmul.f32 %v2973, 1.442695
        %v2975 = vpow.pop %v2974
        %v2976 = vadd.f32 %v2975, 1.0
        %v2977 = vrcp.pop %v2976
        %v2978 = vmul.f32 %v2976, %v2977
        %v2979 = vsub.f32 1.0, %v2978
        %v2980 = vmul.f32 %v2977, %v2979
        %v2981 = vadd.f32 %v2977, %v2980
        %vm2982 = vweird.f32 %v2976
        %vm2983 = vweird.f32 %v2977
        %vm2984 = vmor %vm2982, %vm2983
        %v2985 = vsel %vm2984, %v2977, %v2981
        %v2986 = vand.u32 2147483647, %v2976
        %vm2987 = vcmp.eq.f32.partialorder %v2986, 8.507059e+37
        %v2988 = vand.u32 %v2976, 2147483648
        %v2989 = vor.u32 1.1754944e-38, %v2988
        %v2990 = vsel %vm2987, %v2989, %v2985
        %v2991 = vmul.f32 1.0, %v2990
        %v2992 = vtanh.pop %v2971
        %v2993 = vxor.u32 %v2972, 2147483648
        %v2994 = vmul.f32 %v2993, 1.442695
        %v2995 = vpow.pop %v2994
        %v2996 = vadd.f32 %v2995, 1.0
        %v2997 = vrcp.pop %v2996
        %v2998 = vmul.f32 %v2996, %v2997
        %v2999 = vsub.f32 1.0, %v2998
        %v3000 = vmul.f32 %v2997, %v2999
        %v3001 = vadd.f32 %v2997, %v3000
        %vm3002 = vweird.f32 %v2996
        %vm3003 = vweird.f32 %v2997
        %vm3004 = vmor %vm3002, %vm3003
        %v3005 = vsel %vm3004, %v2997, %v3001
        %v3006 = vand.u32 2147483647, %v2996
        %vm3007 = vcmp.eq.f32.partialorder %v3006, 8.507059e+37
        %v3008 = vand.u32 %v2996, 2147483648
        %v3009 = vor.u32 1.1754944e-38, %v3008
        %v3010 = vsel %vm3007, %v3009, %v3005
        %v3011 = vmul.f32 1.0, %v3010
        %v3012 = vtanh.pop %v2972
        %v3013 = vmul.f32 %v2991, %v2893
        %3015 = vrot.lane.b32.xlu0 %v2992, 32
        %v3016 = vpop.permute.xlu0 %3015
        %v3018 = vmul.f32 %v2991, %v3016
        %3020 = vrot.lane.b32.xlu0 %v3018, 32
        %v3021 = vpop.permute.xlu0 %3020
        %v3023 = vadd.f32 %v3013, %v3021
        %v3024 = vmul.f32 %v3011, %v2904
        %3026 = vrot.lane.b32.xlu0 %v3012, 32
        %v3027 = vpop.permute.xlu0 %3026
        %v3029 = vmul.f32 %v3011, %v3027
        %3031 = vrot.lane.b32.xlu0 %v3029, 32
        %v3032 = vpop.permute.xlu0 %3031
        %v3034 = vadd.f32 %v3024, %v3032
        %v3035 = vtanh.pop %v3023
        %3037 = vrot.lane.b32.xlu0 %v3035, 32
        %v3038 = vpop.permute.xlu0 %3037
        %v3040 = vmul.f32 %v2991, %v3038
        %v3041 = vtanh.pop %v3034
        %3043 = vrot.lane.b32.xlu0 %v3041, 32
        %v3044 = vpop.permute.xlu0 %3043
        %v3046 = vmul.f32 %v3011, %v3044
        %v3047 = vld [vmem:[#allocation2 + $0x60] sm:$0xff]
        %v3048 = vld [vmem:[#allocation2 + $0x18] sm:$0xff]
        %3050 = vrot.lane.b32.xlu0 %v3040, 64
        %v3051 = vpop.permute.xlu0 %3050
        %3054 = vrot.lane.b32.xlu0 %v3046, 96
        %v3055 = vpop.permute.xlu0 %3054
        %v3057 = vsel %vm881, %v3051, %v3055
        %v3059 = vsel %vm1074, %v3057, 0
        %3061 = vmatpush.msra.mxu0 0.0
        %3062 = vmatpush.msra.mxu0 0.0
        %3063 = vmatpush.msra.mxu0 0.0
        %3064 = vmatpush.msra.mxu0 0.0
        %3065 = vmatpush.msra.mxu0 0.0
        %3066 = vmatpush.msra.mxu0 0.0
        %3067 = vmatpush.msra.mxu0 0.0
        %3068 = vmatpush.msra.mxu0 0.0
        %3069 = vmatpush.msra.mxu0 %v2277
        %3070 = vmatpush.msra.mxu0 %v2275
        %3071 = vmatpush.msra.mxu0 %v2273
        %3072 = vmatpush.msra.mxu0 %v2271
        %3073 = vmatpush.msra.mxu0 %v2269
        %3074 = vmatpush.msra.mxu0 %v2267
        %3075 = vmatpush.msra.mxu0 %v2265
        %3076 = vmatpush.msra.mxu0 %v2263
        %3077 = vmatmul.f32.gmra.mxu0 %v3059
        %v3078 = vpop.f32.mrf.mxu0
        %v3079 = vadd.f32 0.0, %v3078
        %3080 = vdwg.mxu0
        %3081 = vmatpush.msra.mxu0 0.0
        %3082 = vmatpush.msra.mxu0 0.0
        %3083 = vmatpush.msra.mxu0 0.0
        %3084 = vmatpush.msra.mxu0 0.0
        %3085 = vmatpush.msra.mxu0 0.0
        %3086 = vmatpush.msra.mxu0 0.0
        %3087 = vmatpush.msra.mxu0 0.0
        %3088 = vmatpush.msra.mxu0 0.0
        %3089 = vmatpush.msra.mxu0 %v2278
        %3090 = vmatpush.msra.mxu0 %v2276
        %3091 = vmatpush.msra.mxu0 %v2274
        %3092 = vmatpush.msra.mxu0 %v2272
        %3093 = vmatpush.msra.mxu0 %v2270
        %3094 = vmatpush.msra.mxu0 %v2268
        %3095 = vmatpush.msra.mxu0 %v2266
        %3096 = vmatpush.msra.mxu0 %v2264
        %3097 = vmatmul.f32.gmra.mxu0 %v3059
        %v3098 = vpop.f32.mrf.mxu0
        %v3099 = vadd.f32 0.0, %v3098
        %3100 = vdwg.mxu0
        %v3101 = vadd.f32 %v3047, %v3079
        %v3102 = vadd.f32 %v3048, %v3099
        %v3103 = vxor.u32 %v3101, 2147483648
        %v3104 = vmul.f32 %v3103, 1.442695
        %v3105 = vpow.pop %v3104
        %v3106 = vadd.f32 %v3105, 1.0
        %v3107 = vrcp.pop %v3106
        %v3108 = vmul.f32 %v3106, %v3107
        %v3109 = vsub.f32 1.0, %v3108
        %v3110 = vmul.f32 %v3107, %v3109
        %v3111 = vadd.f32 %v3107, %v3110
        %vm3112 = vweird.f32 %v3106
        %vm3113 = vweird.f32 %v3107
        %vm3114 = vmor %vm3112, %vm3113
        %v3115 = vsel %vm3114, %v3107, %v3111
        %v3116 = vand.u32 2147483647, %v3106
        %vm3117 = vcmp.eq.f32.partialorder %v3116, 8.507059e+37
        %v3118 = vand.u32 %v3106, 2147483648
        %v3119 = vor.u32 1.1754944e-38, %v3118
        %v3120 = vsel %vm3117, %v3119, %v3115
        %v3121 = vmul.f32 1.0, %v3120
        %v3122 = vtanh.pop %v3101
        %v3123 = vxor.u32 %v3102, 2147483648
        %v3124 = vmul.f32 %v3123, 1.442695
        %v3125 = vpow.pop %v3124
        %v3126 = vadd.f32 %v3125, 1.0
        %v3127 = vrcp.pop %v3126
        %v3128 = vmul.f32 %v3126, %v3127
        %v3129 = vsub.f32 1.0, %v3128
        %v3130 = vmul.f32 %v3127, %v3129
        %v3131 = vadd.f32 %v3127, %v3130
        %vm3132 = vweird.f32 %v3126
        %vm3133 = vweird.f32 %v3127
        %vm3134 = vmor %vm3132, %vm3133
        %v3135 = vsel %vm3134, %v3127, %v3131
        %v3136 = vand.u32 2147483647, %v3126
        %vm3137 = vcmp.eq.f32.partialorder %v3136, 8.507059e+37
        %v3138 = vand.u32 %v3126, 2147483648
        %v3139 = vor.u32 1.1754944e-38, %v3138
        %v3140 = vsel %vm3137, %v3139, %v3135
        %v3141 = vmul.f32 1.0, %v3140
        %v3142 = vtanh.pop %v3102
        %v3143 = vmul.f32 %v3121, %v3023
        %3145 = vrot.lane.b32.xlu0 %v3122, 32
        %v3146 = vpop.permute.xlu0 %3145
        %v3148 = vmul.f32 %v3121, %v3146
        %3150 = vrot.lane.b32.xlu0 %v3148, 32
        %v3151 = vpop.permute.xlu0 %3150
        %v3153 = vadd.f32 %v3143, %v3151
        %v3154 = vmul.f32 %v3141, %v3034
        %3156 = vrot.lane.b32.xlu0 %v3142, 32
        %v3157 = vpop.permute.xlu0 %3156
        %v3159 = vmul.f32 %v3141, %v3157
        %3161 = vrot.lane.b32.xlu0 %v3159, 32
        %v3162 = vpop.permute.xlu0 %3161
        %v3164 = vadd.f32 %v3154, %v3162
        %v3165 = vtanh.pop %v3153
        %3167 = vrot.lane.b32.xlu0 %v3165, 32
        %v3168 = vpop.permute.xlu0 %3167
        %v3170 = vmul.f32 %v3121, %v3168
        %v3171 = vtanh.pop %v3164
        %3173 = vrot.lane.b32.xlu0 %v3171, 32
        %v3174 = vpop.permute.xlu0 %3173
        %v3176 = vmul.f32 %v3141, %v3174
        %v3177 = vld [vmem:[#allocation2 + $0x70] sm:$0xff]
        %v3178 = vld [vmem:[#allocation2 + $0x8] sm:$0xff]
        %3180 = vrot.lane.b32.xlu0 %v3170, 64
        %v3181 = vpop.permute.xlu0 %3180
        %3184 = vrot.lane.b32.xlu0 %v3176, 96
        %v3185 = vpop.permute.xlu0 %3184
        %v3187 = vsel %vm881, %v3181, %v3185
        %v3189 = vsel %vm1074, %v3187, 0
        %3191 = vmatpush.msra.mxu0 0.0
        %3192 = vmatpush.msra.mxu0 0.0
        %3193 = vmatpush.msra.mxu0 0.0
        %3194 = vmatpush.msra.mxu0 0.0
        %3195 = vmatpush.msra.mxu0 0.0
        %3196 = vmatpush.msra.mxu0 0.0
        %3197 = vmatpush.msra.mxu0 0.0
        %3198 = vmatpush.msra.mxu0 0.0
        %3199 = vmatpush.msra.mxu0 %v2277
        %3200 = vmatpush.msra.mxu0 %v2275
        %3201 = vmatpush.msra.mxu0 %v2273
        %3202 = vmatpush.msra.mxu0 %v2271
        %3203 = vmatpush.msra.mxu0 %v2269
        %3204 = vmatpush.msra.mxu0 %v2267
        %3205 = vmatpush.msra.mxu0 %v2265
        %3206 = vmatpush.msra.mxu0 %v2263
        %3207 = vmatmul.f32.gmra.mxu0 %v3189
        %v3208 = vpop.f32.mrf.mxu0
        %v3209 = vadd.f32 0.0, %v3208
        %3210 = vdwg.mxu0
        %3211 = vmatpush.msra.mxu0 0.0
        %3212 = vmatpush.msra.mxu0 0.0
        %3213 = vmatpush.msra.mxu0 0.0
        %3214 = vmatpush.msra.mxu0 0.0
        %3215 = vmatpush.msra.mxu0 0.0
        %3216 = vmatpush.msra.mxu0 0.0
        %3217 = vmatpush.msra.mxu0 0.0
        %3218 = vmatpush.msra.mxu0 0.0
        %3219 = vmatpush.msra.mxu0 %v2278
        %3220 = vmatpush.msra.mxu0 %v2276
        %3221 = vmatpush.msra.mxu0 %v2274
        %3222 = vmatpush.msra.mxu0 %v2272
        %3223 = vmatpush.msra.mxu0 %v2270
        %3224 = vmatpush.msra.mxu0 %v2268
        %3225 = vmatpush.msra.mxu0 %v2266
        %3226 = vmatpush.msra.mxu0 %v2264
        %3227 = vmatmul.f32.gmra.mxu0 %v3189
        %v3228 = vpop.f32.mrf.mxu0
        %v3229 = vadd.f32 0.0, %v3228
        %3230 = vdwg.mxu0
        %v3231 = vadd.f32 %v3177, %v3209
        %v3232 = vadd.f32 %v3178, %v3229
        %v3233 = vxor.u32 %v3231, 2147483648
        %v3234 = vmul.f32 %v3233, 1.442695
        %v3235 = vpow.pop %v3234
        %v3236 = vadd.f32 %v3235, 1.0
        %v3237 = vrcp.pop %v3236
        %v3238 = vmul.f32 %v3236, %v3237
        %v3239 = vsub.f32 1.0, %v3238
        %v3240 = vmul.f32 %v3237, %v3239
        %v3241 = vadd.f32 %v3237, %v3240
        %vm3242 = vweird.f32 %v3236
        %vm3243 = vweird.f32 %v3237
        %vm3244 = vmor %vm3242, %vm3243
        %v3245 = vsel %vm3244, %v3237, %v3241
        %v3246 = vand.u32 2147483647, %v3236
        %vm3247 = vcmp.eq.f32.partialorder %v3246, 8.507059e+37
        %v3248 = vand.u32 %v3236, 2147483648
        %v3249 = vor.u32 1.1754944e-38, %v3248
        %v3250 = vsel %vm3247, %v3249, %v3245
        %v3251 = vmul.f32 1.0, %v3250
        %v3252 = vtanh.pop %v3231
        %v3253 = vxor.u32 %v3232, 2147483648
        %v3254 = vmul.f32 %v3253, 1.442695
        %v3255 = vpow.pop %v3254
        %v3256 = vadd.f32 %v3255, 1.0
        %v3257 = vrcp.pop %v3256
        %v3258 = vmul.f32 %v3256, %v3257
        %v3259 = vsub.f32 1.0, %v3258
        %v3260 = vmul.f32 %v3257, %v3259
        %v3261 = vadd.f32 %v3257, %v3260
        %vm3262 = vweird.f32 %v3256
        %vm3263 = vweird.f32 %v3257
        %vm3264 = vmor %vm3262, %vm3263
        %v3265 = vsel %vm3264, %v3257, %v3261
        %v3266 = vand.u32 2147483647, %v3256
        %vm3267 = vcmp.eq.f32.partialorder %v3266, 8.507059e+37
        %v3268 = vand.u32 %v3256, 2147483648
        %v3269 = vor.u32 1.1754944e-38, %v3268
        %v3270 = vsel %vm3267, %v3269, %v3265
        %v3271 = vmul.f32 1.0, %v3270
        %v3272 = vtanh.pop %v3232
        %v3273 = vmul.f32 %v3251, %v3153
        %3275 = vrot.lane.b32.xlu0 %v3252, 32
        %v3276 = vpop.permute.xlu0 %3275
        %v3278 = vmul.f32 %v3251, %v3276
        %3280 = vrot.lane.b32.xlu0 %v3278, 32
        %v3281 = vpop.permute.xlu0 %3280
        %v3283 = vadd.f32 %v3273, %v3281
        %v3284 = vmul.f32 %v3271, %v3164
        %3286 = vrot.lane.b32.xlu0 %v3272, 32
        %v3287 = vpop.permute.xlu0 %3286
        %v3289 = vmul.f32 %v3271, %v3287
        %3291 = vrot.lane.b32.xlu0 %v3289, 32
        %v3292 = vpop.permute.xlu0 %3291
        %v3294 = vadd.f32 %v3284, %v3292
        %v3295 = vtanh.pop %v3283
        %3297 = vrot.lane.b32.xlu0 %v3295, 32
        %v3298 = vpop.permute.xlu0 %3297
        %v3300 = vmul.f32 %v3251, %v3298
        %v3301 = vtanh.pop %v3294
        %3303 = vrot.lane.b32.xlu0 %v3301, 32
        %v3304 = vpop.permute.xlu0 %3303
        %v3306 = vmul.f32 %v3271, %v3304
        %3308 = vrot.lane.b32.xlu0 %v3306, 96
        %v3309 = vpop.permute.xlu0 %3308
        %v3311 = vsel %vm881, %v2401, %v3309
        %v3312 = vsel %vm881, %v2531, %v3185
        %v3313 = vsel %vm881, %v2661, %v3055
        %v3314 = vsel %vm881, %v2791, %v2925
        %v3315 = vsel %vm881, %v2921, %v2795
        %v3316 = vsel %vm881, %v3051, %v2665
        %v3317 = vsel %vm881, %v3181, %v2535
        %3319 = vrot.lane.b32.xlu0 %v3300, 64
        %v3320 = vpop.permute.xlu0 %3319
        %v3322 = vsel %vm881, %v3320, %v2405
        %v3323 = vmax.f32 %v3311, %v3312
        %v3324 = vmax.f32 %v3323, %v3313
        %v3325 = vmax.f32 %v3324, %v3314
        %v3326 = vmax.f32 %v3325, %v3315
        %v3327 = vmax.f32 %v3326, %v3316
        %v3328 = vmax.f32 %v3327, %v3317
        %v3329 = vmax.f32 %v3328, %v3322
        %v3330 = vld [vmem:[%s9] sm:$0xff]
        %v3331 = vld [vmem:[%s9 + $0x8] sm:$0xff]
        %v3332 = vld [vmem:[%s9 + $0x10] sm:$0xff]
        %v3333 = vld [vmem:[%s9 + $0x18] sm:$0xff]
        %v3334 = vld [vmem:[%s9 + $0x20] sm:$0xff]
        %v3335 = vld [vmem:[%s9 + $0x28] sm:$0xff]
        %v3336 = vld [vmem:[%s9 + $0x30] sm:$0xff]
        %v3337 = vld [vmem:[%s9 + $0x38] sm:$0xff]
        %v3338 = vld [vmem:[%s10] sm:$0xff]
        %v3339 = vld [vmem:[%s10 + $0x8] sm:$0xff]
        %v3340 = vld [vmem:[%s10 + $0x10] sm:$0xff]
        %v3341 = vld [vmem:[%s10 + $0x18] sm:$0xff]
        %v3342 = vld [vmem:[%s10 + $0x20] sm:$0xff]
        %v3343 = vld [vmem:[%s10 + $0x28] sm:$0xff]
        %v3344 = vld [vmem:[%s10 + $0x30] sm:$0xff]
        %v3345 = vld [vmem:[%s10 + $0x38] sm:$0xff]
        %v3347 = vsel %vm1074, %v3311, 0
        %v3350 = vsel %vm1074, %v3312, 0
        %v3353 = vsel %vm1074, %v3313, 0
        %v3356 = vsel %vm1074, %v3314, 0
        %v3359 = vsel %vm1074, %v3315, 0
        %v3362 = vsel %vm1074, %v3316, 0
        %v3365 = vsel %vm1074, %v3317, 0
        %v3368 = vsel %vm1074, %v3322, 0
        %3370 = vmatpush.msra.mxu0 0.0
        %3371 = vmatpush.msra.mxu0 0.0
        %3372 = vmatpush.msra.mxu0 0.0
        %3373 = vmatpush.msra.mxu0 0.0
        %3374 = vmatpush.msra.mxu0 0.0
        %3375 = vmatpush.msra.mxu0 0.0
        %3376 = vmatpush.msra.mxu0 0.0
        %3377 = vmatpush.msra.mxu0 0.0
        %3378 = vmatpush.msra.mxu0 %v3337
        %3379 = vmatpush.msra.mxu0 %v3336
        %3380 = vmatpush.msra.mxu0 %v3335
        %3381 = vmatpush.msra.mxu0 %v3334
        %3382 = vmatpush.msra.mxu0 %v3333
        %3383 = vmatpush.msra.mxu0 %v3332
        %3384 = vmatpush.msra.mxu0 %v3331
        %3385 = vmatpush.msra.mxu0 %v3330
        %3386 = vmatmul.f32.gmra.mxu0 %v3347
        %v3387 = vpop.f32.mrf.mxu0
        %v3388 = vadd.f32 %v3338, %v3387
        %3389 = vmatmul.f32.gmra.mxu0 %v3350
        %v3390 = vpop.f32.mrf.mxu0
        %v3391 = vadd.f32 %v3339, %v3390
        %3392 = vmatmul.f32.gmra.mxu0 %v3353
        %v3393 = vpop.f32.mrf.mxu0
        %v3394 = vadd.f32 %v3340, %v3393
        %3395 = vmatmul.f32.gmra.mxu0 %v3356
        %v3396 = vpop.f32.mrf.mxu0
        %v3397 = vadd.f32 %v3341, %v3396
        %3398 = vmatmul.f32.gmra.mxu0 %v3359
        %v3399 = vpop.f32.mrf.mxu0
        %v3400 = vadd.f32 %v3342, %v3399
        %3401 = vmatmul.f32.gmra.mxu0 %v3362
        %v3402 = vpop.f32.mrf.mxu0
        %v3403 = vadd.f32 %v3343, %v3402
        %3404 = vmatmul.f32.gmra.mxu0 %v3365
        %v3405 = vpop.f32.mrf.mxu0
        %v3406 = vadd.f32 %v3344, %v3405
        %3407 = vmatmul.f32.gmra.mxu0 %v3368
        %v3408 = vpop.f32.mrf.mxu0
        %v3409 = vadd.f32 %v3345, %v3408
        %3410 = vdwg.mxu0
        %v3411 = vtanh.pop %v3388
        %v3412 = vtanh.pop %v3391
        %v3413 = vtanh.pop %v3394
        %v3414 = vtanh.pop %v3397
        %v3415 = vtanh.pop %v3400
        %v3416 = vtanh.pop %v3403
        %v3417 = vtanh.pop %v3406
        %v3418 = vtanh.pop %v3409
        %v3419 = vmul.f32 %v3411, 1.442695
        %v3420 = vpow.pop %v3419
        %v3421 = vmul.f32 %v3412, 1.442695
        %v3422 = vpow.pop %v3421
        %v3423 = vmul.f32 %v3413, 1.442695
        %v3424 = vpow.pop %v3423
        %v3425 = vmul.f32 %v3414, 1.442695
        %v3426 = vpow.pop %v3425
        %v3427 = vmul.f32 %v3415, 1.442695
        %v3428 = vpow.pop %v3427
        %v3429 = vmul.f32 %v3416, 1.442695
        %v3430 = vpow.pop %v3429
        %v3431 = vmul.f32 %v3417, 1.442695
        %v3432 = vpow.pop %v3431
        %v3433 = vmul.f32 %v3418, 1.442695
        %v3434 = vpow.pop %v3433
        %v3435 = vmul.f32 %v3420, %v916
        %v3436 = vmul.f32 %v3422, %v917
        %v3437 = vmul.f32 %v3424, %v918
        %v3438 = vmul.f32 %v3426, %v919
        %v3439 = vmul.f32 %v3428, %v920
        %v3440 = vmul.f32 %v3430, %v921
        %v3441 = vmul.f32 %v3432, %v922
        %v3442 = vmul.f32 %v3434, %v922
        %v3443 = vadd.f32 %v3435, 0.0
        %v3444 = vadd.f32 %v3443, %v3436
        %v3445 = vadd.f32 %v3444, %v3437
        %v3446 = vadd.f32 %v3445, %v3438
        %v3447 = vadd.f32 %v3446, %v3439
        %v3448 = vadd.f32 %v3447, %v3440
        %v3449 = vadd.f32 %v3448, %v3441
        %v3450 = vadd.f32 %v3449, %v3442
        %v3451 = vrcp.pop %v3450
        %v3452 = vmul.f32 %v3450, %v3451
        %v3453 = vsub.f32 1.0, %v3452
        %v3454 = vmul.f32 %v3451, %v3453
        %v3455 = vadd.f32 %v3451, %v3454
        %vm3456 = vweird.f32 %v3450
        %vm3457 = vweird.f32 %v3451
        %vm3458 = vmor %vm3456, %vm3457
        %v3459 = vsel %vm3458, %v3451, %v3455
        %v3460 = vand.u32 2147483647, %v3450
        %vm3461 = vcmp.eq.f32.partialorder %v3460, 8.507059e+37
        %v3462 = vand.u32 %v3450, 2147483648
        %v3463 = vor.u32 1.1754944e-38, %v3462
        %v3464 = vsel %vm3461, %v3463, %v3459
        %v3465 = vmul.f32 1.0, %v3464
        %v3466 = vmul.f32 %v3435, %v3465
        %v3467 = vadd.f32 %v3466, 1e-10
        %3469 = vset.pattern.permute.xlu0 0
        %3470 = vperm.xlu0 %3469, %v3467
        %v3471 = vpop.permute.xlu0 %3470
        %v3473 = vmul.f32 %v3471, %v3311
        %v3474 = vadd.f32 %v3473, 0.0
        %v3475 = vmul.f32 %v3436, %v3465
        %v3476 = vadd.f32 %v3475, 1e-10
        %3478 = vset.pattern.permute.xlu0 0
        %3479 = vperm.xlu0 %3478, %v3476
        %v3480 = vpop.permute.xlu0 %3479
        %v3482 = vmul.f32 %v3480, %v3312
        %v3483 = vadd.f32 %v3474, %v3482
        %v3484 = vmul.f32 %v3437, %v3465
        %v3485 = vadd.f32 %v3484, 1e-10
        %3487 = vset.pattern.permute.xlu0 0
        %3488 = vperm.xlu0 %3487, %v3485
        %v3489 = vpop.permute.xlu0 %3488
        %v3491 = vmul.f32 %v3489, %v3313
        %v3492 = vadd.f32 %v3483, %v3491
        %v3493 = vmul.f32 %v3438, %v3465
        %v3494 = vadd.f32 %v3493, 1e-10
        %3496 = vset.pattern.permute.xlu0 0
        %3497 = vperm.xlu0 %3496, %v3494
        %v3498 = vpop.permute.xlu0 %3497
        %v3500 = vmul.f32 %v3498, %v3314
        %v3501 = vadd.f32 %v3492, %v3500
        %v3502 = vmul.f32 %v3439, %v3465
        %v3503 = vadd.f32 %v3502, 1e-10
        %3505 = vset.pattern.permute.xlu0 0
        %3506 = vperm.xlu0 %3505, %v3503
        %v3507 = vpop.permute.xlu0 %3506
        %v3509 = vmul.f32 %v3507, %v3315
        %v3510 = vadd.f32 %v3501, %v3509
        %v3511 = vmul.f32 %v3440, %v3465
        %v3512 = vadd.f32 %v3511, 1e-10
        %3514 = vset.pattern.permute.xlu0 0
        %3515 = vperm.xlu0 %3514, %v3512
        %v3516 = vpop.permute.xlu0 %3515
        %v3518 = vmul.f32 %v3516, %v3316
        %v3519 = vadd.f32 %v3510, %v3518
        %v3520 = vmul.f32 %v3441, %v3465
        %v3521 = vadd.f32 %v3520, 1e-10
        %3523 = vset.pattern.permute.xlu0 0
        %3524 = vperm.xlu0 %3523, %v3521
        %v3525 = vpop.permute.xlu0 %3524
        %v3527 = vmul.f32 %v3525, %v3317
        %v3528 = vadd.f32 %v3519, %v3527
        %v3529 = vmul.f32 %v3442, %v3465
        %v3530 = vadd.f32 %v3529, 1e-10
        %3532 = vset.pattern.permute.xlu0 0
        %3533 = vperm.xlu0 %3532, %v3530
        %v3534 = vpop.permute.xlu0 %3533
        %v3536 = vmul.f32 %v3534, %v3322
        %v3537 = vadd.f32 %v3528, %v3536
        %3539 = vrot.lane.b32.xlu0 %v3537, 64
        %v3540 = vpop.permute.xlu0 %3539
        %v3542 = vsel %vm1074, %v3329, %v3540
        %v3543 = vld [vmem:[%s11] sm:$0xff]
        %v3544 = vld [vmem:[%s11 + $0x8] sm:$0xff]
        %v3545 = vld [vmem:[%s11 + $0x10] sm:$0xff]
        %v3546 = vld [vmem:[%s11 + $0x18] sm:$0xff]
        %v3547 = vld [vmem:[%s11 + $0x20] sm:$0xff]
        %v3548 = vld [vmem:[%s11 + $0x28] sm:$0xff]
        %v3549 = vld [vmem:[%s11 + $0x30] sm:$0xff]
        %v3550 = vld [vmem:[%s11 + $0x38] sm:$0xff]
        %v3551 = vld [vmem:[%s11 + $0x40] sm:$0xff]
        %v3552 = vld [vmem:[%s11 + $0x48] sm:$0xff]
        %v3553 = vld [vmem:[%s11 + $0x50] sm:$0xff]
        %v3554 = vld [vmem:[%s11 + $0x58] sm:$0xff]
        %v3555 = vld [vmem:[%s11 + $0x60] sm:$0xff]
        %v3556 = vld [vmem:[%s11 + $0x68] sm:$0xff]
        %v3557 = vld [vmem:[%s11 + $0x70] sm:$0xff]
        %v3558 = vld [vmem:[%s11 + $0x78] sm:$0xff]
        %v3559 = vld [vmem:[%s12] sm:$0x1]
        %v3561 = vperm.slane %v3559, 0
        %3563 = vmatpush.msra.mxu0 %v3558
        %3564 = vmatpush.msra.mxu0 %v3557
        %3565 = vmatpush.msra.mxu0 %v3556
        %3566 = vmatpush.msra.mxu0 %v3555
        %3567 = vmatpush.msra.mxu0 %v3554
        %3568 = vmatpush.msra.mxu0 %v3553
        %3569 = vmatpush.msra.mxu0 %v3552
        %3570 = vmatpush.msra.mxu0 %v3551
        %3571 = vmatpush.msra.mxu0 %v3550
        %3572 = vmatpush.msra.mxu0 %v3549
        %3573 = vmatpush.msra.mxu0 %v3548
        %3574 = vmatpush.msra.mxu0 %v3547
        %3575 = vmatpush.msra.mxu0 %v3546
        %3576 = vmatpush.msra.mxu0 %v3545
        %3577 = vmatpush.msra.mxu0 %v3544
        %3578 = vmatpush.msra.mxu0 %v3543
        %3579 = vmatmul.f32.gmra.mxu0 %v3542
        %v3580 = vpop.f32.mrf.mxu0
        %v3581 = vadd.f32 %v3561, %v3580
        %3582 = vdwg.mxu0
        %vm3583 = vcmask 31744
        %3584 = vst.msk [vmem:[%s528] sm:$0xff] %vm3583, %v3581
        %p3585 = scmp.lt.s32.totalorder %s24, 1
        %s3586 = scalar_select %p3585, %s24, 1
        %s3587 = smul.addr %s3586, 8
        %s3588 = scalar_lea.vmem %s13, %s3587
        // Predicated region
        $region96: #{net_forward.1} parent=90 // pred_check
          %p3589 = pneg %p320
        $region97: #{net_forward.1} parent=90 // pred_check_branch
          %3591 = sbr.rel (%p3589) target = $region99
        $region98: #{net_forward.1} parent=90 // pred_region
          _
        $region99: #{net_forward.1} parent=90 // pred_fallthru
          _
      $region91: #{net_forward.1} parent=5 // pred_fallthru
        _
      %p3592 = scmp.le.s32.totalorder 2, %s19
      // Predicated region
      $region100: #{net_forward.1} parent=5 // pred_check
        %p3593 = pneg %p3592
      $region101: #{net_forward.1} parent=5 // pred_check_branch
        %3595 = sbr.rel (%p3593) target = $region103
      $region102: #{net_forward.1} parent=5 // pred_region
        %s3596 = ssub.s32 %s19, 2
        // Predicated region
        $region104: #{net_forward.1} parent=102 // pred_check
          %p3597 = pneg %p326
        $region105: #{net_forward.1} parent=102 // pred_check_branch
          %3599 = sbr.rel (%p3597) target = $region107
        $region106: #{net_forward.1} parent=102 // pred_region
          %p3600 = scmp.lt.s32.totalorder %s25, 1
          %s3601 = scalar_select %p3600, %s25, 1
          %s3602 = smul.addr %s3601, 8
          %s3603 = scalar_lea.vmem %s13, %s3602
        $region107: #{net_forward.1} parent=102 // pred_fallthru
          _
      $region103: #{net_forward.1} parent=5 // pred_fallthru
        _
    $region6: #{net_forward.1} parent=1 // loop_footer
      %s23 = sadd.s32 1, %s19
    $region7: #{net_forward.1} parent=1 // loop_footer_branch
      %18 = sbr.rel target = $region3
    $region8: #{net_forward.1} parent=1 // loop_exit
      _

</llo_original>
